<compile_context>
chip_gen: v7x
topology: tpu7x:2x2x1
jax: 0.10.0
libtpu: 0.0.40
codegen_flags: <defaults>
</compile_context>

<pallas_src>
import functools

import jax
import jax.numpy as jnp
from jax.experimental import pallas as pl
from jax.experimental.pallas import tpu as pltpu

LANE = 128


def _round_up(v, m):
    return ((v + m - 1) // m) * m


# ----------------------------------------------------------------------------
# Fused Xception-unit kernel (one pallas_call per unit)
# ----------------------------------------------------------------------------
def _xception_unit_kernel(x_ref,
                          dw0_ref, dw1_ref, dw2_ref,
                          pw0w_ref, pw0b_ref,
                          pw1w_ref, pw1b_ref,
                          pw2w_ref, pw2b_ref,
                          o_ref,
                          pad_ref,
                          *, rate, stride, H, W, Ho, L, Hp, Wp,
                          c_in, c0, c1):
    r = int(rate)
    s = int(stride)
    cs = pad_ref.shape[-1]

    # Zero only the halo border of the shared padded scratch. Done every grid
    # step on purpose: with dimension_semantics=("parallel",) each TensorCore
    # has its own scratch and only one core would see program_id == 0.
    pad_ref[0:r, :, :] = jnp.zeros((r, Wp, cs), jnp.float32)
    pad_ref[r + H:Hp, :, :] = jnp.zeros((Hp - r - H, Wp, cs), jnp.float32)
    pad_ref[:, 0:L, :] = jnp.zeros((Hp, L, cs), jnp.float32)
    pad_ref[:, L + W:Wp, :] = jnp.zeros((Hp, Wp - L - W, cs), jnp.float32)

    def depthwise(xin, w_ref, C, st):
        """ReLU -> depthwise 3x3 conv (dilation=r, 'same' pad=r).

        The unit stride is folded along H only (major, untiled dim -> free);
        W stays dense and is subsampled once outside the kernel.
        """
        # Interior write is sublane-aligned: L is a multiple of 8.
        pad_ref[r:r + H, L:L + W, :C] = jnp.maximum(xin, 0.0)
        w9 = w_ref[...]                                   # (9, C), single load
        oh = H // st
        acc = None
        for di in range(3):
            for dj in range(3):
                wcol = L - r + dj * r
                win = pad_ref[di * r:di * r + H, wcol:wcol + W, :C]
                if st != 1:
                    # Fold the H stride: split the major dim and pick phase 0.
                    win = win.reshape(oh, st, W, C)[:, 0]
                term = win * w9[di * 3 + dj]
                acc = term if acc is None else acc + term   # first tap inits acc
        return acc

    def pointwise(h, w_ref, b_ref):
        """1x1 conv as a lane-dense MXU matmul (bf16 operands, f32 accum)."""
        hh, ww, cin = h.shape
        cout = w_ref.shape[1]
        y = jnp.dot(h.reshape(hh * ww, cin).astype(jnp.bfloat16), w_ref[...],
                    preferred_element_type=jnp.float32)
        return (y + b_ref[...]).reshape(hh, ww, cout)

    x = x_ref[0].astype(jnp.float32)                         # (H, W, Cp)

    # Separable convs 1 & 2 (stride 1), all activations VMEM-resident.
    h = pointwise(depthwise(x, dw0_ref, c_in, 1), pw0w_ref, pw0b_ref)   # (H, W, d0p)
    h = pointwise(depthwise(h, dw1_ref, c0, 1), pw1w_ref, pw1b_ref)     # (H, W, d1p)
    # Third depthwise: H-stride folded in; W stays dense.
    h = depthwise(h, dw2_ref, c1, s)                                    # (Ho, W, d1p)

    # Shortcut input, H-subsampled the same way (no strided ref reads).
    xs = x if s == 1 else x.reshape(Ho, s, W, c_in)[:, 0]               # (Ho, W, Cp)

    # Fused: pointwise-3 + 1x1 shortcut + residual add == ONE matmul with
    # K = d1p + Cp (weights/bias pre-concatenated/folded on the host).
    feat = jnp.concatenate([h.astype(jnp.bfloat16), xs.astype(jnp.bfloat16)],
                           axis=-1)                                     # (Ho, W, d1p+Cp)
    y = pointwise(feat, pw2w_ref, pw2b_ref)                             # (Ho, W, d2p)

    o_ref[0] = y.astype(o_ref.dtype)


def xception_unit(x, params, *, cin, rate, stride):
    """One Xception unit (unit_fn) as a single fused pallas_call.

    `x` carries channel-padded activations (last dim a multiple of 128, padded
    lanes exactly zero); `params` hold the true-shaped weights.
    """
    N, H, W, Cp = x.shape
    d0 = params["pw_w"][0].shape[1]
    d1 = params["pw_w"][1].shape[1]
    d2 = params["pw_w"][2].shape[1]
    assert Cp == _round_up(cin, LANE)
    d0p, d1p, d2p = (_round_up(d, LANE) for d in (d0, d1, d2))

    r = int(rate)
    s = int(stride)
    if s > 1:
        # TODO(synk): non-divisible spatial dims (TF 'SAME' asymmetric padding)
        # would need an extra pad step; the synthetic unit uses symmetric pad=r.
        assert H % s == 0 and W % s == 0
    Ho = H // s

    L = _round_up(r, 8)                    # left/top-of-W halo, sublane-aligned
    Hp = H + 2 * r
    Wp = _round_up(L + W + r, 8)
    Cs = max(Cp, d0p, d1p)                 # one shared scratch for all 3 layers

    def padw(w, shape):
        out = jnp.zeros(shape, w.dtype)
        return out.at[tuple(slice(0, n) for n in w.shape)].set(w)

    # Depthwise weights stay f32 (VPU path); pointwise weights go to bf16 (MXU).
    dw0 = padw(params["dw"][0].reshape(9, cin), (9, Cp))
    dw1 = padw(params["dw"][1].reshape(9, d0), (9, d0p))
    dw2 = padw(params["dw"][2].reshape(9, d1), (9, d1p))
    pw0w = padw(params["pw_w"][0], (Cp, d0p)).astype(jnp.bfloat16)
    pw1w = padw(params["pw_w"][1], (d0p, d1p)).astype(jnp.bfloat16)
    pw0b = padw(params["pw_b"][0].reshape(1, d0), (1, d0p))
    pw1b = padw(params["pw_b"][1].reshape(1, d1), (1, d1p))
    # Fuse pointwise-3 and the 1x1 shortcut: concat along K, fold biases.
    pw2scw = jnp.concatenate([padw(params["pw_w"][2], (d1p, d2p)),
                              padw(params["sc_w"], (Cp, d2p))],
                             axis=0).astype(jnp.bfloat16)          # (d1p+Cp, d2p)
    pw2scb = padw((params["pw_b"][2] + params["sc_b"]).reshape(1, d2), (1, d2p))

    kernel = functools.partial(_xception_unit_kernel,
                               rate=r, stride=s, H=H, W=W, Ho=Ho,
                               L=L, Hp=Hp, Wp=Wp,
                               c_in=Cp, c0=d0p, c1=d1p)

    rep = lambda n: (0, 0)        # weights: same full block every grid step

    out = pl.pallas_call(
        kernel,
        out_shape=jax.ShapeDtypeStruct((N, Ho, W, d2p), x.dtype),
        grid=(N,),
        in_specs=[
            pl.BlockSpec((1, H, W, Cp), lambda n: (n, 0, 0, 0)),
            pl.BlockSpec((9, Cp), rep),
            pl.BlockSpec((9, d0p), rep),
            pl.BlockSpec((9, d1p), rep),
            pl.BlockSpec((Cp, d0p), rep),
            pl.BlockSpec((1, d0p), rep),
            pl.BlockSpec((d0p, d1p), rep),
            pl.BlockSpec((1, d1p), rep),
            pl.BlockSpec((d1p + Cp, d2p), rep),
            pl.BlockSpec((1, d2p), rep),
        ],
        out_specs=pl.BlockSpec((1, Ho, W, d2p), lambda n: (n, 0, 0, 0)),
        scratch_shapes=[pltpu.VMEM((Hp, Wp, Cs), jnp.float32)],
        compiler_params=pltpu.CompilerParams(
            dimension_semantics=("parallel",)),
    )(x, dw0, dw1, dw2, pw0w, pw0b, pw1w, pw1b, pw2scw, pw2scb)

    if s > 1:
        # Single W-subsample outside the kernel (avoids 9+ strided sublane
        # gathers inside; the kernel output is lane-dense either way).
        out = out[:, :, ::s, :]
    return out


# ----------------------------------------------------------------------------
# StackBlocksDense stride/rate logic (mirrors the PyTorch __init__ exactly)
# ----------------------------------------------------------------------------
def build_stack_blocks_dense(blocks, output_stride=None):
    current_stride = 1
    rate = 1
    layer_cfgs = []
    for block in blocks:
        for unit in block["args"]:
            if output_stride is not None and current_stride > output_stride:
                raise ValueError("The target output_stride cannot be reached.")
            if output_stride is not None and current_stride == output_stride:
                layer_cfgs.append({"depth_list": unit["depth_list"],
                                   "stride": 1, "rate": rate})
                rate *= unit.get("stride", 1)
            else:
                layer_cfgs.append({"depth_list": unit["depth_list"],
                                   "stride": unit.get("stride", 1), "rate": 1})
                current_stride *= unit.get("stride", 1)
    if output_stride is not None and current_stride != output_stride:
        raise ValueError("The target output_stride cannot be reached.")
    return layer_cfgs


def init_unit_params(key, cin, depth_list):
    d0, d1, d2 = depth_list
    chans = [cin, d0, d1]
    outs = [d0, d1, d2]
    keys = jax.random.split(key, 11)
    dw = [0.1 * jax.random.normal(keys[i], (3, 3, chans[i]), jnp.float32)
          for i in range(3)]
    pw_w = [0.1 * jax.random.normal(keys[3 + i], (chans[i], outs[i]), jnp.float32)
            for i in range(3)]
    pw_b = [0.05 * jax.random.normal(keys[6 + i], (outs[i],), jnp.float32)
            for i in range(3)]
    sc_w = 0.1 * jax.random.normal(keys[9], (cin, d2), jnp.float32)
    sc_b = 0.05 * jax.random.normal(keys[10], (d2,), jnp.float32)
    return {"dw": dw, "pw_w": pw_w, "pw_b": pw_b, "sc_w": sc_w, "sc_b": sc_b}


def stack_blocks_dense_forward(x, layer_cfgs, params_list):
    cin = x.shape[-1]
    cp = _round_up(cin, LANE)
    if cp != cin:
        # Pad channels to a full 128-lane width once; padded lanes stay exactly
        # zero through the whole stack (zero-padded weights & biases).
        x = jnp.pad(x, ((0, 0), (0, 0), (0, 0), (0, cp - cin)))
    for cfg, p in zip(layer_cfgs, params_list):
        x = xception_unit(x, p, cin=cin, rate=cfg["rate"], stride=cfg["stride"])
        cin = cfg["depth_list"][-1]
    return x[..., :cin]


# ----------------------------------------------------------------------------
if __name__ == "__main__":
    key = jax.random.PRNGKey(0)
    kx, kp = jax.random.split(key)

    # Small input, NHWC: batch=2, 16x16, 8 channels.
    x = jax.random.normal(kx, (2, 16, 16, 8), dtype=jnp.float32)

    # Three Xception blocks, one unit each; nominal strides 2, 2, 1.
    blocks = [
        {"args": [{"depth_list": [16, 16, 16], "stride": 2}]},
        {"args": [{"depth_list": [32, 32, 32], "stride": 2}]},
        {"args": [{"depth_list": [32, 32, 32], "stride": 1}]},
    ]
    # output_stride=2: block1 runs at stride 2 (rate 1); blocks 2 and 3 run at
    # stride 1 with atrous rates 1 and 2 respectively (as in StackBlocksDense).
    layer_cfgs = build_stack_blocks_dense(blocks, output_stride=2)

    # Deterministic parameter init.
    params_list = []
    cin = x.shape[-1]
    pkeys = jax.random.split(kp, len(layer_cfgs))
    for cfg, k in zip(layer_cfgs, pkeys):
        params_list.append(init_unit_params(k, cin, cfg["depth_list"]))
        cin = cfg["depth_list"][-1]

    y = stack_blocks_dense_forward(x, layer_cfgs, params_list)
    y = jax.block_until_ready(y)

    assert y.shape == (2, 8, 8, 32), y.shape          # spatial reduced by output_stride=2
    assert bool(jnp.all(jnp.isfinite(y)))
    print("KERNEL_OK")
</pallas_src>

<mosaic_0001>
module attributes {stable_mosaic.version = 11 : i64} {
  func.func @_xception_unit_kernel(%arg0: i32, %arg1: memref<1x16x16x128xf32, #tpu.memory_space<vmem>>, %arg2: memref<9x128xf32, #tpu.memory_space<vmem>>, %arg3: memref<9x128xf32, #tpu.memory_space<vmem>>, %arg4: memref<9x128xf32, #tpu.memory_space<vmem>>, %arg5: memref<128x128xbf16, #tpu.memory_space<vmem>>, %arg6: memref<1x128xf32, #tpu.memory_space<vmem>>, %arg7: memref<128x128xbf16, #tpu.memory_space<vmem>>, %arg8: memref<1x128xf32, #tpu.memory_space<vmem>>, %arg9: memref<256x128xbf16, #tpu.memory_space<vmem>>, %arg10: memref<1x128xf32, #tpu.memory_space<vmem>>, %arg11: memref<1x8x16x128xf32, #tpu.memory_space<vmem>>, %arg12: memref<18x32x128xf32, #tpu.memory_space<vmem>>) attributes {dimension_semantics = [#tpu.dimension_semantics<parallel>], iteration_bounds = array<i64: 2>, scalar_prefetch = 0 : i64, scratch_operands = 1 : i64, tpu.core_type = #tpu.core_type<tc>, window_params = [{transform_indices = @transform_0, window_bounds = array<i64: 1, 16, 16, 128>}, {pipeline_mode = #tpu.pipeline_mode<synchronous>, transform_indices = @transform_1, window_bounds = array<i64: 9, 128>}, {pipeline_mode = #tpu.pipeline_mode<synchronous>, transform_indices = @transform_2, window_bounds = array<i64: 9, 128>}, {pipeline_mode = #tpu.pipeline_mode<synchronous>, transform_indices = @transform_3, window_bounds = array<i64: 9, 128>}, {pipeline_mode = #tpu.pipeline_mode<synchronous>, transform_indices = @transform_4, window_bounds = array<i64: 128, 128>}, {pipeline_mode = #tpu.pipeline_mode<synchronous>, transform_indices = @transform_5, window_bounds = array<i64: 1, 128>}, {pipeline_mode = #tpu.pipeline_mode<synchronous>, transform_indices = @transform_6, window_bounds = array<i64: 128, 128>}, {pipeline_mode = #tpu.pipeline_mode<synchronous>, transform_indices = @transform_7, window_bounds = array<i64: 1, 128>}, {pipeline_mode = #tpu.pipeline_mode<synchronous>, transform_indices = @transform_8, window_bounds = array<i64: 256, 128>}, {pipeline_mode = #tpu.pipeline_mode<synchronous>, transform_indices = @transform_9, window_bounds = array<i64: 1, 128>}, {transform_indices = @transform_10, window_bounds = array<i64: 1, 8, 16, 128>}]} {
    %cst = arith.constant 0.000000e+00 : f32
    %0 = vector.broadcast %cst : f32 to vector<1x32x128xf32>
    %c0 = arith.constant 0 : index
    %c0_0 = arith.constant 0 : index
    %c0_1 = arith.constant 0 : index
    %1 = vector.load %arg12[%c0, %c0_0, %c0_1] : memref<18x32x128xf32, #tpu.memory_space<vmem>>, vector<1x32x128xf32>
    tpu.vector_store %arg12[%c0, %c0_0, %c0_1], %0 {strides = array<i32>} : memref<18x32x128xf32, #tpu.memory_space<vmem>>, vector<1x32x128xf32>,
    %cst_2 = arith.constant 0.000000e+00 : f32
    %2 = vector.broadcast %cst_2 : f32 to vector<1x32x128xf32>
    %c17 = arith.constant 17 : index
    %c0_3 = arith.constant 0 : index
    %c0_4 = arith.constant 0 : index
    %3 = vector.load %arg12[%c17, %c0_3, %c0_4] : memref<18x32x128xf32, #tpu.memory_space<vmem>>, vector<1x32x128xf32>
    tpu.vector_store %arg12[%c17, %c0_3, %c0_4], %2 {strides = array<i32>} : memref<18x32x128xf32, #tpu.memory_space<vmem>>, vector<1x32x128xf32>,
    %cst_5 = arith.constant 0.000000e+00 : f32
    %4 = vector.broadcast %cst_5 : f32 to vector<18x8x128xf32>
    %c0_6 = arith.constant 0 : index
    %c0_7 = arith.constant 0 : index
    %c0_8 = arith.constant 0 : index
    %5 = vector.load %arg12[%c0_6, %c0_7, %c0_8] : memref<18x32x128xf32, #tpu.memory_space<vmem>>, vector<18x8x128xf32>
    tpu.vector_store %arg12[%c0_6, %c0_7, %c0_8], %4 {strides = array<i32>} : memref<18x32x128xf32, #tpu.memory_space<vmem>>, vector<18x8x128xf32>,
    %cst_9 = arith.constant 0.000000e+00 : f32
    %6 = vector.broadcast %cst_9 : f32 to vector<18x8x128xf32>
    %c0_10 = arith.constant 0 : index
    %c24 = arith.constant 24 : index
    %c0_11 = arith.constant 0 : index
    %7 = vector.load %arg12[%c0_10, %c24, %c0_11] : memref<18x32x128xf32, #tpu.memory_space<vmem>>, vector<18x8x128xf32>
    tpu.vector_store %arg12[%c0_10, %c24, %c0_11], %6 {strides = array<i32>} : memref<18x32x128xf32, #tpu.memory_space<vmem>>, vector<18x8x128xf32>,
    %c0_12 = arith.constant 0 : index
    %c0_13 = arith.constant 0 : index
    %c0_14 = arith.constant 0 : index
    %c0_15 = arith.constant 0 : index
    %8 = vector.load %arg1[%c0_12, %c0_13, %c0_14, %c0_15] : memref<1x16x16x128xf32, #tpu.memory_space<vmem>>, vector<1x16x16x128xf32>
    %9 = vector.shape_cast %8 : vector<1x16x16x128xf32> to vector<16x16x128xf32>
    %cst_16 = arith.constant 0.000000e+00 : f32
    %10 = vector.broadcast %cst_16 : f32 to vector<16x16x128xf32>
    %11 = arith.maximumf %9, %10 : vector<16x16x128xf32>
    %c1 = arith.constant 1 : index
    %c8 = arith.constant 8 : index
    %c0_17 = arith.constant 0 : index
    %12 = vector.load %arg12[%c1, %c8, %c0_17] : memref<18x32x128xf32, #tpu.memory_space<vmem>>, vector<16x16x128xf32>
    tpu.vector_store %arg12[%c1, %c8, %c0_17], %11 {strides = array<i32>} : memref<18x32x128xf32, #tpu.memory_space<vmem>>, vector<16x16x128xf32>,
    %c0_18 = arith.constant 0 : index
    %c0_19 = arith.constant 0 : index
    %13 = vector.load %arg2[%c0_18, %c0_19] : memref<9x128xf32, #tpu.memory_space<vmem>>, vector<9x128xf32>
    %c0_20 = arith.constant 0 : index
    %c7 = arith.constant 7 : index
    %c0_21 = arith.constant 0 : index
    %14 = vector.load %arg12[%c0_20, %c7, %c0_21] : memref<18x32x128xf32, #tpu.memory_space<vmem>>, vector<16x16x128xf32>
    %15 = vector.extract_strided_slice %13 {offsets = [0, 0], sizes = [1, 128], strides = [1, 1]} : vector<9x128xf32> to vector<1x128xf32>
    %16 = vector.shape_cast %15 : vector<1x128xf32> to vector<128xf32>
    %17 = vector.shape_cast %16 : vector<128xf32> to vector<1x1x128xf32>
    %18 = vector.broadcast %17 : vector<1x1x128xf32> to vector<16x16x128xf32>
    %19 = arith.mulf %14, %18 : vector<16x16x128xf32>
    %c0_22 = arith.constant 0 : index
    %c8_23 = arith.constant 8 : index
    %c0_24 = arith.constant 0 : index
    %20 = vector.load %arg12[%c0_22, %c8_23, %c0_24] : memref<18x32x128xf32, #tpu.memory_space<vmem>>, vector<16x16x128xf32>
    %21 = vector.extract_strided_slice %13 {offsets = [1, 0], sizes = [1, 128], strides = [1, 1]} : vector<9x128xf32> to vector<1x128xf32>
    %22 = vector.shape_cast %21 : vector<1x128xf32> to vector<128xf32>
    %23 = vector.shape_cast %22 : vector<128xf32> to vector<1x1x128xf32>
    %24 = vector.broadcast %23 : vector<1x1x128xf32> to vector<16x16x128xf32>
    %25 = arith.mulf %20, %24 : vector<16x16x128xf32>
    %26 = arith.addf %19, %25 : vector<16x16x128xf32>
    %c0_25 = arith.constant 0 : index
    %c9 = arith.constant 9 : index
    %c0_26 = arith.constant 0 : index
    %27 = vector.load %arg12[%c0_25, %c9, %c0_26] : memref<18x32x128xf32, #tpu.memory_space<vmem>>, vector<16x16x128xf32>
    %28 = vector.extract_strided_slice %13 {offsets = [2, 0], sizes = [1, 128], strides = [1, 1]} : vector<9x128xf32> to vector<1x128xf32>
    %29 = vector.shape_cast %28 : vector<1x128xf32> to vector<128xf32>
    %30 = vector.shape_cast %29 : vector<128xf32> to vector<1x1x128xf32>
    %31 = vector.broadcast %30 : vector<1x1x128xf32> to vector<16x16x128xf32>
    %32 = arith.mulf %27, %31 : vector<16x16x128xf32>
    %33 = arith.addf %26, %32 : vector<16x16x128xf32>
    %c1_27 = arith.constant 1 : index
    %c7_28 = arith.constant 7 : index
    %c0_29 = arith.constant 0 : index
    %34 = vector.load %arg12[%c1_27, %c7_28, %c0_29] : memref<18x32x128xf32, #tpu.memory_space<vmem>>, vector<16x16x128xf32>
    %35 = vector.extract_strided_slice %13 {offsets = [3, 0], sizes = [1, 128], strides = [1, 1]} : vector<9x128xf32> to vector<1x128xf32>
    %36 = vector.shape_cast %35 : vector<1x128xf32> to vector<128xf32>
    %37 = vector.shape_cast %36 : vector<128xf32> to vector<1x1x128xf32>
    %38 = vector.broadcast %37 : vector<1x1x128xf32> to vector<16x16x128xf32>
    %39 = arith.mulf %34, %38 : vector<16x16x128xf32>
    %40 = arith.addf %33, %39 : vector<16x16x128xf32>
    %c1_30 = arith.constant 1 : index
    %c8_31 = arith.constant 8 : index
    %c0_32 = arith.constant 0 : index
    %41 = vector.load %arg12[%c1_30, %c8_31, %c0_32] : memref<18x32x128xf32, #tpu.memory_space<vmem>>, vector<16x16x128xf32>
    %42 = vector.extract_strided_slice %13 {offsets = [4, 0], sizes = [1, 128], strides = [1, 1]} : vector<9x128xf32> to vector<1x128xf32>
    %43 = vector.shape_cast %42 : vector<1x128xf32> to vector<128xf32>
    %44 = vector.shape_cast %43 : vector<128xf32> to vector<1x1x128xf32>
    %45 = vector.broadcast %44 : vector<1x1x128xf32> to vector<16x16x128xf32>
    %46 = arith.mulf %41, %45 : vector<16x16x128xf32>
    %47 = arith.addf %40, %46 : vector<16x16x128xf32>
    %c1_33 = arith.constant 1 : index
    %c9_34 = arith.constant 9 : index
    %c0_35 = arith.constant 0 : index
    %48 = vector.load %arg12[%c1_33, %c9_34, %c0_35] : memref<18x32x128xf32, #tpu.memory_space<vmem>>, vector<16x16x128xf32>
    %49 = vector.extract_strided_slice %13 {offsets = [5, 0], sizes = [1, 128], strides = [1, 1]} : vector<9x128xf32> to vector<1x128xf32>
    %50 = vector.shape_cast %49 : vector<1x128xf32> to vector<128xf32>
    %51 = vector.shape_cast %50 : vector<128xf32> to vector<1x1x128xf32>
    %52 = vector.broadcast %51 : vector<1x1x128xf32> to vector<16x16x128xf32>
    %53 = arith.mulf %48, %52 : vector<16x16x128xf32>
    %54 = arith.addf %47, %53 : vector<16x16x128xf32>
    %c2 = arith.constant 2 : index
    %c7_36 = arith.constant 7 : index
    %c0_37 = arith.constant 0 : index
    %55 = vector.load %arg12[%c2, %c7_36, %c0_37] : memref<18x32x128xf32, #tpu.memory_space<vmem>>, vector<16x16x128xf32>
    %56 = vector.extract_strided_slice %13 {offsets = [6, 0], sizes = [1, 128], strides = [1, 1]} : vector<9x128xf32> to vector<1x128xf32>
    %57 = vector.shape_cast %56 : vector<1x128xf32> to vector<128xf32>
    %58 = vector.shape_cast %57 : vector<128xf32> to vector<1x1x128xf32>
    %59 = vector.broadcast %58 : vector<1x1x128xf32> to vector<16x16x128xf32>
    %60 = arith.mulf %55, %59 : vector<16x16x128xf32>
    %61 = arith.addf %54, %60 : vector<16x16x128xf32>
    %c2_38 = arith.constant 2 : index
    %c8_39 = arith.constant 8 : index
    %c0_40 = arith.constant 0 : index
    %62 = vector.load %arg12[%c2_38, %c8_39, %c0_40] : memref<18x32x128xf32, #tpu.memory_space<vmem>>, vector<16x16x128xf32>
    %63 = vector.extract_strided_slice %13 {offsets = [7, 0], sizes = [1, 128], strides = [1, 1]} : vector<9x128xf32> to vector<1x128xf32>
    %64 = vector.shape_cast %63 : vector<1x128xf32> to vector<128xf32>
    %65 = vector.shape_cast %64 : vector<128xf32> to vector<1x1x128xf32>
    %66 = vector.broadcast %65 : vector<1x1x128xf32> to vector<16x16x128xf32>
    %67 = arith.mulf %62, %66 : vector<16x16x128xf32>
    %68 = arith.addf %61, %67 : vector<16x16x128xf32>
    %c2_41 = arith.constant 2 : index
    %c9_42 = arith.constant 9 : index
    %c0_43 = arith.constant 0 : index
    %69 = vector.load %arg12[%c2_41, %c9_42, %c0_43] : memref<18x32x128xf32, #tpu.memory_space<vmem>>, vector<16x16x128xf32>
    %70 = vector.extract_strided_slice %13 {offsets = [8, 0], sizes = [1, 128], strides = [1, 1]} : vector<9x128xf32> to vector<1x128xf32>
    %71 = vector.shape_cast %70 : vector<1x128xf32> to vector<128xf32>
    %72 = vector.shape_cast %71 : vector<128xf32> to vector<1x1x128xf32>
    %73 = vector.broadcast %72 : vector<1x1x128xf32> to vector<16x16x128xf32>
    %74 = arith.mulf %69, %73 : vector<16x16x128xf32>
    %75 = arith.addf %68, %74 : vector<16x16x128xf32>
    %76 = vector.shape_cast %75 : vector<16x16x128xf32> to vector<256x128xf32>
    %77 = arith.truncf %76 : vector<256x128xf32> to vector<256x128xbf16>
    %c0_44 = arith.constant 0 : index
    %c0_45 = arith.constant 0 : index
    %78 = vector.load %arg5[%c0_44, %c0_45] : memref<128x128xbf16, #tpu.memory_space<vmem>>, vector<128x128xbf16>
    %cst_46 = arith.constant dense<0.000000e+00> : vector<256x128xf32>
    %79 = tpu.matmul %77, %78, %cst_46 {dimension_numbers = #tpu.dot_dimension_numbers<[1], [0], [0], [1], [0, 0, 1, 1], [], []>} : vector<256x128xbf16>, vector<128x128xbf16>, vector<256x128xf32> -> vector<256x128xf32>
    %c0_47 = arith.constant 0 : index
    %c0_48 = arith.constant 0 : index
    %80 = vector.load %arg6[%c0_47, %c0_48] : memref<1x128xf32, #tpu.memory_space<vmem>>, vector<1x128xf32>
    %81 = vector.broadcast %80 : vector<1x128xf32> to vector<256x128xf32>
    %82 = arith.addf %79, %81 : vector<256x128xf32>
    %83 = vector.shape_cast %82 : vector<256x128xf32> to vector<16x16x128xf32>
    %cst_49 = arith.constant 0.000000e+00 : f32
    %84 = vector.broadcast %cst_49 : f32 to vector<16x16x128xf32>
    %85 = arith.maximumf %83, %84 : vector<16x16x128xf32>
    %c1_50 = arith.constant 1 : index
    %c8_51 = arith.constant 8 : index
    %c0_52 = arith.constant 0 : index
    %86 = vector.load %arg12[%c1_50, %c8_51, %c0_52] : memref<18x32x128xf32, #tpu.memory_space<vmem>>, vector<16x16x128xf32>
    tpu.vector_store %arg12[%c1_50, %c8_51, %c0_52], %85 {strides = array<i32>} : memref<18x32x128xf32, #tpu.memory_space<vmem>>, vector<16x16x128xf32>,
    %c0_53 = arith.constant 0 : index
    %c0_54 = arith.constant 0 : index
    %87 = vector.load %arg3[%c0_53, %c0_54] : memref<9x128xf32, #tpu.memory_space<vmem>>, vector<9x128xf32>
    %c0_55 = arith.constant 0 : index
    %c7_56 = arith.constant 7 : index
    %c0_57 = arith.constant 0 : index
    %88 = vector.load %arg12[%c0_55, %c7_56, %c0_57] : memref<18x32x128xf32, #tpu.memory_space<vmem>>, vector<16x16x128xf32>
    %89 = vector.extract_strided_slice %87 {offsets = [0, 0], sizes = [1, 128], strides = [1, 1]} : vector<9x128xf32> to vector<1x128xf32>
    %90 = vector.shape_cast %89 : vector<1x128xf32> to vector<128xf32>
    %91 = vector.shape_cast %90 : vector<128xf32> to vector<1x1x128xf32>
    %92 = vector.broadcast %91 : vector<1x1x128xf32> to vector<16x16x128xf32>
    %93 = arith.mulf %88, %92 : vector<16x16x128xf32>
    %c0_58 = arith.constant 0 : index
    %c8_59 = arith.constant 8 : index
    %c0_60 = arith.constant 0 : index
    %94 = vector.load %arg12[%c0_58, %c8_59, %c0_60] : memref<18x32x128xf32, #tpu.memory_space<vmem>>, vector<16x16x128xf32>
    %95 = vector.extract_strided_slice %87 {offsets = [1, 0], sizes = [1, 128], strides = [1, 1]} : vector<9x128xf32> to vector<1x128xf32>
    %96 = vector.shape_cast %95 : vector<1x128xf32> to vector<128xf32>
    %97 = vector.shape_cast %96 : vector<128xf32> to vector<1x1x128xf32>
    %98 = vector.broadcast %97 : vector<1x1x128xf32> to vector<16x16x128xf32>
    %99 = arith.mulf %94, %98 : vector<16x16x128xf32>
    %100 = arith.addf %93, %99 : vector<16x16x128xf32>
    %c0_61 = arith.constant 0 : index
    %c9_62 = arith.constant 9 : index
    %c0_63 = arith.constant 0 : index
    %101 = vector.load %arg12[%c0_61, %c9_62, %c0_63] : memref<18x32x128xf32, #tpu.memory_space<vmem>>, vector<16x16x128xf32>
    %102 = vector.extract_strided_slice %87 {offsets = [2, 0], sizes = [1, 128], strides = [1, 1]} : vector<9x128xf32> to vector<1x128xf32>
    %103 = vector.shape_cast %102 : vector<1x128xf32> to vector<128xf32>
    %104 = vector.shape_cast %103 : vector<128xf32> to vector<1x1x128xf32>
    %105 = vector.broadcast %104 : vector<1x1x128xf32> to vector<16x16x128xf32>
    %106 = arith.mulf %101, %105 : vector<16x16x128xf32>
    %107 = arith.addf %100, %106 : vector<16x16x128xf32>
    %c1_64 = arith.constant 1 : index
    %c7_65 = arith.constant 7 : index
    %c0_66 = arith.constant 0 : index
    %108 = vector.load %arg12[%c1_64, %c7_65, %c0_66] : memref<18x32x128xf32, #tpu.memory_space<vmem>>, vector<16x16x128xf32>
    %109 = vector.extract_strided_slice %87 {offsets = [3, 0], sizes = [1, 128], strides = [1, 1]} : vector<9x128xf32> to vector<1x128xf32>
    %110 = vector.shape_cast %109 : vector<1x128xf32> to vector<128xf32>
    %111 = vector.shape_cast %110 : vector<128xf32> to vector<1x1x128xf32>
    %112 = vector.broadcast %111 : vector<1x1x128xf32> to vector<16x16x128xf32>
    %113 = arith.mulf %108, %112 : vector<16x16x128xf32>
    %114 = arith.addf %107, %113 : vector<16x16x128xf32>
    %c1_67 = arith.constant 1 : index
    %c8_68 = arith.constant 8 : index
    %c0_69 = arith.constant 0 : index
    %115 = vector.load %arg12[%c1_67, %c8_68, %c0_69] : memref<18x32x128xf32, #tpu.memory_space<vmem>>, vector<16x16x128xf32>
    %116 = vector.extract_strided_slice %87 {offsets = [4, 0], sizes = [1, 128], strides = [1, 1]} : vector<9x128xf32> to vector<1x128xf32>
    %117 = vector.shape_cast %116 : vector<1x128xf32> to vector<128xf32>
    %118 = vector.shape_cast %117 : vector<128xf32> to vector<1x1x128xf32>
    %119 = vector.broadcast %118 : vector<1x1x128xf32> to vector<16x16x128xf32>
    %120 = arith.mulf %115, %119 : vector<16x16x128xf32>
    %121 = arith.addf %114, %120 : vector<16x16x128xf32>
    %c1_70 = arith.constant 1 : index
    %c9_71 = arith.constant 9 : index
    %c0_72 = arith.constant 0 : index
    %122 = vector.load %arg12[%c1_70, %c9_71, %c0_72] : memref<18x32x128xf32, #tpu.memory_space<vmem>>, vector<16x16x128xf32>
    %123 = vector.extract_strided_slice %87 {offsets = [5, 0], sizes = [1, 128], strides = [1, 1]} : vector<9x128xf32> to vector<1x128xf32>
    %124 = vector.shape_cast %123 : vector<1x128xf32> to vector<128xf32>
    %125 = vector.shape_cast %124 : vector<128xf32> to vector<1x1x128xf32>
    %126 = vector.broadcast %125 : vector<1x1x128xf32> to vector<16x16x128xf32>
    %127 = arith.mulf %122, %126 : vector<16x16x128xf32>
    %128 = arith.addf %121, %127 : vector<16x16x128xf32>
    %c2_73 = arith.constant 2 : index
    %c7_74 = arith.constant 7 : index
    %c0_75 = arith.constant 0 : index
    %129 = vector.load %arg12[%c2_73, %c7_74, %c0_75] : memref<18x32x128xf32, #tpu.memory_space<vmem>>, vector<16x16x128xf32>
    %130 = vector.extract_strided_slice %87 {offsets = [6, 0], sizes = [1, 128], strides = [1, 1]} : vector<9x128xf32> to vector<1x128xf32>
    %131 = vector.shape_cast %130 : vector<1x128xf32> to vector<128xf32>
    %132 = vector.shape_cast %131 : vector<128xf32> to vector<1x1x128xf32>
    %133 = vector.broadcast %132 : vector<1x1x128xf32> to vector<16x16x128xf32>
    %134 = arith.mulf %129, %133 : vector<16x16x128xf32>
    %135 = arith.addf %128, %134 : vector<16x16x128xf32>
    %c2_76 = arith.constant 2 : index
    %c8_77 = arith.constant 8 : index
    %c0_78 = arith.constant 0 : index
    %136 = vector.load %arg12[%c2_76, %c8_77, %c0_78] : memref<18x32x128xf32, #tpu.memory_space<vmem>>, vector<16x16x128xf32>
    %137 = vector.extract_strided_slice %87 {offsets = [7, 0], sizes = [1, 128], strides = [1, 1]} : vector<9x128xf32> to vector<1x128xf32>
    %138 = vector.shape_cast %137 : vector<1x128xf32> to vector<128xf32>
    %139 = vector.shape_cast %138 : vector<128xf32> to vector<1x1x128xf32>
    %140 = vector.broadcast %139 : vector<1x1x128xf32> to vector<16x16x128xf32>
    %141 = arith.mulf %136, %140 : vector<16x16x128xf32>
    %142 = arith.addf %135, %141 : vector<16x16x128xf32>
    %c2_79 = arith.constant 2 : index
    %c9_80 = arith.constant 9 : index
    %c0_81 = arith.constant 0 : index
    %143 = vector.load %arg12[%c2_79, %c9_80, %c0_81] : memref<18x32x128xf32, #tpu.memory_space<vmem>>, vector<16x16x128xf32>
    %144 = vector.extract_strided_slice %87 {offsets = [8, 0], sizes = [1, 128], strides = [1, 1]} : vector<9x128xf32> to vector<1x128xf32>
    %145 = vector.shape_cast %144 : vector<1x128xf32> to vector<128xf32>
    %146 = vector.shape_cast %145 : vector<128xf32> to vector<1x1x128xf32>
    %147 = vector.broadcast %146 : vector<1x1x128xf32> to vector<16x16x128xf32>
    %148 = arith.mulf %143, %147 : vector<16x16x128xf32>
    %149 = arith.addf %142, %148 : vector<16x16x128xf32>
    %150 = vector.shape_cast %149 : vector<16x16x128xf32> to vector<256x128xf32>
    %151 = arith.truncf %150 : vector<256x128xf32> to vector<256x128xbf16>
    %c0_82 = arith.constant 0 : index
    %c0_83 = arith.constant 0 : index
    %152 = vector.load %arg7[%c0_82, %c0_83] : memref<128x128xbf16, #tpu.memory_space<vmem>>, vector<128x128xbf16>
    %cst_84 = arith.constant dense<0.000000e+00> : vector<256x128xf32>
    %153 = tpu.matmul %151, %152, %cst_84 {dimension_numbers = #tpu.dot_dimension_numbers<[1], [0], [0], [1], [0, 0, 1, 1], [], []>} : vector<256x128xbf16>, vector<128x128xbf16>, vector<256x128xf32> -> vector<256x128xf32>
    %c0_85 = arith.constant 0 : index
    %c0_86 = arith.constant 0 : index
    %154 = vector.load %arg8[%c0_85, %c0_86] : memref<1x128xf32, #tpu.memory_space<vmem>>, vector<1x128xf32>
    %155 = vector.broadcast %154 : vector<1x128xf32> to vector<256x128xf32>
    %156 = arith.addf %153, %155 : vector<256x128xf32>
    %157 = vector.shape_cast %156 : vector<256x128xf32> to vector<16x16x128xf32>
    %cst_87 = arith.constant 0.000000e+00 : f32
    %158 = vector.broadcast %cst_87 : f32 to vector<16x16x128xf32>
    %159 = arith.maximumf %157, %158 : vector<16x16x128xf32>
    %c1_88 = arith.constant 1 : index
    %c8_89 = arith.constant 8 : index
    %c0_90 = arith.constant 0 : index
    %160 = vector.load %arg12[%c1_88, %c8_89, %c0_90] : memref<18x32x128xf32, #tpu.memory_space<vmem>>, vector<16x16x128xf32>
    tpu.vector_store %arg12[%c1_88, %c8_89, %c0_90], %159 {strides = array<i32>} : memref<18x32x128xf32, #tpu.memory_space<vmem>>, vector<16x16x128xf32>,
    %c0_91 = arith.constant 0 : index
    %c0_92 = arith.constant 0 : index
    %161 = vector.load %arg4[%c0_91, %c0_92] : memref<9x128xf32, #tpu.memory_space<vmem>>, vector<9x128xf32>
    %c0_93 = arith.constant 0 : index
    %c7_94 = arith.constant 7 : index
    %c0_95 = arith.constant 0 : index
    %162 = vector.load %arg12[%c0_93, %c7_94, %c0_95] : memref<18x32x128xf32, #tpu.memory_space<vmem>>, vector<16x16x128xf32>
    %163 = vector.shape_cast %162 : vector<16x16x128xf32> to vector<8x2x16x128xf32>
    %164 = vector.extract_strided_slice %163 {offsets = [0, 0, 0, 0], sizes = [8, 1, 16, 128], strides = [1, 1, 1, 1]} : vector<8x2x16x128xf32> to vector<8x1x16x128xf32>
    %165 = vector.shape_cast %164 : vector<8x1x16x128xf32> to vector<8x16x128xf32>
    %166 = vector.extract_strided_slice %161 {offsets = [0, 0], sizes = [1, 128], strides = [1, 1]} : vector<9x128xf32> to vector<1x128xf32>
    %167 = vector.shape_cast %166 : vector<1x128xf32> to vector<128xf32>
    %168 = vector.shape_cast %167 : vector<128xf32> to vector<1x1x128xf32>
    %169 = vector.broadcast %168 : vector<1x1x128xf32> to vector<8x16x128xf32>
    %170 = arith.mulf %165, %169 : vector<8x16x128xf32>
    %c0_96 = arith.constant 0 : index
    %c8_97 = arith.constant 8 : index
    %c0_98 = arith.constant 0 : index
    %171 = vector.load %arg12[%c0_96, %c8_97, %c0_98] : memref<18x32x128xf32, #tpu.memory_space<vmem>>, vector<16x16x128xf32>
    %172 = vector.shape_cast %171 : vector<16x16x128xf32> to vector<8x2x16x128xf32>
    %173 = vector.extract_strided_slice %172 {offsets = [0, 0, 0, 0], sizes = [8, 1, 16, 128], strides = [1, 1, 1, 1]} : vector<8x2x16x128xf32> to vector<8x1x16x128xf32>
    %174 = vector.shape_cast %173 : vector<8x1x16x128xf32> to vector<8x16x128xf32>
    %175 = vector.extract_strided_slice %161 {offsets = [1, 0], sizes = [1, 128], strides = [1, 1]} : vector<9x128xf32> to vector<1x128xf32>
    %176 = vector.shape_cast %175 : vector<1x128xf32> to vector<128xf32>
    %177 = vector.shape_cast %176 : vector<128xf32> to vector<1x1x128xf32>
    %178 = vector.broadcast %177 : vector<1x1x128xf32> to vector<8x16x128xf32>
    %179 = arith.mulf %174, %178 : vector<8x16x128xf32>
    %180 = arith.addf %170, %179 : vector<8x16x128xf32>
    %c0_99 = arith.constant 0 : index
    %c9_100 = arith.constant 9 : index
    %c0_101 = arith.constant 0 : index
    %181 = vector.load %arg12[%c0_99, %c9_100, %c0_101] : memref<18x32x128xf32, #tpu.memory_space<vmem>>, vector<16x16x128xf32>
    %182 = vector.shape_cast %181 : vector<16x16x128xf32> to vector<8x2x16x128xf32>
    %183 = vector.extract_strided_slice %182 {offsets = [0, 0, 0, 0], sizes = [8, 1, 16, 128], strides = [1, 1, 1, 1]} : vector<8x2x16x128xf32> to vector<8x1x16x128xf32>
    %184 = vector.shape_cast %183 : vector<8x1x16x128xf32> to vector<8x16x128xf32>
    %185 = vector.extract_strided_slice %161 {offsets = [2, 0], sizes = [1, 128], strides = [1, 1]} : vector<9x128xf32> to vector<1x128xf32>
    %186 = vector.shape_cast %185 : vector<1x128xf32> to vector<128xf32>
    %187 = vector.shape_cast %186 : vector<128xf32> to vector<1x1x128xf32>
    %188 = vector.broadcast %187 : vector<1x1x128xf32> to vector<8x16x128xf32>
    %189 = arith.mulf %184, %188 : vector<8x16x128xf32>
    %190 = arith.addf %180, %189 : vector<8x16x128xf32>
    %c1_102 = arith.constant 1 : index
    %c7_103 = arith.constant 7 : index
    %c0_104 = arith.constant 0 : index
    %191 = vector.load %arg12[%c1_102, %c7_103, %c0_104] : memref<18x32x128xf32, #tpu.memory_space<vmem>>, vector<16x16x128xf32>
    %192 = vector.shape_cast %191 : vector<16x16x128xf32> to vector<8x2x16x128xf32>
    %193 = vector.extract_strided_slice %192 {offsets = [0, 0, 0, 0], sizes = [8, 1, 16, 128], strides = [1, 1, 1, 1]} : vector<8x2x16x128xf32> to vector<8x1x16x128xf32>
    %194 = vector.shape_cast %193 : vector<8x1x16x128xf32> to vector<8x16x128xf32>
    %195 = vector.extract_strided_slice %161 {offsets = [3, 0], sizes = [1, 128], strides = [1, 1]} : vector<9x128xf32> to vector<1x128xf32>
    %196 = vector.shape_cast %195 : vector<1x128xf32> to vector<128xf32>
    %197 = vector.shape_cast %196 : vector<128xf32> to vector<1x1x128xf32>
    %198 = vector.broadcast %197 : vector<1x1x128xf32> to vector<8x16x128xf32>
    %199 = arith.mulf %194, %198 : vector<8x16x128xf32>
    %200 = arith.addf %190, %199 : vector<8x16x128xf32>
    %c1_105 = arith.constant 1 : index
    %c8_106 = arith.constant 8 : index
    %c0_107 = arith.constant 0 : index
    %201 = vector.load %arg12[%c1_105, %c8_106, %c0_107] : memref<18x32x128xf32, #tpu.memory_space<vmem>>, vector<16x16x128xf32>
    %202 = vector.shape_cast %201 : vector<16x16x128xf32> to vector<8x2x16x128xf32>
    %203 = vector.extract_strided_slice %202 {offsets = [0, 0, 0, 0], sizes = [8, 1, 16, 128], strides = [1, 1, 1, 1]} : vector<8x2x16x128xf32> to vector<8x1x16x128xf32>
    %204 = vector.shape_cast %203 : vector<8x1x16x128xf32> to vector<8x16x128xf32>
    %205 = vector.extract_strided_slice %161 {offsets = [4, 0], sizes = [1, 128], strides = [1, 1]} : vector<9x128xf32> to vector<1x128xf32>
    %206 = vector.shape_cast %205 : vector<1x128xf32> to vector<128xf32>
    %207 = vector.shape_cast %206 : vector<128xf32> to vector<1x1x128xf32>
    %208 = vector.broadcast %207 : vector<1x1x128xf32> to vector<8x16x128xf32>
    %209 = arith.mulf %204, %208 : vector<8x16x128xf32>
    %210 = arith.addf %200, %209 : vector<8x16x128xf32>
    %c1_108 = arith.constant 1 : index
    %c9_109 = arith.constant 9 : index
    %c0_110 = arith.constant 0 : index
    %211 = vector.load %arg12[%c1_108, %c9_109, %c0_110] : memref<18x32x128xf32, #tpu.memory_space<vmem>>, vector<16x16x128xf32>
    %212 = vector.shape_cast %211 : vector<16x16x128xf32> to vector<8x2x16x128xf32>
    %213 = vector.extract_strided_slice %212 {offsets = [0, 0, 0, 0], sizes = [8, 1, 16, 128], strides = [1, 1, 1, 1]} : vector<8x2x16x128xf32> to vector<8x1x16x128xf32>
    %214 = vector.shape_cast %213 : vector<8x1x16x128xf32> to vector<8x16x128xf32>
    %215 = vector.extract_strided_slice %161 {offsets = [5, 0], sizes = [1, 128], strides = [1, 1]} : vector<9x128xf32> to vector<1x128xf32>
    %216 = vector.shape_cast %215 : vector<1x128xf32> to vector<128xf32>
    %217 = vector.shape_cast %216 : vector<128xf32> to vector<1x1x128xf32>
    %218 = vector.broadcast %217 : vector<1x1x128xf32> to vector<8x16x128xf32>
    %219 = arith.mulf %214, %218 : vector<8x16x128xf32>
    %220 = arith.addf %210, %219 : vector<8x16x128xf32>
    %c2_111 = arith.constant 2 : index
    %c7_112 = arith.constant 7 : index
    %c0_113 = arith.constant 0 : index
    %221 = vector.load %arg12[%c2_111, %c7_112, %c0_113] : memref<18x32x128xf32, #tpu.memory_space<vmem>>, vector<16x16x128xf32>
    %222 = vector.shape_cast %221 : vector<16x16x128xf32> to vector<8x2x16x128xf32>
    %223 = vector.extract_strided_slice %222 {offsets = [0, 0, 0, 0], sizes = [8, 1, 16, 128], strides = [1, 1, 1, 1]} : vector<8x2x16x128xf32> to vector<8x1x16x128xf32>
    %224 = vector.shape_cast %223 : vector<8x1x16x128xf32> to vector<8x16x128xf32>
    %225 = vector.extract_strided_slice %161 {offsets = [6, 0], sizes = [1, 128], strides = [1, 1]} : vector<9x128xf32> to vector<1x128xf32>
    %226 = vector.shape_cast %225 : vector<1x128xf32> to vector<128xf32>
    %227 = vector.shape_cast %226 : vector<128xf32> to vector<1x1x128xf32>
    %228 = vector.broadcast %227 : vector<1x1x128xf32> to vector<8x16x128xf32>
    %229 = arith.mulf %224, %228 : vector<8x16x128xf32>
    %230 = arith.addf %220, %229 : vector<8x16x128xf32>
    %c2_114 = arith.constant 2 : index
    %c8_115 = arith.constant 8 : index
    %c0_116 = arith.constant 0 : index
    %231 = vector.load %arg12[%c2_114, %c8_115, %c0_116] : memref<18x32x128xf32, #tpu.memory_space<vmem>>, vector<16x16x128xf32>
    %232 = vector.shape_cast %231 : vector<16x16x128xf32> to vector<8x2x16x128xf32>
    %233 = vector.extract_strided_slice %232 {offsets = [0, 0, 0, 0], sizes = [8, 1, 16, 128], strides = [1, 1, 1, 1]} : vector<8x2x16x128xf32> to vector<8x1x16x128xf32>
    %234 = vector.shape_cast %233 : vector<8x1x16x128xf32> to vector<8x16x128xf32>
    %235 = vector.extract_strided_slice %161 {offsets = [7, 0], sizes = [1, 128], strides = [1, 1]} : vector<9x128xf32> to vector<1x128xf32>
    %236 = vector.shape_cast %235 : vector<1x128xf32> to vector<128xf32>
    %237 = vector.shape_cast %236 : vector<128xf32> to vector<1x1x128xf32>
    %238 = vector.broadcast %237 : vector<1x1x128xf32> to vector<8x16x128xf32>
    %239 = arith.mulf %234, %238 : vector<8x16x128xf32>
    %240 = arith.addf %230, %239 : vector<8x16x128xf32>
    %c2_117 = arith.constant 2 : index
    %c9_118 = arith.constant 9 : index
    %c0_119 = arith.constant 0 : index
    %241 = vector.load %arg12[%c2_117, %c9_118, %c0_119] : memref<18x32x128xf32, #tpu.memory_space<vmem>>, vector<16x16x128xf32>
    %242 = vector.shape_cast %241 : vector<16x16x128xf32> to vector<8x2x16x128xf32>
    %243 = vector.extract_strided_slice %242 {offsets = [0, 0, 0, 0], sizes = [8, 1, 16, 128], strides = [1, 1, 1, 1]} : vector<8x2x16x128xf32> to vector<8x1x16x128xf32>
    %244 = vector.shape_cast %243 : vector<8x1x16x128xf32> to vector<8x16x128xf32>
    %245 = vector.extract_strided_slice %161 {offsets = [8, 0], sizes = [1, 128], strides = [1, 1]} : vector<9x128xf32> to vector<1x128xf32>
    %246 = vector.shape_cast %245 : vector<1x128xf32> to vector<128xf32>
    %247 = vector.shape_cast %246 : vector<128xf32> to vector<1x1x128xf32>
    %248 = vector.broadcast %247 : vector<1x1x128xf32> to vector<8x16x128xf32>
    %249 = arith.mulf %244, %248 : vector<8x16x128xf32>
    %250 = arith.addf %240, %249 : vector<8x16x128xf32>
    %251 = vector.shape_cast %9 : vector<16x16x128xf32> to vector<8x2x16x128xf32>
    %252 = vector.extract_strided_slice %251 {offsets = [0, 0, 0, 0], sizes = [8, 1, 16, 128], strides = [1, 1, 1, 1]} : vector<8x2x16x128xf32> to vector<8x1x16x128xf32>
    %253 = vector.shape_cast %252 : vector<8x1x16x128xf32> to vector<8x16x128xf32>
    %254 = arith.truncf %250 : vector<8x16x128xf32> to vector<8x16x128xbf16>
    %255 = arith.truncf %253 : vector<8x16x128xf32> to vector<8x16x128xbf16>
    %256 = tpu.concatenate %254, %255 in 2 : vector<8x16x128xbf16>, vector<8x16x128xbf16> -> vector<8x16x256xbf16>
    %257 = vector.shape_cast %256 : vector<8x16x256xbf16> to vector<128x256xbf16>
    %c0_120 = arith.constant 0 : index
    %c0_121 = arith.constant 0 : index
    %258 = vector.load %arg9[%c0_120, %c0_121] : memref<256x128xbf16, #tpu.memory_space<vmem>>, vector<256x128xbf16>
    %cst_122 = arith.constant dense<0.000000e+00> : vector<128x128xf32>
    %259 = tpu.matmul %257, %258, %cst_122 {dimension_numbers = #tpu.dot_dimension_numbers<[1], [0], [0], [1], [0, 0, 1, 1], [], []>} : vector<128x256xbf16>, vector<256x128xbf16>, vector<128x128xf32> -> vector<128x128xf32>
    %c0_123 = arith.constant 0 : index
    %c0_124 = arith.constant 0 : index
    %260 = vector.load %arg10[%c0_123, %c0_124] : memref<1x128xf32, #tpu.memory_space<vmem>>, vector<1x128xf32>
    %261 = vector.broadcast %260 : vector<1x128xf32> to vector<128x128xf32>
    %262 = arith.addf %259, %261 : vector<128x128xf32>
    %263 = vector.shape_cast %262 : vector<128x128xf32> to vector<8x16x128xf32>
    %c0_125 = arith.constant 0 : index
    %c0_126 = arith.constant 0 : index
    %c0_127 = arith.constant 0 : index
    %c0_128 = arith.constant 0 : index
    %264 = vector.load %arg11[%c0_125, %c0_126, %c0_127, %c0_128] : memref<1x8x16x128xf32, #tpu.memory_space<vmem>>, vector<1x8x16x128xf32>
    %265 = vector.shape_cast %264 : vector<1x8x16x128xf32> to vector<8x16x128xf32>
    %266 = vector.shape_cast %263 : vector<8x16x128xf32> to vector<1x8x16x128xf32>
    tpu.vector_store %arg11[%c0_125, %c0_126, %c0_127, %c0_128], %266 {strides = array<i32>} : memref<1x8x16x128xf32, #tpu.memory_space<vmem>>, vector<1x8x16x128xf32>,
    return
  }
  func.func @transform_0(%arg0: i32) -> (i32, i32, i32, i32) {
    %c0_i32 = arith.constant 0 : i32
    %c0_i32_0 = arith.constant 0 : i32
    %c0_i32_1 = arith.constant 0 : i32
    %c0_i32_2 = arith.constant 0 : i32
    return %arg0, %c0_i32, %c0_i32_0, %c0_i32_1 : i32, i32, i32, i32
  }
  func.func @transform_1(%arg0: i32) -> (i32, i32) {
    %c0_i32 = arith.constant 0 : i32
    %c0_i32_0 = arith.constant 0 : i32
    %c0_i32_1 = arith.constant 0 : i32
    return %c0_i32, %c0_i32_0 : i32, i32
  }
  func.func @transform_2(%arg0: i32) -> (i32, i32) {
    %c0_i32 = arith.constant 0 : i32
    %c0_i32_0 = arith.constant 0 : i32
    %c0_i32_1 = arith.constant 0 : i32
    return %c0_i32, %c0_i32_0 : i32, i32
  }
  func.func @transform_3(%arg0: i32) -> (i32, i32) {
    %c0_i32 = arith.constant 0 : i32
    %c0_i32_0 = arith.constant 0 : i32
    %c0_i32_1 = arith.constant 0 : i32
    return %c0_i32, %c0_i32_0 : i32, i32
  }
  func.func @transform_4(%arg0: i32) -> (i32, i32) {
    %c0_i32 = arith.constant 0 : i32
    %c0_i32_0 = arith.constant 0 : i32
    %c0_i32_1 = arith.constant 0 : i32
    return %c0_i32, %c0_i32_0 : i32, i32
  }
  func.func @transform_5(%arg0: i32) -> (i32, i32) {
    %c0_i32 = arith.constant 0 : i32
    %c0_i32_0 = arith.constant 0 : i32
    %c0_i32_1 = arith.constant 0 : i32
    return %c0_i32, %c0_i32_0 : i32, i32
  }
  func.func @transform_6(%arg0: i32) -> (i32, i32) {
    %c0_i32 = arith.constant 0 : i32
    %c0_i32_0 = arith.constant 0 : i32
    %c0_i32_1 = arith.constant 0 : i32
    return %c0_i32, %c0_i32_0 : i32, i32
  }
  func.func @transform_7(%arg0: i32) -> (i32, i32) {
    %c0_i32 = arith.constant 0 : i32
    %c0_i32_0 = arith.constant 0 : i32
    %c0_i32_1 = arith.constant 0 : i32
    return %c0_i32, %c0_i32_0 : i32, i32
  }
  func.func @transform_8(%arg0: i32) -> (i32, i32) {
    %c0_i32 = arith.constant 0 : i32
    %c0_i32_0 = arith.constant 0 : i32
    %c0_i32_1 = arith.constant 0 : i32
    return %c0_i32, %c0_i32_0 : i32, i32
  }
  func.func @transform_9(%arg0: i32) -> (i32, i32) {
    %c0_i32 = arith.constant 0 : i32
    %c0_i32_0 = arith.constant 0 : i32
    %c0_i32_1 = arith.constant 0 : i32
    return %c0_i32, %c0_i32_0 : i32, i32
  }
  func.func @transform_10(%arg0: i32) -> (i32, i32, i32, i32) {
    %c0_i32 = arith.constant 0 : i32
    %c0_i32_0 = arith.constant 0 : i32
    %c0_i32_1 = arith.constant 0 : i32
    %c0_i32_2 = arith.constant 0 : i32
    return %arg0, %c0_i32, %c0_i32_0, %c0_i32_1 : i32, i32, i32, i32
  }
}

</mosaic_0001>

<llo_original>
// kernel: tpu_custom_call.1
$region0: #{tpu_custom_call.1}
  #allocation0 [shape = 'u32[]', space=smem, size = 0x4, offset = 0x4, fixed_abs, tag = 'smem constant byte address 0x4 - core index']
  #allocation1 [shape = 'u32[144,128]{1,0:T(1,128)}', space=vmem, size = 0x12000, scoped, tag = 'internal scratch']
  #allocation2 [shape = 'f32[18,32,128]{2,1,0:T(8,128)}', space=vmem, size = 0x48000, scoped, tag = 'scratch operand']
  %s0 = inlined_call_operand.hbm [shape: f32[2,16,16,128], index: 0, kind: input, shape index: {}]
  %s1 = inlined_call_operand.hbm [shape: f32[9,128], index: 1, kind: input, shape index: {}]
  %s2 = inlined_call_operand.hbm [shape: f32[9,128], index: 2, kind: input, shape index: {}]
  %s3 = inlined_call_operand.hbm [shape: f32[9,128], index: 3, kind: input, shape index: {}]
  %s4 = inlined_call_operand.hbm [shape: bf16[128,128], index: 4, kind: input, shape index: {}]
  %s5 = inlined_call_operand.vmem [shape: f32[1,128], index: 5, kind: input, shape index: {}]
  %s6 = inlined_call_operand.hbm [shape: bf16[128,128], index: 6, kind: input, shape index: {}]
  %s7 = inlined_call_operand.vmem [shape: f32[1,128], index: 7, kind: input, shape index: {}]
  %s8 = inlined_call_operand.hbm [shape: bf16[256,128], index: 8, kind: input, shape index: {}]
  %s9 = inlined_call_operand.vmem [shape: f32[1,128], index: 9, kind: input, shape index: {}]
  %s10 = inlined_call_operand.hbm [shape: f32[2,8,16,128], index: 10, kind: output, shape index: {}]
  %s11 = sld [smem:[#allocation0]]
  $region101: #{tpu_custom_call.1} parent=0
    _
  %s13 = ssub.s32 1, %s11
  %s14 = scalar_select 0, %s13, %s11
  $region1: #{tpu_custom_call.1} parent=0
    #allocation3 [shape = 'u8[262144]{0}', space=vmem, size = 0x40000, scoped, tag = 'input window, operand 0']
    #allocation4 [shape = 's32[2]{0}', space=sflag, size = 0x8, scoped, tag = 'scoped memory for tpu_custom_call.1']
    #allocation5 [shape = 's32[2]{0}', space=sflag, size = 0x8, scoped, tag = 'scoped memory for tpu_custom_call.1']
    #allocation6 [shape = 'u8[8192]{0}', space=vmem, size = 0x2000, scoped, tag = 'input window, operand 1, single buffered']
    #allocation7 [shape = 's32[1]{0}', space=sflag, size = 0x4, scoped, tag = 'scoped memory for tpu_custom_call.1']
    #allocation8 [shape = 'u8[8192]{0}', space=vmem, size = 0x2000, scoped, tag = 'input window, operand 2, single buffered']
    #allocation9 [shape = 'u8[8192]{0}', space=vmem, size = 0x2000, scoped, tag = 'input window, operand 3, single buffered']
    #allocation10 [shape = 's32[1]{0}', space=sflag, size = 0x4, scoped, tag = 'scoped memory for tpu_custom_call.1']
    #allocation11 [shape = 'u8[32768]{0}', space=vmem, size = 0x8000, scoped, tag = 'input window, operand 4, single buffered']
    #allocation12 [shape = 'u8[32768]{0}', space=vmem, size = 0x8000, scoped, tag = 'input window, operand 6, single buffered']
    #allocation13 [shape = 's32[1]{0}', space=sflag, size = 0x4, scoped, tag = 'scoped memory for tpu_custom_call.1']
    #allocation14 [shape = 'u8[65536]{0}', space=vmem, size = 0x10000, scoped, tag = 'input window, operand 8, single buffered']
    #allocation15 [shape = 'u8[131072]{0}', space=vmem, size = 0x20000, scoped, tag = 'output window, operand 0']
    %15 = vsyncpa [#allocation4], 0
    %s16 = scalar_lea.sflag [#allocation4], 1
    %17 = vsyncpa %s16, 0
    %18 = vsyncpa [#allocation7], 0
    %19 = vsyncpa [#allocation10], 0
    %20 = vsyncpa [#allocation13], 0
    %21 = vsyncpa [#allocation5], 0
    %s22 = scalar_lea.sflag [#allocation5], 1
    %23 = vsyncpa %s22, 0
    loop: start=0, step=1, limit=4
    $region2: #{tpu_custom_call.1} parent=1 // loop_pre_header
      _
    $region3: #{tpu_custom_call.1} parent=1 // loop_header
      %s25 = sphi 0, %s29
      %p26 = scmp.ge.s32.totalorder %s25, 4
      %s35 = sphi 0, %s37
      %s38 = sphi 0, %s35
      %s39 = sphi 0, %s38
      %s55 = sphi 0, %s39
      %s59 = sphi 0, %s59
      %s61 = sphi 0, %s59
      %s62 = sphi 0, %s61
      %s76 = sphi 0, %s62
      %s80 = sphi 0, %s80
      %s82 = sphi 0, %s80
      %s83 = sphi 0, %s82
      %s97 = sphi 0, %s83
      %s101 = sphi 0, %s101
      %s103 = sphi 0, %s101
      %s104 = sphi 0, %s103
      %s118 = sphi 0, %s104
      %s122 = sphi 0, %s122
      %s124 = sphi 0, %s122
      %s125 = sphi 0, %s124
      %s139 = sphi 0, %s125
      %s143 = sphi 0, %s143
      %s145 = sphi 0, %s143
      %s146 = sphi 0, %s145
      %s160 = sphi 0, %s146
      %s164 = sphi 0, %s164
      %s166 = sphi 0, %s164
      %s167 = sphi 0, %s166
      %s181 = sphi 0, %s167
      %s185 = sphi 0, %s185
      %s187 = sphi 0, %s185
      %s188 = sphi 0, %s187
      %s202 = sphi 0, %s188
      %s206 = sphi 0, %s206
      %s208 = sphi 0, %s206
      %s209 = sphi 0, %s208
      %s223 = sphi 0, %s209
      %s227 = sphi 0, %s227
      %s229 = sphi 0, %s227
      %s230 = sphi 0, %s229
      %s244 = sphi 0, %s230
      %s250 = sphi 0, %s252
      %s253 = sphi 0, %s250
      %s254 = sphi 0, %s253
      %s270 = sphi 0, %s254
    $region4: #{tpu_custom_call.1} parent=1 // loop_header_branch
      %28 = sbr.rel (%p26) target = $region8
    $region5: #{tpu_custom_call.1} parent=1 // loop_body
      %s30 = ssub.s32 %s25, 1
      %s31 = ssub.s32 %s25, 2
      %s32 = sadd.s32 %s25, 1
      %s33 = ssub.s32 %s25, %s32
      %p34 = scmp.eq.s32.totalorder %s33, 0
      %s36 = sadd.s32 %s35, 1
      %s37 = scalar_select %p34, %s35, %s36
      %p40 = pneg %p34
      %p41 = scmp.eq.s32.totalorder %s25, 1
      %p42 = por %p40, %p41
      %p43 = scmp.ne.s32.totalorder %s35, %s38
      %p44 = scmp.eq.s32.totalorder %s25, 0
      %p45 = por %p43, %p44
      %p46 = scmp.ne.s32.totalorder %s35, %s38
      %p47 = scmp.eq.s32.totalorder %s30, 1
      %p48 = por %p46, %p47
      %p49 = scmp.ne.s32.totalorder %s38, %s39
      %p50 = scmp.eq.s32.totalorder %s30, 0
      %p51 = por %p49, %p50
      %p52 = scmp.ne.s32.totalorder %s38, %s39
      %p53 = scmp.eq.s32.totalorder %s31, 1
      %p54 = por %p52, %p53
      %p56 = scmp.ne.s32.totalorder %s39, %s55
      %p57 = scmp.eq.s32.totalorder %s31, 0
      %p58 = por %p56, %p57
      %s60 = sadd.s32 %s59, 1
      %p63 = scmp.eq.s32.totalorder %s25, 1
      %p64 = scmp.ne.s32.totalorder %s59, %s61
      %p65 = scmp.eq.s32.totalorder %s25, 0
      %p66 = por %p64, %p65
      %p67 = scmp.ne.s32.totalorder %s59, %s61
      %p68 = scmp.eq.s32.totalorder %s30, 1
      %p69 = por %p67, %p68
      %p70 = scmp.ne.s32.totalorder %s61, %s62
      %p71 = scmp.eq.s32.totalorder %s30, 0
      %p72 = por %p70, %p71
      %p73 = scmp.ne.s32.totalorder %s61, %s62
      %p74 = scmp.eq.s32.totalorder %s31, 1
      %p75 = por %p73, %p74
      %p77 = scmp.ne.s32.totalorder %s62, %s76
      %p78 = scmp.eq.s32.totalorder %s31, 0
      %p79 = por %p77, %p78
      %s81 = sadd.s32 %s80, 1
      %p84 = scmp.eq.s32.totalorder %s25, 1
      %p85 = scmp.ne.s32.totalorder %s80, %s82
      %p86 = scmp.eq.s32.totalorder %s25, 0
      %p87 = por %p85, %p86
      %p88 = scmp.ne.s32.totalorder %s80, %s82
      %p89 = scmp.eq.s32.totalorder %s30, 1
      %p90 = por %p88, %p89
      %p91 = scmp.ne.s32.totalorder %s82, %s83
      %p92 = scmp.eq.s32.totalorder %s30, 0
      %p93 = por %p91, %p92
      %p94 = scmp.ne.s32.totalorder %s82, %s83
      %p95 = scmp.eq.s32.totalorder %s31, 1
      %p96 = por %p94, %p95
      %p98 = scmp.ne.s32.totalorder %s83, %s97
      %p99 = scmp.eq.s32.totalorder %s31, 0
      %p100 = por %p98, %p99
      %s102 = sadd.s32 %s101, 1
      %p105 = scmp.eq.s32.totalorder %s25, 1
      %p106 = scmp.ne.s32.totalorder %s101, %s103
      %p107 = scmp.eq.s32.totalorder %s25, 0
      %p108 = por %p106, %p107
      %p109 = scmp.ne.s32.totalorder %s101, %s103
      %p110 = scmp.eq.s32.totalorder %s30, 1
      %p111 = por %p109, %p110
      %p112 = scmp.ne.s32.totalorder %s103, %s104
      %p113 = scmp.eq.s32.totalorder %s30, 0
      %p114 = por %p112, %p113
      %p115 = scmp.ne.s32.totalorder %s103, %s104
      %p116 = scmp.eq.s32.totalorder %s31, 1
      %p117 = por %p115, %p116
      %p119 = scmp.ne.s32.totalorder %s104, %s118
      %p120 = scmp.eq.s32.totalorder %s31, 0
      %p121 = por %p119, %p120
      %s123 = sadd.s32 %s122, 1
      %p126 = scmp.eq.s32.totalorder %s25, 1
      %p127 = scmp.ne.s32.totalorder %s122, %s124
      %p128 = scmp.eq.s32.totalorder %s25, 0
      %p129 = por %p127, %p128
      %p130 = scmp.ne.s32.totalorder %s122, %s124
      %p131 = scmp.eq.s32.totalorder %s30, 1
      %p132 = por %p130, %p131
      %p133 = scmp.ne.s32.totalorder %s124, %s125
      %p134 = scmp.eq.s32.totalorder %s30, 0
      %p135 = por %p133, %p134
      %p136 = scmp.ne.s32.totalorder %s124, %s125
      %p137 = scmp.eq.s32.totalorder %s31, 1
      %p138 = por %p136, %p137
      %p140 = scmp.ne.s32.totalorder %s125, %s139
      %p141 = scmp.eq.s32.totalorder %s31, 0
      %p142 = por %p140, %p141
      %s144 = sadd.s32 %s143, 1
      %p147 = scmp.eq.s32.totalorder %s25, 1
      %p148 = scmp.ne.s32.totalorder %s143, %s145
      %p149 = scmp.eq.s32.totalorder %s25, 0
      %p150 = por %p148, %p149
      %p151 = scmp.ne.s32.totalorder %s143, %s145
      %p152 = scmp.eq.s32.totalorder %s30, 1
      %p153 = por %p151, %p152
      %p154 = scmp.ne.s32.totalorder %s145, %s146
      %p155 = scmp.eq.s32.totalorder %s30, 0
      %p156 = por %p154, %p155
      %p157 = scmp.ne.s32.totalorder %s145, %s146
      %p158 = scmp.eq.s32.totalorder %s31, 1
      %p159 = por %p157, %p158
      %p161 = scmp.ne.s32.totalorder %s146, %s160
      %p162 = scmp.eq.s32.totalorder %s31, 0
      %p163 = por %p161, %p162
      %s165 = sadd.s32 %s164, 1
      %p168 = scmp.eq.s32.totalorder %s25, 1
      %p169 = scmp.ne.s32.totalorder %s164, %s166
      %p170 = scmp.eq.s32.totalorder %s25, 0
      %p171 = por %p169, %p170
      %p172 = scmp.ne.s32.totalorder %s164, %s166
      %p173 = scmp.eq.s32.totalorder %s30, 1
      %p174 = por %p172, %p173
      %p175 = scmp.ne.s32.totalorder %s166, %s167
      %p176 = scmp.eq.s32.totalorder %s30, 0
      %p177 = por %p175, %p176
      %p178 = scmp.ne.s32.totalorder %s166, %s167
      %p179 = scmp.eq.s32.totalorder %s31, 1
      %p180 = por %p178, %p179
      %p182 = scmp.ne.s32.totalorder %s167, %s181
      %p183 = scmp.eq.s32.totalorder %s31, 0
      %p184 = por %p182, %p183
      %s186 = sadd.s32 %s185, 1
      %p189 = scmp.eq.s32.totalorder %s25, 1
      %p190 = scmp.ne.s32.totalorder %s185, %s187
      %p191 = scmp.eq.s32.totalorder %s25, 0
      %p192 = por %p190, %p191
      %p193 = scmp.ne.s32.totalorder %s185, %s187
      %p194 = scmp.eq.s32.totalorder %s30, 1
      %p195 = por %p193, %p194
      %p196 = scmp.ne.s32.totalorder %s187, %s188
      %p197 = scmp.eq.s32.totalorder %s30, 0
      %p198 = por %p196, %p197
      %p199 = scmp.ne.s32.totalorder %s187, %s188
      %p200 = scmp.eq.s32.totalorder %s31, 1
      %p201 = por %p199, %p200
      %p203 = scmp.ne.s32.totalorder %s188, %s202
      %p204 = scmp.eq.s32.totalorder %s31, 0
      %p205 = por %p203, %p204
      %s207 = sadd.s32 %s206, 1
      %p210 = scmp.eq.s32.totalorder %s25, 1
      %p211 = scmp.ne.s32.totalorder %s206, %s208
      %p212 = scmp.eq.s32.totalorder %s25, 0
      %p213 = por %p211, %p212
      %p214 = scmp.ne.s32.totalorder %s206, %s208
      %p215 = scmp.eq.s32.totalorder %s30, 1
      %p216 = por %p214, %p215
      %p217 = scmp.ne.s32.totalorder %s208, %s209
      %p218 = scmp.eq.s32.totalorder %s30, 0
      %p219 = por %p217, %p218
      %p220 = scmp.ne.s32.totalorder %s208, %s209
      %p221 = scmp.eq.s32.totalorder %s31, 1
      %p222 = por %p220, %p221
      %p224 = scmp.ne.s32.totalorder %s209, %s223
      %p225 = scmp.eq.s32.totalorder %s31, 0
      %p226 = por %p224, %p225
      %s228 = sadd.s32 %s227, 1
      %p231 = scmp.eq.s32.totalorder %s25, 1
      %p232 = scmp.ne.s32.totalorder %s227, %s229
      %p233 = scmp.eq.s32.totalorder %s25, 0
      %p234 = por %p232, %p233
      %p235 = scmp.ne.s32.totalorder %s227, %s229
      %p236 = scmp.eq.s32.totalorder %s30, 1
      %p237 = por %p235, %p236
      %p238 = scmp.ne.s32.totalorder %s229, %s230
      %p239 = scmp.eq.s32.totalorder %s30, 0
      %p240 = por %p238, %p239
      %p241 = scmp.ne.s32.totalorder %s229, %s230
      %p242 = scmp.eq.s32.totalorder %s31, 1
      %p243 = por %p241, %p242
      %p245 = scmp.ne.s32.totalorder %s230, %s244
      %p246 = scmp.eq.s32.totalorder %s31, 0
      %p247 = por %p245, %p246
      %s248 = ssub.s32 %s25, %s32
      %p249 = scmp.eq.s32.totalorder %s248, 0
      %s251 = sadd.s32 %s250, 1
      %s252 = scalar_select %p249, %s250, %s251
      %p255 = pneg %p249
      %p256 = scmp.eq.s32.totalorder %s25, 1
      %p257 = por %p255, %p256
      %p258 = scmp.ne.s32.totalorder %s250, %s253
      %p259 = scmp.eq.s32.totalorder %s25, 0
      %p260 = por %p258, %p259
      %p261 = scmp.ne.s32.totalorder %s250, %s253
      %p262 = scmp.eq.s32.totalorder %s30, 1
      %p263 = por %p261, %p262
      %p264 = scmp.ne.s32.totalorder %s253, %s254
      %p265 = scmp.eq.s32.totalorder %s30, 0
      %p266 = por %p264, %p265
      %p267 = scmp.ne.s32.totalorder %s253, %s254
      %p268 = scmp.eq.s32.totalorder %s31, 1
      %p269 = por %p267, %p268
      %p271 = scmp.ne.s32.totalorder %s254, %s270
      %p272 = scmp.eq.s32.totalorder %s31, 0
      %p273 = por %p271, %p272
      %p274 = scmp.le.s32.totalorder 1, %s25
      %p275 = scmp.lt.s32.totalorder %s25, 3
      %p276 = pnand %p274, %p275
      %p277 = pneg %p276
      // Predicated region
      $region9: #{tpu_custom_call.1} parent=5 // pred_check
        _
      $region10: #{tpu_custom_call.1} parent=5 // pred_check_branch
        %279 = sbr.rel (%p276) target = $region12
      $region11: #{tpu_custom_call.1} parent=5 // pred_region
        %s280 = ssub.s32 %s25, 1
        // Predicated region
        $region13: #{tpu_custom_call.1} parent=11 // pred_check
          %p281 = pneg %p72
        $region14: #{tpu_custom_call.1} parent=11 // pred_check_branch
          %283 = sbr.rel (%p281) target = $region16
        $region15: #{tpu_custom_call.1} parent=11 // pred_region
          %s285 = ssub.s32 256, 256
          %286 = vsyncadd [#allocation7], %s285
          %s287 = sshll.u32 [#allocation6], 4
          %s288 = int_to_ptr.vmem [resolvable:$true] %s287
          %293 = dma.hbm_to_vmem [thread:$0]  %s1, 256, %s288, [#allocation7], 128, 128, 8
        $region16: #{tpu_custom_call.1} parent=11 // pred_fallthru
          _
        // Predicated region
        $region17: #{tpu_custom_call.1} parent=11 // pred_check
          %p294 = pneg %p93
        $region18: #{tpu_custom_call.1} parent=11 // pred_check_branch
          %296 = sbr.rel (%p294) target = $region20
        $region19: #{tpu_custom_call.1} parent=11 // pred_region
          %s298 = ssub.s32 256, 256
          %299 = vsyncadd [#allocation7], %s298
          %s300 = sshll.u32 [#allocation8], 4
          %s301 = int_to_ptr.vmem [resolvable:$true] %s300
          %306 = dma.hbm_to_vmem [thread:$0]  %s2, 256, %s301, [#allocation7], 128, 128, 8
        $region20: #{tpu_custom_call.1} parent=11 // pred_fallthru
          _
        // Predicated region
        $region21: #{tpu_custom_call.1} parent=11 // pred_check
          %p307 = pneg %p114
        $region22: #{tpu_custom_call.1} parent=11 // pred_check_branch
          %309 = sbr.rel (%p307) target = $region24
        $region23: #{tpu_custom_call.1} parent=11 // pred_region
          %s311 = ssub.s32 256, 256
          %312 = vsyncadd [#allocation10], %s311
          %s313 = sshll.u32 [#allocation9], 4
          %s314 = int_to_ptr.vmem [resolvable:$true] %s313
          %319 = dma.hbm_to_vmem [thread:$0]  %s3, 256, %s314, [#allocation10], 128, 128, 8
        $region24: #{tpu_custom_call.1} parent=11 // pred_fallthru
          _
        // Predicated region
        $region25: #{tpu_custom_call.1} parent=11 // pred_check
          %p320 = pneg %p135
        $region26: #{tpu_custom_call.1} parent=11 // pred_check_branch
          %322 = sbr.rel (%p320) target = $region28
        $region27: #{tpu_custom_call.1} parent=11 // pred_region
          %s324 = ssub.s32 1024, 1024
          %325 = vsyncadd [#allocation10], %s324
          %s326 = sshll.u32 [#allocation11], 4
          %s327 = int_to_ptr.vmem [resolvable:$true] %s326
          %332 = dma.hbm_to_vmem [thread:$0]  %s4, 1024, %s327, [#allocation10], 64, 64, 4
        $region28: #{tpu_custom_call.1} parent=11 // pred_fallthru
          _
        // Predicated region
        $region29: #{tpu_custom_call.1} parent=11 // pred_check
          %p333 = pneg %p156
        $region30: #{tpu_custom_call.1} parent=11 // pred_check_branch
          %335 = sbr.rel (%p333) target = $region32
        $region31: #{tpu_custom_call.1} parent=11 // pred_region
          _
        $region32: #{tpu_custom_call.1} parent=11 // pred_fallthru
          _
        // Predicated region
        $region33: #{tpu_custom_call.1} parent=11 // pred_check
          %p336 = pneg %p177
        $region34: #{tpu_custom_call.1} parent=11 // pred_check_branch
          %338 = sbr.rel (%p336) target = $region36
        $region35: #{tpu_custom_call.1} parent=11 // pred_region
          %s340 = ssub.s32 1024, 1024
          %341 = vsyncadd [#allocation13], %s340
          %s342 = sshll.u32 [#allocation12], 4
          %s343 = int_to_ptr.vmem [resolvable:$true] %s342
          %348 = dma.hbm_to_vmem [thread:$0]  %s6, 1024, %s343, [#allocation13], 64, 64, 4
        $region36: #{tpu_custom_call.1} parent=11 // pred_fallthru
          _
        // Predicated region
        $region37: #{tpu_custom_call.1} parent=11 // pred_check
          %p349 = pneg %p198
        $region38: #{tpu_custom_call.1} parent=11 // pred_check_branch
          %351 = sbr.rel (%p349) target = $region40
        $region39: #{tpu_custom_call.1} parent=11 // pred_region
          _
        $region40: #{tpu_custom_call.1} parent=11 // pred_fallthru
          _
        // Predicated region
        $region41: #{tpu_custom_call.1} parent=11 // pred_check
          %p352 = pneg %p219
        $region42: #{tpu_custom_call.1} parent=11 // pred_check_branch
          %354 = sbr.rel (%p352) target = $region44
        $region43: #{tpu_custom_call.1} parent=11 // pred_region
          %s356 = ssub.s32 2048, 2048
          %357 = vsyncadd [#allocation13], %s356
          %s358 = sshll.u32 [#allocation14], 4
          %s359 = int_to_ptr.vmem [resolvable:$true] %s358
          %364 = dma.hbm_to_vmem [thread:$0]  %s8, 2048, %s359, [#allocation13], 64, 64, 4
        $region44: #{tpu_custom_call.1} parent=11 // pred_fallthru
          _
        // Predicated region
        $region45: #{tpu_custom_call.1} parent=11 // pred_check
          %p365 = pneg %p240
        $region46: #{tpu_custom_call.1} parent=11 // pred_check_branch
          %367 = sbr.rel (%p365) target = $region48
        $region47: #{tpu_custom_call.1} parent=11 // pred_region
          _
        $region48: #{tpu_custom_call.1} parent=11 // pred_fallthru
          _
      $region12: #{tpu_custom_call.1} parent=5 // pred_fallthru
        _
      %p368 = scmp.lt.s32.totalorder %s25, 2
      // Predicated region
      $region49: #{tpu_custom_call.1} parent=5 // pred_check
        %p369 = pneg %p368
      $region50: #{tpu_custom_call.1} parent=5 // pred_check_branch
        %371 = sbr.rel (%p369) target = $region52
      $region51: #{tpu_custom_call.1} parent=5 // pred_region
        // Predicated region
        $region53: #{tpu_custom_call.1} parent=51 // pred_check
          %p372 = pneg %p45
        $region54: #{tpu_custom_call.1} parent=51 // pred_check_branch
          %374 = sbr.rel (%p372) target = $region56
        $region55: #{tpu_custom_call.1} parent=51 // pred_region
          %s375 = sand.u32 %s35, 1
          %s376 = scalar_lea.sflag [#allocation4], %s375
          %s377 = sand.u32 %s35, 1
          %s378 = smul.addr %s377, 256
          %s379 = scalar_lea.vmem [#allocation3], %s378
          %s381 = ssub.s32 4096, 4096
          %382 = vsyncadd %s376, %s381
          %s383 = smul.addr %s25, 32
          %s384 = smul.addr %s383, 128
          %s385 = scalar_lea.hbm %s0, %s384
          %s386 = sshll.u32 %s379, 4
          %s387 = int_to_ptr.vmem [resolvable:$true] %s386
          %392 = dma.hbm_to_vmem [thread:$0]  %s385, 4096, %s387, %s376, 128, 128, 8
        $region56: #{tpu_custom_call.1} parent=51 // pred_fallthru
          _
      $region52: #{tpu_custom_call.1} parent=5 // pred_fallthru
        _
      %p393 = scmp.le.s32.totalorder 1, %s25
      %p394 = scmp.lt.s32.totalorder %s25, 3
      %p395 = pnand %p393, %p394
      %p396 = pneg %p395
      // Predicated region
      $region57: #{tpu_custom_call.1} parent=5 // pred_check
        _
      $region58: #{tpu_custom_call.1} parent=5 // pred_check_branch
        %398 = sbr.rel (%p395) target = $region60
      $region59: #{tpu_custom_call.1} parent=5 // pred_region
        %s399 = ssub.s32 %s25, 1
        %s400 = sand.u32 %s38, 1
        %s401 = scalar_lea.sflag [#allocation4], %s400
        %s402 = sand.u32 %s38, 1
        %s403 = smul.addr %s402, 256
        %s404 = scalar_lea.vmem [#allocation3], %s403
        // Predicated region
        $region61: #{tpu_custom_call.1} parent=59 // pred_check
          %p405 = pneg %p51
        $region62: #{tpu_custom_call.1} parent=59 // pred_check_branch
          %407 = sbr.rel (%p405) target = $region64
        $region63: #{tpu_custom_call.1} parent=59 // pred_region
          %408 = dma.done %s401, 4096
        $region64: #{tpu_custom_call.1} parent=59 // pred_fallthru
          _
        // Predicated region
        $region65: #{tpu_custom_call.1} parent=59 // pred_check
          %p409 = pneg %p72
        $region66: #{tpu_custom_call.1} parent=59 // pred_check_branch
          %411 = sbr.rel (%p409) target = $region68
        $region67: #{tpu_custom_call.1} parent=59 // pred_region
          %412 = dma.done [#allocation7], 256
        $region68: #{tpu_custom_call.1} parent=59 // pred_fallthru
          _
        // Predicated region
        $region69: #{tpu_custom_call.1} parent=59 // pred_check
          %p413 = pneg %p93
        $region70: #{tpu_custom_call.1} parent=59 // pred_check_branch
          %415 = sbr.rel (%p413) target = $region72
        $region71: #{tpu_custom_call.1} parent=59 // pred_region
          %416 = dma.done [#allocation7], 256
        $region72: #{tpu_custom_call.1} parent=59 // pred_fallthru
          _
        // Predicated region
        $region73: #{tpu_custom_call.1} parent=59 // pred_check
          %p417 = pneg %p114
        $region74: #{tpu_custom_call.1} parent=59 // pred_check_branch
          %419 = sbr.rel (%p417) target = $region76
        $region75: #{tpu_custom_call.1} parent=59 // pred_region
          %420 = dma.done [#allocation10], 256
        $region76: #{tpu_custom_call.1} parent=59 // pred_fallthru
          _
        // Predicated region
        $region77: #{tpu_custom_call.1} parent=59 // pred_check
          %p421 = pneg %p135
        $region78: #{tpu_custom_call.1} parent=59 // pred_check_branch
          %423 = sbr.rel (%p421) target = $region80
        $region79: #{tpu_custom_call.1} parent=59 // pred_region
          %424 = dma.done [#allocation10], 1024
        $region80: #{tpu_custom_call.1} parent=59 // pred_fallthru
          _
        // Predicated region
        $region81: #{tpu_custom_call.1} parent=59 // pred_check
          %p425 = pneg %p177
        $region82: #{tpu_custom_call.1} parent=59 // pred_check_branch
          %427 = sbr.rel (%p425) target = $region84
        $region83: #{tpu_custom_call.1} parent=59 // pred_region
          %428 = dma.done [#allocation13], 1024
        $region84: #{tpu_custom_call.1} parent=59 // pred_fallthru
          _
        // Predicated region
        $region85: #{tpu_custom_call.1} parent=59 // pred_check
          %p429 = pneg %p219
        $region86: #{tpu_custom_call.1} parent=59 // pred_check_branch
          %431 = sbr.rel (%p429) target = $region88
        $region87: #{tpu_custom_call.1} parent=59 // pred_region
          %432 = dma.done [#allocation13], 2048
        $region88: #{tpu_custom_call.1} parent=59 // pred_fallthru
          _
        %s433 = sand.u32 %s38, 1
        %s434 = scalar_lea.sflag [#allocation4], %s433
        %s435 = sand.u32 %s38, 1
        %s436 = smul.addr %s435, 256
        %s437 = scalar_lea.vmem [#allocation3], %s436
        %p438 = pneg %p51
        %p439 = pneg %p48
        %p440 = pneg %p72
        %p441 = pneg %p69
        %p442 = pneg %p93
        %p443 = pneg %p90
        %p444 = pneg %p114
        %p445 = pneg %p111
        %p446 = pneg %p135
        %p447 = pneg %p132
        %p448 = pneg %p156
        %p449 = pneg %p153
        %p450 = pneg %p177
        %p451 = pneg %p174
        %p452 = pneg %p198
        %p453 = pneg %p195
        %p454 = pneg %p219
        %p455 = pneg %p216
        %p456 = pneg %p240
        %p457 = pneg %p237
        %p458 = pneg %p266
        %p459 = pneg %p263
        %s460 = sand.u32 %s253, 1
        %s461 = scalar_lea.sflag [#allocation5], %s460
        %s462 = sand.u32 %s253, 1
        %s463 = smul.addr %s462, 128
        %s464 = scalar_lea.vmem [#allocation15], %s463
        %466 = vst [vmem:[#allocation2] sm:$0xff] 0.0
        %467 = vst [vmem:[#allocation2 + $0x8] sm:$0xff] 0.0
        %468 = vst [vmem:[#allocation2 + $0x10] sm:$0xff] 0.0
        %469 = vst [vmem:[#allocation2 + $0x18] sm:$0xff] 0.0
        %s470 = scalar_lea.vmem [#allocation2], 544
        %471 = vst [vmem:[%s470] sm:$0xff] 0.0
        %472 = vst [vmem:[%s470 + $0x8] sm:$0xff] 0.0
        %473 = vst [vmem:[%s470 + $0x10] sm:$0xff] 0.0
        %474 = vst [vmem:[%s470 + $0x18] sm:$0xff] 0.0
        %475 = vst [vmem:[#allocation2] sm:$0xff] 0.0
        %476 = vst [vmem:[#allocation2 + $0x20] sm:$0xff] 0.0
        %477 = vst [vmem:[#allocation2 + $0x40] sm:$0xff] 0.0
        %478 = vst [vmem:[#allocation2 + $0x60] sm:$0xff] 0.0
        %479 = vst [vmem:[#allocation2 + $0x80] sm:$0xff] 0.0
        %480 = vst [vmem:[#allocation2 + $0xa0] sm:$0xff] 0.0
        %481 = vst [vmem:[#allocation2 + $0xc0] sm:$0xff] 0.0
        %482 = vst [vmem:[#allocation2 + $0xe0] sm:$0xff] 0.0
        %483 = vst [vmem:[#allocation2 + $0x100] sm:$0xff] 0.0
        %484 = vst [vmem:[#allocation2 + $0x120] sm:$0xff] 0.0
        %485 = vst [vmem:[#allocation2 + $0x140] sm:$0xff] 0.0
        %486 = vst [vmem:[#allocation2 + $0x160] sm:$0xff] 0.0
        %487 = vst [vmem:[#allocation2 + $0x180] sm:$0xff] 0.0
        %488 = vst [vmem:[#allocation2 + $0x1a0] sm:$0xff] 0.0
        %489 = vst [vmem:[#allocation2 + $0x1c0] sm:$0xff] 0.0
        %490 = vst [vmem:[#allocation2 + $0x1e0] sm:$0xff] 0.0
        %491 = vst [vmem:[#allocation2 + $0x200] sm:$0xff] 0.0
        %492 = vst [vmem:[#allocation2 + $0x220] sm:$0xff] 0.0
        %493 = vst [vmem:[#allocation2 + $0x18] sm:$0xff] 0.0
        %494 = vst [vmem:[#allocation2 + $0x38] sm:$0xff] 0.0
        %495 = vst [vmem:[#allocation2 + $0x58] sm:$0xff] 0.0
        %496 = vst [vmem:[#allocation2 + $0x78] sm:$0xff] 0.0
        %497 = vst [vmem:[#allocation2 + $0x98] sm:$0xff] 0.0
        %498 = vst [vmem:[#allocation2 + $0xb8] sm:$0xff] 0.0
        %499 = vst [vmem:[#allocation2 + $0xd8] sm:$0xff] 0.0
        %500 = vst [vmem:[#allocation2 + $0xf8] sm:$0xff] 0.0
        %501 = vst [vmem:[#allocation2 + $0x118] sm:$0xff] 0.0
        %502 = vst [vmem:[#allocation2 + $0x138] sm:$0xff] 0.0
        %503 = vst [vmem:[#allocation2 + $0x158] sm:$0xff] 0.0
        %504 = vst [vmem:[#allocation2 + $0x178] sm:$0xff] 0.0
        %505 = vst [vmem:[#allocation2 + $0x198] sm:$0xff] 0.0
        %506 = vst [vmem:[#allocation2 + $0x1b8] sm:$0xff] 0.0
        %507 = vst [vmem:[#allocation2 + $0x1d8] sm:$0xff] 0.0
        %508 = vst [vmem:[#allocation2 + $0x1f8] sm:$0xff] 0.0
        %509 = vst [vmem:[#allocation2 + $0x218] sm:$0xff] 0.0
        %510 = vst [vmem:[#allocation2 + $0x238] sm:$0xff] 0.0
        %v511 = vld [vmem:[%s404] sm:$0xff]
        %v512 = vld [vmem:[%s404 + $0x8] sm:$0xff]
        %v513 = vld [vmem:[%s404 + $0x10] sm:$0xff]
        %v514 = vld [vmem:[%s404 + $0x18] sm:$0xff]
        %v515 = vld [vmem:[%s404 + $0x20] sm:$0xff]
        %v516 = vld [vmem:[%s404 + $0x28] sm:$0xff]
        %v517 = vld [vmem:[%s404 + $0x30] sm:$0xff]
        %v518 = vld [vmem:[%s404 + $0x38] sm:$0xff]
        %v519 = vld [vmem:[%s404 + $0x40] sm:$0xff]
        %v520 = vld [vmem:[%s404 + $0x48] sm:$0xff]
        %v521 = vld [vmem:[%s404 + $0x50] sm:$0xff]
        %v522 = vld [vmem:[%s404 + $0x58] sm:$0xff]
        %v523 = vld [vmem:[%s404 + $0x60] sm:$0xff]
        %v524 = vld [vmem:[%s404 + $0x68] sm:$0xff]
        %v525 = vld [vmem:[%s404 + $0x70] sm:$0xff]
        %v526 = vld [vmem:[%s404 + $0x78] sm:$0xff]
        %v527 = vld [vmem:[%s404 + $0x80] sm:$0xff]
        %v528 = vld [vmem:[%s404 + $0x88] sm:$0xff]
        %v529 = vld [vmem:[%s404 + $0x90] sm:$0xff]
        %v530 = vld [vmem:[%s404 + $0x98] sm:$0xff]
        %v531 = vld [vmem:[%s404 + $0xa0] sm:$0xff]
        %v532 = vld [vmem:[%s404 + $0xa8] sm:$0xff]
        %v533 = vld [vmem:[%s404 + $0xb0] sm:$0xff]
        %v534 = vld [vmem:[%s404 + $0xb8] sm:$0xff]
        %v535 = vld [vmem:[%s404 + $0xc0] sm:$0xff]
        %v536 = vld [vmem:[%s404 + $0xc8] sm:$0xff]
        %v537 = vld [vmem:[%s404 + $0xd0] sm:$0xff]
        %v538 = vld [vmem:[%s404 + $0xd8] sm:$0xff]
        %v539 = vld [vmem:[%s404 + $0xe0] sm:$0xff]
        %v540 = vld [vmem:[%s404 + $0xe8] sm:$0xff]
        %v541 = vld [vmem:[%s404 + $0xf0] sm:$0xff]
        %v542 = vld [vmem:[%s404 + $0xf8] sm:$0xff]
        %v543 = vmax.f32 %v511, 0.0
        %v544 = vmax.f32 %v512, 0.0
        %v545 = vmax.f32 %v513, 0.0
        %v546 = vmax.f32 %v514, 0.0
        %v547 = vmax.f32 %v515, 0.0
        %v548 = vmax.f32 %v516, 0.0
        %v549 = vmax.f32 %v517, 0.0
        %v550 = vmax.f32 %v518, 0.0
        %v551 = vmax.f32 %v519, 0.0
        %v552 = vmax.f32 %v520, 0.0
        %v553 = vmax.f32 %v521, 0.0
        %v554 = vmax.f32 %v522, 0.0
        %v555 = vmax.f32 %v523, 0.0
        %v556 = vmax.f32 %v524, 0.0
        %v557 = vmax.f32 %v525, 0.0
        %v558 = vmax.f32 %v526, 0.0
        %v559 = vmax.f32 %v527, 0.0
        %v560 = vmax.f32 %v528, 0.0
        %v561 = vmax.f32 %v529, 0.0
        %v562 = vmax.f32 %v530, 0.0
        %v563 = vmax.f32 %v531, 0.0
        %v564 = vmax.f32 %v532, 0.0
        %v565 = vmax.f32 %v533, 0.0
        %v566 = vmax.f32 %v534, 0.0
        %v567 = vmax.f32 %v535, 0.0
        %v568 = vmax.f32 %v536, 0.0
        %v569 = vmax.f32 %v537, 0.0
        %v570 = vmax.f32 %v538, 0.0
        %v571 = vmax.f32 %v539, 0.0
        %v572 = vmax.f32 %v540, 0.0
        %v573 = vmax.f32 %v541, 0.0
        %v574 = vmax.f32 %v542, 0.0
        %s575 = scalar_lea.vmem [#allocation2], 32
        %576 = vst [vmem:[%s575 + $0x8] sm:$0xff] %v543
        %577 = vst [vmem:[%s575 + $0x10] sm:$0xff] %v544
        %578 = vst [vmem:[%s575 + $0x28] sm:$0xff] %v545
        %579 = vst [vmem:[%s575 + $0x30] sm:$0xff] %v546
        %580 = vst [vmem:[%s575 + $0x48] sm:$0xff] %v547
        %581 = vst [vmem:[%s575 + $0x50] sm:$0xff] %v548
        %582 = vst [vmem:[%s575 + $0x68] sm:$0xff] %v549
        %583 = vst [vmem:[%s575 + $0x70] sm:$0xff] %v550
        %584 = vst [vmem:[%s575 + $0x88] sm:$0xff] %v551
        %585 = vst [vmem:[%s575 + $0x90] sm:$0xff] %v552
        %586 = vst [vmem:[%s575 + $0xa8] sm:$0xff] %v553
        %587 = vst [vmem:[%s575 + $0xb0] sm:$0xff] %v554
        %588 = vst [vmem:[%s575 + $0xc8] sm:$0xff] %v555
        %589 = vst [vmem:[%s575 + $0xd0] sm:$0xff] %v556
        %590 = vst [vmem:[%s575 + $0xe8] sm:$0xff] %v557
        %591 = vst [vmem:[%s575 + $0xf0] sm:$0xff] %v558
        %592 = vst [vmem:[%s575 + $0x108] sm:$0xff] %v559
        %593 = vst [vmem:[%s575 + $0x110] sm:$0xff] %v560
        %594 = vst [vmem:[%s575 + $0x128] sm:$0xff] %v561
        %595 = vst [vmem:[%s575 + $0x130] sm:$0xff] %v562
        %596 = vst [vmem:[%s575 + $0x148] sm:$0xff] %v563
        %597 = vst [vmem:[%s575 + $0x150] sm:$0xff] %v564
        %598 = vst [vmem:[%s575 + $0x168] sm:$0xff] %v565
        %599 = vst [vmem:[%s575 + $0x170] sm:$0xff] %v566
        %600 = vst [vmem:[%s575 + $0x188] sm:$0xff] %v567
        %601 = vst [vmem:[%s575 + $0x190] sm:$0xff] %v568
        %602 = vst [vmem:[%s575 + $0x1a8] sm:$0xff] %v569
        %603 = vst [vmem:[%s575 + $0x1b0] sm:$0xff] %v570
        %604 = vst [vmem:[%s575 + $0x1c8] sm:$0xff] %v571
        %605 = vst [vmem:[%s575 + $0x1d0] sm:$0xff] %v572
        %606 = vst [vmem:[%s575 + $0x1e8] sm:$0xff] %v573
        %607 = vst [vmem:[%s575 + $0x1f0] sm:$0xff] %v574
        %v608 = vld [vmem:[#allocation6] sm:$0xff]
        %v609 = vld [vmem:[#allocation6 + $0x8] sm:$0x1]
        %v610 = vld [vmem:[#allocation2 + $0x7] sm:$0xff]
        %v611 = vld [vmem:[#allocation2 + $0xf] sm:$0xff]
        %v612 = vld [vmem:[#allocation2 + $0x27] sm:$0xff]
        %v613 = vld [vmem:[#allocation2 + $0x2f] sm:$0xff]
        %v614 = vld [vmem:[#allocation2 + $0x47] sm:$0xff]
        %v615 = vld [vmem:[#allocation2 + $0x4f] sm:$0xff]
        %v616 = vld [vmem:[#allocation2 + $0x67] sm:$0xff]
        %v617 = vld [vmem:[#allocation2 + $0x6f] sm:$0xff]
        %v618 = vld [vmem:[#allocation2 + $0x87] sm:$0xff]
        %v619 = vld [vmem:[#allocation2 + $0x8f] sm:$0xff]
        %v620 = vld [vmem:[#allocation2 + $0xa7] sm:$0xff]
        %v621 = vld [vmem:[#allocation2 + $0xaf] sm:$0xff]
        %v622 = vld [vmem:[#allocation2 + $0xc7] sm:$0xff]
        %v623 = vld [vmem:[#allocation2 + $0xcf] sm:$0xff]
        %v624 = vld [vmem:[#allocation2 + $0xe7] sm:$0xff]
        %v625 = vld [vmem:[#allocation2 + $0xef] sm:$0xff]
        %v626 = vld [vmem:[#allocation2 + $0x107] sm:$0xff]
        %v627 = vld [vmem:[#allocation2 + $0x10f] sm:$0xff]
        %v628 = vld [vmem:[#allocation2 + $0x127] sm:$0xff]
        %v629 = vld [vmem:[#allocation2 + $0x12f] sm:$0xff]
        %v630 = vld [vmem:[#allocation2 + $0x147] sm:$0xff]
        %v631 = vld [vmem:[#allocation2 + $0x14f] sm:$0xff]
        %v632 = vld [vmem:[#allocation2 + $0x167] sm:$0xff]
        %v633 = vld [vmem:[#allocation2 + $0x16f] sm:$0xff]
        %v634 = vld [vmem:[#allocation2 + $0x187] sm:$0xff]
        %v635 = vld [vmem:[#allocation2 + $0x18f] sm:$0xff]
        %v636 = vld [vmem:[#allocation2 + $0x1a7] sm:$0xff]
        %v637 = vld [vmem:[#allocation2 + $0x1af] sm:$0xff]
        %v638 = vld [vmem:[#allocation2 + $0x1c7] sm:$0xff]
        %v639 = vld [vmem:[#allocation2 + $0x1cf] sm:$0xff]
        %v640 = vld [vmem:[#allocation2 + $0x1e7] sm:$0xff]
        %v641 = vld [vmem:[#allocation2 + $0x1ef] sm:$0xff]
        %v642 = vlaneseq
        %v643 = vshrl.u32 %v642, 7
        %v644 = vsub.s32 0, %v643
        %v645 = vrot.slane %v608, %v644
        %v646 = vmul.f32 %v610, %v645
        %v647 = vmul.f32 %v611, %v645
        %v648 = vmul.f32 %v612, %v645
        %v649 = vmul.f32 %v613, %v645
        %v650 = vmul.f32 %v614, %v645
        %v651 = vmul.f32 %v615, %v645
        %v652 = vmul.f32 %v616, %v645
        %v653 = vmul.f32 %v617, %v645
        %v654 = vmul.f32 %v618, %v645
        %v655 = vmul.f32 %v619, %v645
        %v656 = vmul.f32 %v620, %v645
        %v657 = vmul.f32 %v621, %v645
        %v658 = vmul.f32 %v622, %v645
        %v659 = vmul.f32 %v623, %v645
        %v660 = vmul.f32 %v624, %v645
        %v661 = vmul.f32 %v625, %v645
        %v662 = vmul.f32 %v626, %v645
        %v663 = vmul.f32 %v627, %v645
        %v664 = vmul.f32 %v628, %v645
        %v665 = vmul.f32 %v629, %v645
        %v666 = vmul.f32 %v630, %v645
        %v667 = vmul.f32 %v631, %v645
        %v668 = vmul.f32 %v632, %v645
        %v669 = vmul.f32 %v633, %v645
        %v670 = vmul.f32 %v634, %v645
        %v671 = vmul.f32 %v635, %v645
        %v672 = vmul.f32 %v636, %v645
        %v673 = vmul.f32 %v637, %v645
        %v674 = vmul.f32 %v638, %v645
        %v675 = vmul.f32 %v639, %v645
        %v676 = vmul.f32 %v640, %v645
        %v677 = vmul.f32 %v641, %v645
        %v678 = vld [vmem:[#allocation2 + $0x8] sm:$0xff]
        %v679 = vld [vmem:[#allocation2 + $0x10] sm:$0xff]
        %v680 = vld [vmem:[#allocation2 + $0x28] sm:$0xff]
        %v681 = vld [vmem:[#allocation2 + $0x30] sm:$0xff]
        %v682 = vld [vmem:[#allocation2 + $0x48] sm:$0xff]
        %v683 = vld [vmem:[#allocation2 + $0x50] sm:$0xff]
        %v684 = vld [vmem:[#allocation2 + $0x68] sm:$0xff]
        %v685 = vld [vmem:[#allocation2 + $0x70] sm:$0xff]
        %v686 = vld [vmem:[#allocation2 + $0x88] sm:$0xff]
        %v687 = vld [vmem:[#allocation2 + $0x90] sm:$0xff]
        %v688 = vld [vmem:[#allocation2 + $0xa8] sm:$0xff]
        %v689 = vld [vmem:[#allocation2 + $0xb0] sm:$0xff]
        %v690 = vld [vmem:[#allocation2 + $0xc8] sm:$0xff]
        %v691 = vld [vmem:[#allocation2 + $0xd0] sm:$0xff]
        %v692 = vld [vmem:[#allocation2 + $0xe8] sm:$0xff]
        %v693 = vld [vmem:[#allocation2 + $0xf0] sm:$0xff]
        %v694 = vld [vmem:[#allocation2 + $0x108] sm:$0xff]
        %v695 = vld [vmem:[#allocation2 + $0x110] sm:$0xff]
        %v696 = vld [vmem:[#allocation2 + $0x128] sm:$0xff]
        %v697 = vld [vmem:[#allocation2 + $0x130] sm:$0xff]
        %v698 = vld [vmem:[#allocation2 + $0x148] sm:$0xff]
        %v699 = vld [vmem:[#allocation2 + $0x150] sm:$0xff]
        %v700 = vld [vmem:[#allocation2 + $0x168] sm:$0xff]
        %v701 = vld [vmem:[#allocation2 + $0x170] sm:$0xff]
        %v702 = vld [vmem:[#allocation2 + $0x188] sm:$0xff]
        %v703 = vld [vmem:[#allocation2 + $0x190] sm:$0xff]
        %v704 = vld [vmem:[#allocation2 + $0x1a8] sm:$0xff]
        %v705 = vld [vmem:[#allocation2 + $0x1b0] sm:$0xff]
        %v706 = vld [vmem:[#allocation2 + $0x1c8] sm:$0xff]
        %v707 = vld [vmem:[#allocation2 + $0x1d0] sm:$0xff]
        %v708 = vld [vmem:[#allocation2 + $0x1e8] sm:$0xff]
        %v709 = vld [vmem:[#allocation2 + $0x1f0] sm:$0xff]
        %v710 = vlaneseq
        %v711 = vshrl.u32 %v710, 7
        %v712 = vsub.s32 1, %v711
        %v713 = vrot.slane %v608, %v712
        %v714 = vmul.f32 %v678, %v713
        %v715 = vmul.f32 %v679, %v713
        %v716 = vmul.f32 %v680, %v713
        %v717 = vmul.f32 %v681, %v713
        %v718 = vmul.f32 %v682, %v713
        %v719 = vmul.f32 %v683, %v713
        %v720 = vmul.f32 %v684, %v713
        %v721 = vmul.f32 %v685, %v713
        %v722 = vmul.f32 %v686, %v713
        %v723 = vmul.f32 %v687, %v713
        %v724 = vmul.f32 %v688, %v713
        %v725 = vmul.f32 %v689, %v713
        %v726 = vmul.f32 %v690, %v713
        %v727 = vmul.f32 %v691, %v713
        %v728 = vmul.f32 %v692, %v713
        %v729 = vmul.f32 %v693, %v713
        %v730 = vmul.f32 %v694, %v713
        %v731 = vmul.f32 %v695, %v713
        %v732 = vmul.f32 %v696, %v713
        %v733 = vmul.f32 %v697, %v713
        %v734 = vmul.f32 %v698, %v713
        %v735 = vmul.f32 %v699, %v713
        %v736 = vmul.f32 %v700, %v713
        %v737 = vmul.f32 %v701, %v713
        %v738 = vmul.f32 %v702, %v713
        %v739 = vmul.f32 %v703, %v713
        %v740 = vmul.f32 %v704, %v713
        %v741 = vmul.f32 %v705, %v713
        %v742 = vmul.f32 %v706, %v713
        %v743 = vmul.f32 %v707, %v713
        %v744 = vmul.f32 %v708, %v713
        %v745 = vmul.f32 %v709, %v713
        %v746 = vadd.f32 %v646, %v714
        %v747 = vadd.f32 %v647, %v715
        %v748 = vadd.f32 %v648, %v716
        %v749 = vadd.f32 %v649, %v717
        %v750 = vadd.f32 %v650, %v718
        %v751 = vadd.f32 %v651, %v719
        %v752 = vadd.f32 %v652, %v720
        %v753 = vadd.f32 %v653, %v721
        %v754 = vadd.f32 %v654, %v722
        %v755 = vadd.f32 %v655, %v723
        %v756 = vadd.f32 %v656, %v724
        %v757 = vadd.f32 %v657, %v725
        %v758 = vadd.f32 %v658, %v726
        %v759 = vadd.f32 %v659, %v727
        %v760 = vadd.f32 %v660, %v728
        %v761 = vadd.f32 %v661, %v729
        %v762 = vadd.f32 %v662, %v730
        %v763 = vadd.f32 %v663, %v731
        %v764 = vadd.f32 %v664, %v732
        %v765 = vadd.f32 %v665, %v733
        %v766 = vadd.f32 %v666, %v734
        %v767 = vadd.f32 %v667, %v735
        %v768 = vadd.f32 %v668, %v736
        %v769 = vadd.f32 %v669, %v737
        %v770 = vadd.f32 %v670, %v738
        %v771 = vadd.f32 %v671, %v739
        %v772 = vadd.f32 %v672, %v740
        %v773 = vadd.f32 %v673, %v741
        %v774 = vadd.f32 %v674, %v742
        %v775 = vadd.f32 %v675, %v743
        %v776 = vadd.f32 %v676, %v744
        %v777 = vadd.f32 %v677, %v745
        %v778 = vld [vmem:[#allocation2 + $0x9] sm:$0xff]
        %v779 = vld [vmem:[#allocation2 + $0x11] sm:$0xff]
        %v780 = vld [vmem:[#allocation2 + $0x29] sm:$0xff]
        %v781 = vld [vmem:[#allocation2 + $0x31] sm:$0xff]
        %v782 = vld [vmem:[#allocation2 + $0x49] sm:$0xff]
        %v783 = vld [vmem:[#allocation2 + $0x51] sm:$0xff]
        %v784 = vld [vmem:[#allocation2 + $0x69] sm:$0xff]
        %v785 = vld [vmem:[#allocation2 + $0x71] sm:$0xff]
        %v786 = vld [vmem:[#allocation2 + $0x89] sm:$0xff]
        %v787 = vld [vmem:[#allocation2 + $0x91] sm:$0xff]
        %v788 = vld [vmem:[#allocation2 + $0xa9] sm:$0xff]
        %v789 = vld [vmem:[#allocation2 + $0xb1] sm:$0xff]
        %v790 = vld [vmem:[#allocation2 + $0xc9] sm:$0xff]
        %v791 = vld [vmem:[#allocation2 + $0xd1] sm:$0xff]
        %v792 = vld [vmem:[#allocation2 + $0xe9] sm:$0xff]
        %v793 = vld [vmem:[#allocation2 + $0xf1] sm:$0xff]
        %v794 = vld [vmem:[#allocation2 + $0x109] sm:$0xff]
        %v795 = vld [vmem:[#allocation2 + $0x111] sm:$0xff]
        %v796 = vld [vmem:[#allocation2 + $0x129] sm:$0xff]
        %v797 = vld [vmem:[#allocation2 + $0x131] sm:$0xff]
        %v798 = vld [vmem:[#allocation2 + $0x149] sm:$0xff]
        %v799 = vld [vmem:[#allocation2 + $0x151] sm:$0xff]
        %v800 = vld [vmem:[#allocation2 + $0x169] sm:$0xff]
        %v801 = vld [vmem:[#allocation2 + $0x171] sm:$0xff]
        %v802 = vld [vmem:[#allocation2 + $0x189] sm:$0xff]
        %v803 = vld [vmem:[#allocation2 + $0x191] sm:$0xff]
        %v804 = vld [vmem:[#allocation2 + $0x1a9] sm:$0xff]
        %v805 = vld [vmem:[#allocation2 + $0x1b1] sm:$0xff]
        %v806 = vld [vmem:[#allocation2 + $0x1c9] sm:$0xff]
        %v807 = vld [vmem:[#allocation2 + $0x1d1] sm:$0xff]
        %v808 = vld [vmem:[#allocation2 + $0x1e9] sm:$0xff]
        %v809 = vld [vmem:[#allocation2 + $0x1f1] sm:$0xff]
        %v810 = vlaneseq
        %v811 = vshrl.u32 %v810, 7
        %v812 = vsub.s32 2, %v811
        %v813 = vrot.slane %v608, %v812
        %v814 = vmul.f32 %v778, %v813
        %v815 = vmul.f32 %v779, %v813
        %v816 = vmul.f32 %v780, %v813
        %v817 = vmul.f32 %v781, %v813
        %v818 = vmul.f32 %v782, %v813
        %v819 = vmul.f32 %v783, %v813
        %v820 = vmul.f32 %v784, %v813
        %v821 = vmul.f32 %v785, %v813
        %v822 = vmul.f32 %v786, %v813
        %v823 = vmul.f32 %v787, %v813
        %v824 = vmul.f32 %v788, %v813
        %v825 = vmul.f32 %v789, %v813
        %v826 = vmul.f32 %v790, %v813
        %v827 = vmul.f32 %v791, %v813
        %v828 = vmul.f32 %v792, %v813
        %v829 = vmul.f32 %v793, %v813
        %v830 = vmul.f32 %v794, %v813
        %v831 = vmul.f32 %v795, %v813
        %v832 = vmul.f32 %v796, %v813
        %v833 = vmul.f32 %v797, %v813
        %v834 = vmul.f32 %v798, %v813
        %v835 = vmul.f32 %v799, %v813
        %v836 = vmul.f32 %v800, %v813
        %v837 = vmul.f32 %v801, %v813
        %v838 = vmul.f32 %v802, %v813
        %v839 = vmul.f32 %v803, %v813
        %v840 = vmul.f32 %v804, %v813
        %v841 = vmul.f32 %v805, %v813
        %v842 = vmul.f32 %v806, %v813
        %v843 = vmul.f32 %v807, %v813
        %v844 = vmul.f32 %v808, %v813
        %v845 = vmul.f32 %v809, %v813
        %v846 = vadd.f32 %v746, %v814
        %v847 = vadd.f32 %v747, %v815
        %v848 = vadd.f32 %v748, %v816
        %v849 = vadd.f32 %v749, %v817
        %v850 = vadd.f32 %v750, %v818
        %v851 = vadd.f32 %v751, %v819
        %v852 = vadd.f32 %v752, %v820
        %v853 = vadd.f32 %v753, %v821
        %v854 = vadd.f32 %v754, %v822
        %v855 = vadd.f32 %v755, %v823
        %v856 = vadd.f32 %v756, %v824
        %v857 = vadd.f32 %v757, %v825
        %v858 = vadd.f32 %v758, %v826
        %v859 = vadd.f32 %v759, %v827
        %v860 = vadd.f32 %v760, %v828
        %v861 = vadd.f32 %v761, %v829
        %v862 = vadd.f32 %v762, %v830
        %v863 = vadd.f32 %v763, %v831
        %v864 = vadd.f32 %v764, %v832
        %v865 = vadd.f32 %v765, %v833
        %v866 = vadd.f32 %v766, %v834
        %v867 = vadd.f32 %v767, %v835
        %v868 = vadd.f32 %v768, %v836
        %v869 = vadd.f32 %v769, %v837
        %v870 = vadd.f32 %v770, %v838
        %v871 = vadd.f32 %v771, %v839
        %v872 = vadd.f32 %v772, %v840
        %v873 = vadd.f32 %v773, %v841
        %v874 = vadd.f32 %v774, %v842
        %v875 = vadd.f32 %v775, %v843
        %v876 = vadd.f32 %v776, %v844
        %v877 = vadd.f32 %v777, %v845
        %v878 = vld [vmem:[%s575 + $0x7] sm:$0xff]
        %v879 = vld [vmem:[%s575 + $0xf] sm:$0xff]
        %v880 = vld [vmem:[%s575 + $0x27] sm:$0xff]
        %v881 = vld [vmem:[%s575 + $0x2f] sm:$0xff]
        %v882 = vld [vmem:[%s575 + $0x47] sm:$0xff]
        %v883 = vld [vmem:[%s575 + $0x4f] sm:$0xff]
        %v884 = vld [vmem:[%s575 + $0x67] sm:$0xff]
        %v885 = vld [vmem:[%s575 + $0x6f] sm:$0xff]
        %v886 = vld [vmem:[%s575 + $0x87] sm:$0xff]
        %v887 = vld [vmem:[%s575 + $0x8f] sm:$0xff]
        %v888 = vld [vmem:[%s575 + $0xa7] sm:$0xff]
        %v889 = vld [vmem:[%s575 + $0xaf] sm:$0xff]
        %v890 = vld [vmem:[%s575 + $0xc7] sm:$0xff]
        %v891 = vld [vmem:[%s575 + $0xcf] sm:$0xff]
        %v892 = vld [vmem:[%s575 + $0xe7] sm:$0xff]
        %v893 = vld [vmem:[%s575 + $0xef] sm:$0xff]
        %v894 = vld [vmem:[%s575 + $0x107] sm:$0xff]
        %v895 = vld [vmem:[%s575 + $0x10f] sm:$0xff]
        %v896 = vld [vmem:[%s575 + $0x127] sm:$0xff]
        %v897 = vld [vmem:[%s575 + $0x12f] sm:$0xff]
        %v898 = vld [vmem:[%s575 + $0x147] sm:$0xff]
        %v899 = vld [vmem:[%s575 + $0x14f] sm:$0xff]
        %v900 = vld [vmem:[%s575 + $0x167] sm:$0xff]
        %v901 = vld [vmem:[%s575 + $0x16f] sm:$0xff]
        %v902 = vld [vmem:[%s575 + $0x187] sm:$0xff]
        %v903 = vld [vmem:[%s575 + $0x18f] sm:$0xff]
        %v904 = vld [vmem:[%s575 + $0x1a7] sm:$0xff]
        %v905 = vld [vmem:[%s575 + $0x1af] sm:$0xff]
        %v906 = vld [vmem:[%s575 + $0x1c7] sm:$0xff]
        %v907 = vld [vmem:[%s575 + $0x1cf] sm:$0xff]
        %v908 = vld [vmem:[%s575 + $0x1e7] sm:$0xff]
        %v909 = vld [vmem:[%s575 + $0x1ef] sm:$0xff]
        %v910 = vlaneseq
        %v911 = vshrl.u32 %v910, 7
        %v912 = vsub.s32 3, %v911
        %v913 = vrot.slane %v608, %v912
        %v914 = vmul.f32 %v878, %v913
        %v915 = vmul.f32 %v879, %v913
        %v916 = vmul.f32 %v880, %v913
        %v917 = vmul.f32 %v881, %v913
        %v918 = vmul.f32 %v882, %v913
        %v919 = vmul.f32 %v883, %v913
        %v920 = vmul.f32 %v884, %v913
        %v921 = vmul.f32 %v885, %v913
        %v922 = vmul.f32 %v886, %v913
        %v923 = vmul.f32 %v887, %v913
        %v924 = vmul.f32 %v888, %v913
        %v925 = vmul.f32 %v889, %v913
        %v926 = vmul.f32 %v890, %v913
        %v927 = vmul.f32 %v891, %v913
        %v928 = vmul.f32 %v892, %v913
        %v929 = vmul.f32 %v893, %v913
        %v930 = vmul.f32 %v894, %v913
        %v931 = vmul.f32 %v895, %v913
        %v932 = vmul.f32 %v896, %v913
        %v933 = vmul.f32 %v897, %v913
        %v934 = vmul.f32 %v898, %v913
        %v935 = vmul.f32 %v899, %v913
        %v936 = vmul.f32 %v900, %v913
        %v937 = vmul.f32 %v901, %v913
        %v938 = vmul.f32 %v902, %v913
        %v939 = vmul.f32 %v903, %v913
        %v940 = vmul.f32 %v904, %v913
        %v941 = vmul.f32 %v905, %v913
        %v942 = vmul.f32 %v906, %v913
        %v943 = vmul.f32 %v907, %v913
        %v944 = vmul.f32 %v908, %v913
        %v945 = vmul.f32 %v909, %v913
        %v946 = vadd.f32 %v846, %v914
        %v947 = vadd.f32 %v847, %v915
        %v948 = vadd.f32 %v848, %v916
        %v949 = vadd.f32 %v849, %v917
        %v950 = vadd.f32 %v850, %v918
        %v951 = vadd.f32 %v851, %v919
        %v952 = vadd.f32 %v852, %v920
        %v953 = vadd.f32 %v853, %v921
        %v954 = vadd.f32 %v854, %v922
        %v955 = vadd.f32 %v855, %v923
        %v956 = vadd.f32 %v856, %v924
        %v957 = vadd.f32 %v857, %v925
        %v958 = vadd.f32 %v858, %v926
        %v959 = vadd.f32 %v859, %v927
        %v960 = vadd.f32 %v860, %v928
        %v961 = vadd.f32 %v861, %v929
        %v962 = vadd.f32 %v862, %v930
        %v963 = vadd.f32 %v863, %v931
        %v964 = vadd.f32 %v864, %v932
        %v965 = vadd.f32 %v865, %v933
        %v966 = vadd.f32 %v866, %v934
        %v967 = vadd.f32 %v867, %v935
        %v968 = vadd.f32 %v868, %v936
        %v969 = vadd.f32 %v869, %v937
        %v970 = vadd.f32 %v870, %v938
        %v971 = vadd.f32 %v871, %v939
        %v972 = vadd.f32 %v872, %v940
        %v973 = vadd.f32 %v873, %v941
        %v974 = vadd.f32 %v874, %v942
        %v975 = vadd.f32 %v875, %v943
        %v976 = vadd.f32 %v876, %v944
        %v977 = vadd.f32 %v877, %v945
        %v978 = vld [vmem:[%s575 + $0x8] sm:$0xff]
        %v979 = vld [vmem:[%s575 + $0x10] sm:$0xff]
        %v980 = vld [vmem:[%s575 + $0x28] sm:$0xff]
        %v981 = vld [vmem:[%s575 + $0x30] sm:$0xff]
        %v982 = vld [vmem:[%s575 + $0x48] sm:$0xff]
        %v983 = vld [vmem:[%s575 + $0x50] sm:$0xff]
        %v984 = vld [vmem:[%s575 + $0x68] sm:$0xff]
        %v985 = vld [vmem:[%s575 + $0x70] sm:$0xff]
        %v986 = vld [vmem:[%s575 + $0x88] sm:$0xff]
        %v987 = vld [vmem:[%s575 + $0x90] sm:$0xff]
        %v988 = vld [vmem:[%s575 + $0xa8] sm:$0xff]
        %v989 = vld [vmem:[%s575 + $0xb0] sm:$0xff]
        %v990 = vld [vmem:[%s575 + $0xc8] sm:$0xff]
        %v991 = vld [vmem:[%s575 + $0xd0] sm:$0xff]
        %v992 = vld [vmem:[%s575 + $0xe8] sm:$0xff]
        %v993 = vld [vmem:[%s575 + $0xf0] sm:$0xff]
        %v994 = vld [vmem:[%s575 + $0x108] sm:$0xff]
        %v995 = vld [vmem:[%s575 + $0x110] sm:$0xff]
        %v996 = vld [vmem:[%s575 + $0x128] sm:$0xff]
        %v997 = vld [vmem:[%s575 + $0x130] sm:$0xff]
        %v998 = vld [vmem:[%s575 + $0x148] sm:$0xff]
        %v999 = vld [vmem:[%s575 + $0x150] sm:$0xff]
        %v1000 = vld [vmem:[%s575 + $0x168] sm:$0xff]
        %v1001 = vld [vmem:[%s575 + $0x170] sm:$0xff]
        %v1002 = vld [vmem:[%s575 + $0x188] sm:$0xff]
        %v1003 = vld [vmem:[%s575 + $0x190] sm:$0xff]
        %v1004 = vld [vmem:[%s575 + $0x1a8] sm:$0xff]
        %v1005 = vld [vmem:[%s575 + $0x1b0] sm:$0xff]
        %v1006 = vld [vmem:[%s575 + $0x1c8] sm:$0xff]
        %v1007 = vld [vmem:[%s575 + $0x1d0] sm:$0xff]
        %v1008 = vld [vmem:[%s575 + $0x1e8] sm:$0xff]
        %v1009 = vld [vmem:[%s575 + $0x1f0] sm:$0xff]
        %v1010 = vlaneseq
        %v1011 = vshrl.u32 %v1010, 7
        %v1012 = vsub.s32 4, %v1011
        %v1013 = vrot.slane %v608, %v1012
        %v1014 = vmul.f32 %v978, %v1013
        %v1015 = vmul.f32 %v979, %v1013
        %v1016 = vmul.f32 %v980, %v1013
        %v1017 = vmul.f32 %v981, %v1013
        %v1018 = vmul.f32 %v982, %v1013
        %v1019 = vmul.f32 %v983, %v1013
        %v1020 = vmul.f32 %v984, %v1013
        %v1021 = vmul.f32 %v985, %v1013
        %v1022 = vmul.f32 %v986, %v1013
        %v1023 = vmul.f32 %v987, %v1013
        %v1024 = vmul.f32 %v988, %v1013
        %v1025 = vmul.f32 %v989, %v1013
        %v1026 = vmul.f32 %v990, %v1013
        %v1027 = vmul.f32 %v991, %v1013
        %v1028 = vmul.f32 %v992, %v1013
        %v1029 = vmul.f32 %v993, %v1013
        %v1030 = vmul.f32 %v994, %v1013
        %v1031 = vmul.f32 %v995, %v1013
        %v1032 = vmul.f32 %v996, %v1013
        %v1033 = vmul.f32 %v997, %v1013
        %v1034 = vmul.f32 %v998, %v1013
        %v1035 = vmul.f32 %v999, %v1013
        %v1036 = vmul.f32 %v1000, %v1013
        %v1037 = vmul.f32 %v1001, %v1013
        %v1038 = vmul.f32 %v1002, %v1013
        %v1039 = vmul.f32 %v1003, %v1013
        %v1040 = vmul.f32 %v1004, %v1013
        %v1041 = vmul.f32 %v1005, %v1013
        %v1042 = vmul.f32 %v1006, %v1013
        %v1043 = vmul.f32 %v1007, %v1013
        %v1044 = vmul.f32 %v1008, %v1013
        %v1045 = vmul.f32 %v1009, %v1013
        %v1046 = vadd.f32 %v946, %v1014
        %v1047 = vadd.f32 %v947, %v1015
        %v1048 = vadd.f32 %v948, %v1016
        %v1049 = vadd.f32 %v949, %v1017
        %v1050 = vadd.f32 %v950, %v1018
        %v1051 = vadd.f32 %v951, %v1019
        %v1052 = vadd.f32 %v952, %v1020
        %v1053 = vadd.f32 %v953, %v1021
        %v1054 = vadd.f32 %v954, %v1022
        %v1055 = vadd.f32 %v955, %v1023
        %v1056 = vadd.f32 %v956, %v1024
        %v1057 = vadd.f32 %v957, %v1025
        %v1058 = vadd.f32 %v958, %v1026
        %v1059 = vadd.f32 %v959, %v1027
        %v1060 = vadd.f32 %v960, %v1028
        %v1061 = vadd.f32 %v961, %v1029
        %v1062 = vadd.f32 %v962, %v1030
        %v1063 = vadd.f32 %v963, %v1031
        %v1064 = vadd.f32 %v964, %v1032
        %v1065 = vadd.f32 %v965, %v1033
        %v1066 = vadd.f32 %v966, %v1034
        %v1067 = vadd.f32 %v967, %v1035
        %v1068 = vadd.f32 %v968, %v1036
        %v1069 = vadd.f32 %v969, %v1037
        %v1070 = vadd.f32 %v970, %v1038
        %v1071 = vadd.f32 %v971, %v1039
        %v1072 = vadd.f32 %v972, %v1040
        %v1073 = vadd.f32 %v973, %v1041
        %v1074 = vadd.f32 %v974, %v1042
        %v1075 = vadd.f32 %v975, %v1043
        %v1076 = vadd.f32 %v976, %v1044
        %v1077 = vadd.f32 %v977, %v1045
        %v1078 = vld [vmem:[%s575 + $0x9] sm:$0xff]
        %v1079 = vld [vmem:[%s575 + $0x11] sm:$0xff]
        %v1080 = vld [vmem:[%s575 + $0x29] sm:$0xff]
        %v1081 = vld [vmem:[%s575 + $0x31] sm:$0xff]
        %v1082 = vld [vmem:[%s575 + $0x49] sm:$0xff]
        %v1083 = vld [vmem:[%s575 + $0x51] sm:$0xff]
        %v1084 = vld [vmem:[%s575 + $0x69] sm:$0xff]
        %v1085 = vld [vmem:[%s575 + $0x71] sm:$0xff]
        %v1086 = vld [vmem:[%s575 + $0x89] sm:$0xff]
        %v1087 = vld [vmem:[%s575 + $0x91] sm:$0xff]
        %v1088 = vld [vmem:[%s575 + $0xa9] sm:$0xff]
        %v1089 = vld [vmem:[%s575 + $0xb1] sm:$0xff]
        %v1090 = vld [vmem:[%s575 + $0xc9] sm:$0xff]
        %v1091 = vld [vmem:[%s575 + $0xd1] sm:$0xff]
        %v1092 = vld [vmem:[%s575 + $0xe9] sm:$0xff]
        %v1093 = vld [vmem:[%s575 + $0xf1] sm:$0xff]
        %v1094 = vld [vmem:[%s575 + $0x109] sm:$0xff]
        %v1095 = vld [vmem:[%s575 + $0x111] sm:$0xff]
        %v1096 = vld [vmem:[%s575 + $0x129] sm:$0xff]
        %v1097 = vld [vmem:[%s575 + $0x131] sm:$0xff]
        %v1098 = vld [vmem:[%s575 + $0x149] sm:$0xff]
        %v1099 = vld [vmem:[%s575 + $0x151] sm:$0xff]
        %v1100 = vld [vmem:[%s575 + $0x169] sm:$0xff]
        %v1101 = vld [vmem:[%s575 + $0x171] sm:$0xff]
        %v1102 = vld [vmem:[%s575 + $0x189] sm:$0xff]
        %v1103 = vld [vmem:[%s575 + $0x191] sm:$0xff]
        %v1104 = vld [vmem:[%s575 + $0x1a9] sm:$0xff]
        %v1105 = vld [vmem:[%s575 + $0x1b1] sm:$0xff]
        %v1106 = vld [vmem:[%s575 + $0x1c9] sm:$0xff]
        %v1107 = vld [vmem:[%s575 + $0x1d1] sm:$0xff]
        %v1108 = vld [vmem:[%s575 + $0x1e9] sm:$0xff]
        %v1109 = vld [vmem:[%s575 + $0x1f1] sm:$0xff]
        %v1110 = vlaneseq
        %v1111 = vshrl.u32 %v1110, 7
        %v1112 = vsub.s32 5, %v1111
        %v1113 = vrot.slane %v608, %v1112
        %v1114 = vmul.f32 %v1078, %v1113
        %v1115 = vmul.f32 %v1079, %v1113
        %v1116 = vmul.f32 %v1080, %v1113
        %v1117 = vmul.f32 %v1081, %v1113
        %v1118 = vmul.f32 %v1082, %v1113
        %v1119 = vmul.f32 %v1083, %v1113
        %v1120 = vmul.f32 %v1084, %v1113
        %v1121 = vmul.f32 %v1085, %v1113
        %v1122 = vmul.f32 %v1086, %v1113
        %v1123 = vmul.f32 %v1087, %v1113
        %v1124 = vmul.f32 %v1088, %v1113
        %v1125 = vmul.f32 %v1089, %v1113
        %v1126 = vmul.f32 %v1090, %v1113
        %v1127 = vmul.f32 %v1091, %v1113
        %v1128 = vmul.f32 %v1092, %v1113
        %v1129 = vmul.f32 %v1093, %v1113
        %v1130 = vmul.f32 %v1094, %v1113
        %v1131 = vmul.f32 %v1095, %v1113
        %v1132 = vmul.f32 %v1096, %v1113
        %v1133 = vmul.f32 %v1097, %v1113
        %v1134 = vmul.f32 %v1098, %v1113
        %v1135 = vmul.f32 %v1099, %v1113
        %v1136 = vmul.f32 %v1100, %v1113
        %v1137 = vmul.f32 %v1101, %v1113
        %v1138 = vmul.f32 %v1102, %v1113
        %v1139 = vmul.f32 %v1103, %v1113
        %v1140 = vmul.f32 %v1104, %v1113
        %v1141 = vmul.f32 %v1105, %v1113
        %v1142 = vmul.f32 %v1106, %v1113
        %v1143 = vmul.f32 %v1107, %v1113
        %v1144 = vmul.f32 %v1108, %v1113
        %v1145 = vmul.f32 %v1109, %v1113
        %v1146 = vadd.f32 %v1046, %v1114
        %v1147 = vadd.f32 %v1047, %v1115
        %v1148 = vadd.f32 %v1048, %v1116
        %v1149 = vadd.f32 %v1049, %v1117
        %v1150 = vadd.f32 %v1050, %v1118
        %v1151 = vadd.f32 %v1051, %v1119
        %v1152 = vadd.f32 %v1052, %v1120
        %v1153 = vadd.f32 %v1053, %v1121
        %v1154 = vadd.f32 %v1054, %v1122
        %v1155 = vadd.f32 %v1055, %v1123
        %v1156 = vadd.f32 %v1056, %v1124
        %v1157 = vadd.f32 %v1057, %v1125
        %v1158 = vadd.f32 %v1058, %v1126
        %v1159 = vadd.f32 %v1059, %v1127
        %v1160 = vadd.f32 %v1060, %v1128
        %v1161 = vadd.f32 %v1061, %v1129
        %v1162 = vadd.f32 %v1062, %v1130
        %v1163 = vadd.f32 %v1063, %v1131
        %v1164 = vadd.f32 %v1064, %v1132
        %v1165 = vadd.f32 %v1065, %v1133
        %v1166 = vadd.f32 %v1066, %v1134
        %v1167 = vadd.f32 %v1067, %v1135
        %v1168 = vadd.f32 %v1068, %v1136
        %v1169 = vadd.f32 %v1069, %v1137
        %v1170 = vadd.f32 %v1070, %v1138
        %v1171 = vadd.f32 %v1071, %v1139
        %v1172 = vadd.f32 %v1072, %v1140
        %v1173 = vadd.f32 %v1073, %v1141
        %v1174 = vadd.f32 %v1074, %v1142
        %v1175 = vadd.f32 %v1075, %v1143
        %v1176 = vadd.f32 %v1076, %v1144
        %v1177 = vadd.f32 %v1077, %v1145
        %s1178 = scalar_lea.vmem [#allocation2], 64
        %v1179 = vld [vmem:[%s1178 + $0x7] sm:$0xff]
        %v1180 = vld [vmem:[%s1178 + $0xf] sm:$0xff]
        %v1181 = vld [vmem:[%s1178 + $0x27] sm:$0xff]
        %v1182 = vld [vmem:[%s1178 + $0x2f] sm:$0xff]
        %v1183 = vld [vmem:[%s1178 + $0x47] sm:$0xff]
        %v1184 = vld [vmem:[%s1178 + $0x4f] sm:$0xff]
        %v1185 = vld [vmem:[%s1178 + $0x67] sm:$0xff]
        %v1186 = vld [vmem:[%s1178 + $0x6f] sm:$0xff]
        %v1187 = vld [vmem:[%s1178 + $0x87] sm:$0xff]
        %v1188 = vld [vmem:[%s1178 + $0x8f] sm:$0xff]
        %v1189 = vld [vmem:[%s1178 + $0xa7] sm:$0xff]
        %v1190 = vld [vmem:[%s1178 + $0xaf] sm:$0xff]
        %v1191 = vld [vmem:[%s1178 + $0xc7] sm:$0xff]
        %v1192 = vld [vmem:[%s1178 + $0xcf] sm:$0xff]
        %v1193 = vld [vmem:[%s1178 + $0xe7] sm:$0xff]
        %v1194 = vld [vmem:[%s1178 + $0xef] sm:$0xff]
        %v1195 = vld [vmem:[%s1178 + $0x107] sm:$0xff]
        %v1196 = vld [vmem:[%s1178 + $0x10f] sm:$0xff]
        %v1197 = vld [vmem:[%s1178 + $0x127] sm:$0xff]
        %v1198 = vld [vmem:[%s1178 + $0x12f] sm:$0xff]
        %v1199 = vld [vmem:[%s1178 + $0x147] sm:$0xff]
        %v1200 = vld [vmem:[%s1178 + $0x14f] sm:$0xff]
        %v1201 = vld [vmem:[%s1178 + $0x167] sm:$0xff]
        %v1202 = vld [vmem:[%s1178 + $0x16f] sm:$0xff]
        %v1203 = vld [vmem:[%s1178 + $0x187] sm:$0xff]
        %v1204 = vld [vmem:[%s1178 + $0x18f] sm:$0xff]
        %v1205 = vld [vmem:[%s1178 + $0x1a7] sm:$0xff]
        %v1206 = vld [vmem:[%s1178 + $0x1af] sm:$0xff]
        %v1207 = vld [vmem:[%s1178 + $0x1c7] sm:$0xff]
        %v1208 = vld [vmem:[%s1178 + $0x1cf] sm:$0xff]
        %v1209 = vld [vmem:[%s1178 + $0x1e7] sm:$0xff]
        %v1210 = vld [vmem:[%s1178 + $0x1ef] sm:$0xff]
        %v1211 = vlaneseq
        %v1212 = vshrl.u32 %v1211, 7
        %v1213 = vsub.s32 6, %v1212
        %v1214 = vrot.slane %v608, %v1213
        %v1215 = vmul.f32 %v1179, %v1214
        %v1216 = vmul.f32 %v1180, %v1214
        %v1217 = vmul.f32 %v1181, %v1214
        %v1218 = vmul.f32 %v1182, %v1214
        %v1219 = vmul.f32 %v1183, %v1214
        %v1220 = vmul.f32 %v1184, %v1214
        %v1221 = vmul.f32 %v1185, %v1214
        %v1222 = vmul.f32 %v1186, %v1214
        %v1223 = vmul.f32 %v1187, %v1214
        %v1224 = vmul.f32 %v1188, %v1214
        %v1225 = vmul.f32 %v1189, %v1214
        %v1226 = vmul.f32 %v1190, %v1214
        %v1227 = vmul.f32 %v1191, %v1214
        %v1228 = vmul.f32 %v1192, %v1214
        %v1229 = vmul.f32 %v1193, %v1214
        %v1230 = vmul.f32 %v1194, %v1214
        %v1231 = vmul.f32 %v1195, %v1214
        %v1232 = vmul.f32 %v1196, %v1214
        %v1233 = vmul.f32 %v1197, %v1214
        %v1234 = vmul.f32 %v1198, %v1214
        %v1235 = vmul.f32 %v1199, %v1214
        %v1236 = vmul.f32 %v1200, %v1214
        %v1237 = vmul.f32 %v1201, %v1214
        %v1238 = vmul.f32 %v1202, %v1214
        %v1239 = vmul.f32 %v1203, %v1214
        %v1240 = vmul.f32 %v1204, %v1214
        %v1241 = vmul.f32 %v1205, %v1214
        %v1242 = vmul.f32 %v1206, %v1214
        %v1243 = vmul.f32 %v1207, %v1214
        %v1244 = vmul.f32 %v1208, %v1214
        %v1245 = vmul.f32 %v1209, %v1214
        %v1246 = vmul.f32 %v1210, %v1214
        %v1247 = vadd.f32 %v1146, %v1215
        %v1248 = vadd.f32 %v1147, %v1216
        %v1249 = vadd.f32 %v1148, %v1217
        %v1250 = vadd.f32 %v1149, %v1218
        %v1251 = vadd.f32 %v1150, %v1219
        %v1252 = vadd.f32 %v1151, %v1220
        %v1253 = vadd.f32 %v1152, %v1221
        %v1254 = vadd.f32 %v1153, %v1222
        %v1255 = vadd.f32 %v1154, %v1223
        %v1256 = vadd.f32 %v1155, %v1224
        %v1257 = vadd.f32 %v1156, %v1225
        %v1258 = vadd.f32 %v1157, %v1226
        %v1259 = vadd.f32 %v1158, %v1227
        %v1260 = vadd.f32 %v1159, %v1228
        %v1261 = vadd.f32 %v1160, %v1229
        %v1262 = vadd.f32 %v1161, %v1230
        %v1263 = vadd.f32 %v1162, %v1231
        %v1264 = vadd.f32 %v1163, %v1232
        %v1265 = vadd.f32 %v1164, %v1233
        %v1266 = vadd.f32 %v1165, %v1234
        %v1267 = vadd.f32 %v1166, %v1235
        %v1268 = vadd.f32 %v1167, %v1236
        %v1269 = vadd.f32 %v1168, %v1237
        %v1270 = vadd.f32 %v1169, %v1238
        %v1271 = vadd.f32 %v1170, %v1239
        %v1272 = vadd.f32 %v1171, %v1240
        %v1273 = vadd.f32 %v1172, %v1241
        %v1274 = vadd.f32 %v1173, %v1242
        %v1275 = vadd.f32 %v1174, %v1243
        %v1276 = vadd.f32 %v1175, %v1244
        %v1277 = vadd.f32 %v1176, %v1245
        %v1278 = vadd.f32 %v1177, %v1246
        %v1279 = vld [vmem:[%s1178 + $0x8] sm:$0xff]
        %v1280 = vld [vmem:[%s1178 + $0x10] sm:$0xff]
        %v1281 = vld [vmem:[%s1178 + $0x28] sm:$0xff]
        %v1282 = vld [vmem:[%s1178 + $0x30] sm:$0xff]
        %v1283 = vld [vmem:[%s1178 + $0x48] sm:$0xff]
        %v1284 = vld [vmem:[%s1178 + $0x50] sm:$0xff]
        %v1285 = vld [vmem:[%s1178 + $0x68] sm:$0xff]
        %v1286 = vld [vmem:[%s1178 + $0x70] sm:$0xff]
        %v1287 = vld [vmem:[%s1178 + $0x88] sm:$0xff]
        %v1288 = vld [vmem:[%s1178 + $0x90] sm:$0xff]
        %v1289 = vld [vmem:[%s1178 + $0xa8] sm:$0xff]
        %v1290 = vld [vmem:[%s1178 + $0xb0] sm:$0xff]
        %v1291 = vld [vmem:[%s1178 + $0xc8] sm:$0xff]
        %v1292 = vld [vmem:[%s1178 + $0xd0] sm:$0xff]
        %v1293 = vld [vmem:[%s1178 + $0xe8] sm:$0xff]
        %v1294 = vld [vmem:[%s1178 + $0xf0] sm:$0xff]
        %v1295 = vld [vmem:[%s1178 + $0x108] sm:$0xff]
        %v1296 = vld [vmem:[%s1178 + $0x110] sm:$0xff]
        %v1297 = vld [vmem:[%s1178 + $0x128] sm:$0xff]
        %v1298 = vld [vmem:[%s1178 + $0x130] sm:$0xff]
        %v1299 = vld [vmem:[%s1178 + $0x148] sm:$0xff]
        %v1300 = vld [vmem:[%s1178 + $0x150] sm:$0xff]
        %v1301 = vld [vmem:[%s1178 + $0x168] sm:$0xff]
        %v1302 = vld [vmem:[%s1178 + $0x170] sm:$0xff]
        %v1303 = vld [vmem:[%s1178 + $0x188] sm:$0xff]
        %v1304 = vld [vmem:[%s1178 + $0x190] sm:$0xff]
        %v1305 = vld [vmem:[%s1178 + $0x1a8] sm:$0xff]
        %v1306 = vld [vmem:[%s1178 + $0x1b0] sm:$0xff]
        %v1307 = vld [vmem:[%s1178 + $0x1c8] sm:$0xff]
        %v1308 = vld [vmem:[%s1178 + $0x1d0] sm:$0xff]
        %v1309 = vld [vmem:[%s1178 + $0x1e8] sm:$0xff]
        %v1310 = vld [vmem:[%s1178 + $0x1f0] sm:$0xff]
        %v1311 = vlaneseq
        %v1312 = vshrl.u32 %v1311, 7
        %v1313 = vsub.s32 7, %v1312
        %v1314 = vrot.slane %v608, %v1313
        %v1315 = vmul.f32 %v1279, %v1314
        %v1316 = vmul.f32 %v1280, %v1314
        %v1317 = vmul.f32 %v1281, %v1314
        %v1318 = vmul.f32 %v1282, %v1314
        %v1319 = vmul.f32 %v1283, %v1314
        %v1320 = vmul.f32 %v1284, %v1314
        %v1321 = vmul.f32 %v1285, %v1314
        %v1322 = vmul.f32 %v1286, %v1314
        %v1323 = vmul.f32 %v1287, %v1314
        %v1324 = vmul.f32 %v1288, %v1314
        %v1325 = vmul.f32 %v1289, %v1314
        %v1326 = vmul.f32 %v1290, %v1314
        %v1327 = vmul.f32 %v1291, %v1314
        %v1328 = vmul.f32 %v1292, %v1314
        %v1329 = vmul.f32 %v1293, %v1314
        %v1330 = vmul.f32 %v1294, %v1314
        %v1331 = vmul.f32 %v1295, %v1314
        %v1332 = vmul.f32 %v1296, %v1314
        %v1333 = vmul.f32 %v1297, %v1314
        %v1334 = vmul.f32 %v1298, %v1314
        %v1335 = vmul.f32 %v1299, %v1314
        %v1336 = vmul.f32 %v1300, %v1314
        %v1337 = vmul.f32 %v1301, %v1314
        %v1338 = vmul.f32 %v1302, %v1314
        %v1339 = vmul.f32 %v1303, %v1314
        %v1340 = vmul.f32 %v1304, %v1314
        %v1341 = vmul.f32 %v1305, %v1314
        %v1342 = vmul.f32 %v1306, %v1314
        %v1343 = vmul.f32 %v1307, %v1314
        %v1344 = vmul.f32 %v1308, %v1314
        %v1345 = vmul.f32 %v1309, %v1314
        %v1346 = vmul.f32 %v1310, %v1314
        %v1347 = vadd.f32 %v1247, %v1315
        %v1348 = vadd.f32 %v1248, %v1316
        %v1349 = vadd.f32 %v1249, %v1317
        %v1350 = vadd.f32 %v1250, %v1318
        %v1351 = vadd.f32 %v1251, %v1319
        %v1352 = vadd.f32 %v1252, %v1320
        %v1353 = vadd.f32 %v1253, %v1321
        %v1354 = vadd.f32 %v1254, %v1322
        %v1355 = vadd.f32 %v1255, %v1323
        %v1356 = vadd.f32 %v1256, %v1324
        %v1357 = vadd.f32 %v1257, %v1325
        %v1358 = vadd.f32 %v1258, %v1326
        %v1359 = vadd.f32 %v1259, %v1327
        %v1360 = vadd.f32 %v1260, %v1328
        %v1361 = vadd.f32 %v1261, %v1329
        %v1362 = vadd.f32 %v1262, %v1330
        %v1363 = vadd.f32 %v1263, %v1331
        %v1364 = vadd.f32 %v1264, %v1332
        %v1365 = vadd.f32 %v1265, %v1333
        %v1366 = vadd.f32 %v1266, %v1334
        %v1367 = vadd.f32 %v1267, %v1335
        %v1368 = vadd.f32 %v1268, %v1336
        %v1369 = vadd.f32 %v1269, %v1337
        %v1370 = vadd.f32 %v1270, %v1338
        %v1371 = vadd.f32 %v1271, %v1339
        %v1372 = vadd.f32 %v1272, %v1340
        %v1373 = vadd.f32 %v1273, %v1341
        %v1374 = vadd.f32 %v1274, %v1342
        %v1375 = vadd.f32 %v1275, %v1343
        %v1376 = vadd.f32 %v1276, %v1344
        %v1377 = vadd.f32 %v1277, %v1345
        %v1378 = vadd.f32 %v1278, %v1346
        %v1379 = vld [vmem:[%s1178 + $0x9] sm:$0xff]
        %v1380 = vld [vmem:[%s1178 + $0x11] sm:$0xff]
        %v1381 = vld [vmem:[%s1178 + $0x29] sm:$0xff]
        %v1382 = vld [vmem:[%s1178 + $0x31] sm:$0xff]
        %v1383 = vld [vmem:[%s1178 + $0x49] sm:$0xff]
        %v1384 = vld [vmem:[%s1178 + $0x51] sm:$0xff]
        %v1385 = vld [vmem:[%s1178 + $0x69] sm:$0xff]
        %v1386 = vld [vmem:[%s1178 + $0x71] sm:$0xff]
        %v1387 = vld [vmem:[%s1178 + $0x89] sm:$0xff]
        %v1388 = vld [vmem:[%s1178 + $0x91] sm:$0xff]
        %v1389 = vld [vmem:[%s1178 + $0xa9] sm:$0xff]
        %v1390 = vld [vmem:[%s1178 + $0xb1] sm:$0xff]
        %v1391 = vld [vmem:[%s1178 + $0xc9] sm:$0xff]
        %v1392 = vld [vmem:[%s1178 + $0xd1] sm:$0xff]
        %v1393 = vld [vmem:[%s1178 + $0xe9] sm:$0xff]
        %v1394 = vld [vmem:[%s1178 + $0xf1] sm:$0xff]
        %v1395 = vld [vmem:[%s1178 + $0x109] sm:$0xff]
        %v1396 = vld [vmem:[%s1178 + $0x111] sm:$0xff]
        %v1397 = vld [vmem:[%s1178 + $0x129] sm:$0xff]
        %v1398 = vld [vmem:[%s1178 + $0x131] sm:$0xff]
        %v1399 = vld [vmem:[%s1178 + $0x149] sm:$0xff]
        %v1400 = vld [vmem:[%s1178 + $0x151] sm:$0xff]
        %v1401 = vld [vmem:[%s1178 + $0x169] sm:$0xff]
        %v1402 = vld [vmem:[%s1178 + $0x171] sm:$0xff]
        %v1403 = vld [vmem:[%s1178 + $0x189] sm:$0xff]
        %v1404 = vld [vmem:[%s1178 + $0x191] sm:$0xff]
        %v1405 = vld [vmem:[%s1178 + $0x1a9] sm:$0xff]
        %v1406 = vld [vmem:[%s1178 + $0x1b1] sm:$0xff]
        %v1407 = vld [vmem:[%s1178 + $0x1c9] sm:$0xff]
        %v1408 = vld [vmem:[%s1178 + $0x1d1] sm:$0xff]
        %v1409 = vld [vmem:[%s1178 + $0x1e9] sm:$0xff]
        %v1410 = vld [vmem:[%s1178 + $0x1f1] sm:$0xff]
        %v1411 = vlaneseq
        %v1412 = vshrl.u32 %v1411, 7
        %v1413 = vsub.s32 0, %v1412
        %v1414 = vrot.slane %v609, %v1413
        %v1415 = vmul.f32 %v1379, %v1414
        %v1416 = vmul.f32 %v1380, %v1414
        %v1417 = vmul.f32 %v1381, %v1414
        %v1418 = vmul.f32 %v1382, %v1414
        %v1419 = vmul.f32 %v1383, %v1414
        %v1420 = vmul.f32 %v1384, %v1414
        %v1421 = vmul.f32 %v1385, %v1414
        %v1422 = vmul.f32 %v1386, %v1414
        %v1423 = vmul.f32 %v1387, %v1414
        %v1424 = vmul.f32 %v1388, %v1414
        %v1425 = vmul.f32 %v1389, %v1414
        %v1426 = vmul.f32 %v1390, %v1414
        %v1427 = vmul.f32 %v1391, %v1414
        %v1428 = vmul.f32 %v1392, %v1414
        %v1429 = vmul.f32 %v1393, %v1414
        %v1430 = vmul.f32 %v1394, %v1414
        %v1431 = vmul.f32 %v1395, %v1414
        %v1432 = vmul.f32 %v1396, %v1414
        %v1433 = vmul.f32 %v1397, %v1414
        %v1434 = vmul.f32 %v1398, %v1414
        %v1435 = vmul.f32 %v1399, %v1414
        %v1436 = vmul.f32 %v1400, %v1414
        %v1437 = vmul.f32 %v1401, %v1414
        %v1438 = vmul.f32 %v1402, %v1414
        %v1439 = vmul.f32 %v1403, %v1414
        %v1440 = vmul.f32 %v1404, %v1414
        %v1441 = vmul.f32 %v1405, %v1414
        %v1442 = vmul.f32 %v1406, %v1414
        %v1443 = vmul.f32 %v1407, %v1414
        %v1444 = vmul.f32 %v1408, %v1414
        %v1445 = vmul.f32 %v1409, %v1414
        %v1446 = vmul.f32 %v1410, %v1414
        %v1447 = vadd.f32 %v1347, %v1415
        %v1448 = vadd.f32 %v1348, %v1416
        %v1449 = vadd.f32 %v1349, %v1417
        %v1450 = vadd.f32 %v1350, %v1418
        %v1451 = vadd.f32 %v1351, %v1419
        %v1452 = vadd.f32 %v1352, %v1420
        %v1453 = vadd.f32 %v1353, %v1421
        %v1454 = vadd.f32 %v1354, %v1422
        %v1455 = vadd.f32 %v1355, %v1423
        %v1456 = vadd.f32 %v1356, %v1424
        %v1457 = vadd.f32 %v1357, %v1425
        %v1458 = vadd.f32 %v1358, %v1426
        %v1459 = vadd.f32 %v1359, %v1427
        %v1460 = vadd.f32 %v1360, %v1428
        %v1461 = vadd.f32 %v1361, %v1429
        %v1462 = vadd.f32 %v1362, %v1430
        %v1463 = vadd.f32 %v1363, %v1431
        %v1464 = vadd.f32 %v1364, %v1432
        %v1465 = vadd.f32 %v1365, %v1433
        %v1466 = vadd.f32 %v1366, %v1434
        %v1467 = vadd.f32 %v1367, %v1435
        %v1468 = vadd.f32 %v1368, %v1436
        %v1469 = vadd.f32 %v1369, %v1437
        %v1470 = vadd.f32 %v1370, %v1438
        %v1471 = vadd.f32 %v1371, %v1439
        %v1472 = vadd.f32 %v1372, %v1440
        %v1473 = vadd.f32 %v1373, %v1441
        %v1474 = vadd.f32 %v1374, %v1442
        %v1475 = vadd.f32 %v1375, %v1443
        %v1476 = vadd.f32 %v1376, %v1444
        %v1477 = vadd.f32 %v1377, %v1445
        %v1478 = vadd.f32 %v1378, %v1446
        %v1479 = vpack.c.bf16 %v1448, %v1447
        %v1480 = vpack.c.bf16 %v1450, %v1449
        %v1481 = vpack.c.bf16 %v1452, %v1451
        %v1482 = vpack.c.bf16 %v1454, %v1453
        %v1483 = vpack.c.bf16 %v1456, %v1455
        %v1484 = vpack.c.bf16 %v1458, %v1457
        %v1485 = vpack.c.bf16 %v1460, %v1459
        %v1486 = vpack.c.bf16 %v1462, %v1461
        %v1487 = vpack.c.bf16 %v1464, %v1463
        %v1488 = vpack.c.bf16 %v1466, %v1465
        %v1489 = vpack.c.bf16 %v1468, %v1467
        %v1490 = vpack.c.bf16 %v1470, %v1469
        %v1491 = vpack.c.bf16 %v1472, %v1471
        %v1492 = vpack.c.bf16 %v1474, %v1473
        %v1493 = vpack.c.bf16 %v1476, %v1475
        %v1494 = vpack.c.bf16 %v1478, %v1477
        %v1495 = vld [vmem:[#allocation11] sm:$0xf]
        %v1496 = vld [vmem:[#allocation11 + $0x4] sm:$0xf]
        %v1497 = vld [vmem:[#allocation11 + $0x8] sm:$0xf]
        %v1498 = vld [vmem:[#allocation11 + $0xc] sm:$0xf]
        %v1499 = vld [vmem:[#allocation11 + $0x10] sm:$0xf]
        %v1500 = vld [vmem:[#allocation11 + $0x14] sm:$0xf]
        %v1501 = vld [vmem:[#allocation11 + $0x18] sm:$0xf]
        %v1502 = vld [vmem:[#allocation11 + $0x1c] sm:$0xf]
        %v1503 = vld [vmem:[#allocation11 + $0x20] sm:$0xf]
        %v1504 = vld [vmem:[#allocation11 + $0x24] sm:$0xf]
        %v1505 = vld [vmem:[#allocation11 + $0x28] sm:$0xf]
        %v1506 = vld [vmem:[#allocation11 + $0x2c] sm:$0xf]
        %v1507 = vld [vmem:[#allocation11 + $0x30] sm:$0xf]
        %v1508 = vld [vmem:[#allocation11 + $0x34] sm:$0xf]
        %v1509 = vld [vmem:[#allocation11 + $0x38] sm:$0xf]
        %v1510 = vld [vmem:[#allocation11 + $0x3c] sm:$0xf]
        %v1511 = vld [vmem:[%s5] sm:$0x1]
        %v1513 = vlaneseq
        %v1514 = vshrl.u32 %v1513, 7
        %v1515 = vsub.s32 0, %v1514
        %v1516 = vrot.slane %v1511, %v1515
        %v1534 = vunpack.c.l.b16 %v1495
        %v1535 = vunpack.c.l.b16 %v1496
        %v1536 = vunpack.c.l.b16 %v1497
        %v1537 = vunpack.c.l.b16 %v1498
        %v1538 = vunpack.c.l.b16 %v1499
        %v1539 = vunpack.c.l.b16 %v1500
        %v1540 = vunpack.c.l.b16 %v1501
        %v1541 = vunpack.c.l.b16 %v1502
        %v1542 = vunpack.c.l.b16 %v1503
        %v1543 = vunpack.c.l.b16 %v1504
        %v1544 = vunpack.c.l.b16 %v1505
        %v1545 = vunpack.c.l.b16 %v1506
        %v1546 = vunpack.c.l.b16 %v1507
        %v1547 = vunpack.c.l.b16 %v1508
        %v1548 = vunpack.c.l.b16 %v1509
        %v1549 = vunpack.c.l.b16 %v1510
        %v1550 = vpack.c.b16 %v1535, %v1534
        %v1551 = vpack.c.b16 %v1537, %v1536
        %v1552 = vpack.c.b16 %v1539, %v1538
        %v1553 = vpack.c.b16 %v1541, %v1540
        %v1554 = vpack.c.b16 %v1543, %v1542
        %v1555 = vpack.c.b16 %v1545, %v1544
        %v1556 = vpack.c.b16 %v1547, %v1546
        %v1557 = vpack.c.b16 %v1549, %v1548
        %1566 = vmatprep.subr.bf16.mxu0 0
        %1567 = vmatpush1.bf16.msra.mxu0 %v1550
        %1568 = vmatprep.subr.bf16.mxu0 0
        %1569 = vmatpush1.bf16.msra.mxu0 %v1551
        %1570 = vmatprep.subr.bf16.mxu0 0
        %1571 = vmatpush1.bf16.msra.mxu0 %v1552
        %1572 = vmatprep.subr.bf16.mxu0 0
        %1573 = vmatpush1.bf16.msra.mxu0 %v1553
        %1574 = vmatprep.subr.bf16.mxu0 0
        %1575 = vmatpush1.bf16.msra.mxu0 %v1554
        %1576 = vmatprep.subr.bf16.mxu0 0
        %1577 = vmatpush1.bf16.msra.mxu0 %v1555
        %1578 = vmatprep.subr.bf16.mxu0 0
        %1579 = vmatpush1.bf16.msra.mxu0 %v1556
        %1580 = vmatprep.subr.bf16.mxu0 0
        %1581 = vmatpush1.bf16.msra.mxu0 %v1557
        %1582 = vmatprep.subr.bf16.mxu0 0
        %1583 = vmatpush1.bf16.msra.mxu0 0
        %1584 = vmatprep.subr.bf16.mxu0 0
        %1585 = vmatpush1.bf16.msra.mxu0 0
        %1586 = vmatprep.subr.bf16.mxu0 0
        %1587 = vmatpush1.bf16.msra.mxu0 0
        %1588 = vmatprep.subr.bf16.mxu0 0
        %1589 = vmatpush1.bf16.msra.mxu0 0
        %1590 = vmatprep.subr.bf16.mxu0 0
        %1591 = vmatpush1.bf16.msra.mxu0 0
        %1592 = vmatprep.subr.bf16.mxu0 0
        %1593 = vmatpush1.bf16.msra.mxu0 0
        %1594 = vmatprep.subr.bf16.mxu0 0
        %1595 = vmatpush1.bf16.msra.mxu0 0
        %1596 = vmatprep.subr.bf16.mxu0 0
        %1597 = vmatpush1.bf16.msra.mxu0 0
        %1598 = vmatprep.mubr.bf16.mxu0 0
        %1599 = vmatmul.mubr.bf16.gmra.mrb[0].mxu0 %v1479
        %v1600 = vpop.f32.mrb[0].mxu0
        %v1601 = vadd.f32 %v1516, %v1600
        %v1602 = vpop.f32.mrb[0].mxu0
        %v1603 = vpop.f32.mrb[0].mxu0
        %v1604 = vadd.f32 %v1516, %v1603
        %v1605 = vpop.f32.mrb[0].mxu0
        %1606 = vmatprep.mubr.bf16.mxu0 0
        %1607 = vmatmul.mubr.bf16.gmra.mrb[0].mxu0 %v1480
        %v1608 = vpop.f32.mrb[0].mxu0
        %v1609 = vadd.f32 %v1516, %v1608
        %v1610 = vpop.f32.mrb[0].mxu0
        %v1611 = vpop.f32.mrb[0].mxu0
        %v1612 = vadd.f32 %v1516, %v1611
        %v1613 = vpop.f32.mrb[0].mxu0
        %1614 = vmatprep.mubr.bf16.mxu0 0
        %1615 = vmatmul.mubr.bf16.gmra.mrb[0].mxu0 %v1481
        %v1616 = vpop.f32.mrb[0].mxu0
        %v1617 = vadd.f32 %v1516, %v1616
        %v1618 = vpop.f32.mrb[0].mxu0
        %v1619 = vpop.f32.mrb[0].mxu0
        %v1620 = vadd.f32 %v1516, %v1619
        %v1621 = vpop.f32.mrb[0].mxu0
        %1622 = vmatprep.mubr.bf16.mxu0 0
        %1623 = vmatmul.mubr.bf16.gmra.mrb[0].mxu0 %v1482
        %v1624 = vpop.f32.mrb[0].mxu0
        %v1625 = vadd.f32 %v1516, %v1624
        %v1626 = vpop.f32.mrb[0].mxu0
        %v1627 = vpop.f32.mrb[0].mxu0
        %v1628 = vadd.f32 %v1516, %v1627
        %v1629 = vpop.f32.mrb[0].mxu0
        %1630 = vmatprep.mubr.bf16.mxu0 0
        %1631 = vmatmul.mubr.bf16.gmra.mrb[0].mxu0 %v1483
        %v1632 = vpop.f32.mrb[0].mxu0
        %v1633 = vadd.f32 %v1516, %v1632
        %v1634 = vpop.f32.mrb[0].mxu0
        %v1635 = vpop.f32.mrb[0].mxu0
        %v1636 = vadd.f32 %v1516, %v1635
        %v1637 = vpop.f32.mrb[0].mxu0
        %1638 = vmatprep.mubr.bf16.mxu0 0
        %1639 = vmatmul.mubr.bf16.gmra.mrb[0].mxu0 %v1484
        %v1640 = vpop.f32.mrb[0].mxu0
        %v1641 = vadd.f32 %v1516, %v1640
        %v1642 = vpop.f32.mrb[0].mxu0
        %v1643 = vpop.f32.mrb[0].mxu0
        %v1644 = vadd.f32 %v1516, %v1643
        %v1645 = vpop.f32.mrb[0].mxu0
        %1646 = vmatprep.mubr.bf16.mxu0 0
        %1647 = vmatmul.mubr.bf16.gmra.mrb[0].mxu0 %v1485
        %v1648 = vpop.f32.mrb[0].mxu0
        %v1649 = vadd.f32 %v1516, %v1648
        %v1650 = vpop.f32.mrb[0].mxu0
        %v1651 = vpop.f32.mrb[0].mxu0
        %v1652 = vadd.f32 %v1516, %v1651
        %v1653 = vpop.f32.mrb[0].mxu0
        %1654 = vmatprep.mubr.bf16.mxu0 0
        %1655 = vmatmul.mubr.bf16.gmra.mrb[0].mxu0 %v1486
        %v1656 = vpop.f32.mrb[0].mxu0
        %v1657 = vadd.f32 %v1516, %v1656
        %v1658 = vpop.f32.mrb[0].mxu0
        %v1659 = vpop.f32.mrb[0].mxu0
        %v1660 = vadd.f32 %v1516, %v1659
        %v1661 = vpop.f32.mrb[0].mxu0
        %1662 = vmatprep.mubr.bf16.mxu0 0
        %1663 = vmatmul.mubr.bf16.gmra.mrb[0].mxu0 %v1487
        %v1664 = vpop.f32.mrb[0].mxu0
        %v1665 = vadd.f32 %v1516, %v1664
        %v1666 = vpop.f32.mrb[0].mxu0
        %v1667 = vpop.f32.mrb[0].mxu0
        %v1668 = vadd.f32 %v1516, %v1667
        %v1669 = vpop.f32.mrb[0].mxu0
        %1670 = vmatprep.mubr.bf16.mxu0 0
        %1671 = vmatmul.mubr.bf16.gmra.mrb[0].mxu0 %v1488
        %v1672 = vpop.f32.mrb[0].mxu0
        %v1673 = vadd.f32 %v1516, %v1672
        %v1674 = vpop.f32.mrb[0].mxu0
        %v1675 = vpop.f32.mrb[0].mxu0
        %v1676 = vadd.f32 %v1516, %v1675
        %v1677 = vpop.f32.mrb[0].mxu0
        %1678 = vmatprep.mubr.bf16.mxu0 0
        %1679 = vmatmul.mubr.bf16.gmra.mrb[0].mxu0 %v1489
        %v1680 = vpop.f32.mrb[0].mxu0
        %v1681 = vadd.f32 %v1516, %v1680
        %v1682 = vpop.f32.mrb[0].mxu0
        %v1683 = vpop.f32.mrb[0].mxu0
        %v1684 = vadd.f32 %v1516, %v1683
        %v1685 = vpop.f32.mrb[0].mxu0
        %1686 = vmatprep.mubr.bf16.mxu0 0
        %1687 = vmatmul.mubr.bf16.gmra.mrb[0].mxu0 %v1490
        %v1688 = vpop.f32.mrb[0].mxu0
        %v1689 = vadd.f32 %v1516, %v1688
        %v1690 = vpop.f32.mrb[0].mxu0
        %v1691 = vpop.f32.mrb[0].mxu0
        %v1692 = vadd.f32 %v1516, %v1691
        %v1693 = vpop.f32.mrb[0].mxu0
        %1694 = vmatprep.mubr.bf16.mxu0 0
        %1695 = vmatmul.mubr.bf16.gmra.mrb[0].mxu0 %v1491
        %v1696 = vpop.f32.mrb[0].mxu0
        %v1697 = vadd.f32 %v1516, %v1696
        %v1698 = vpop.f32.mrb[0].mxu0
        %v1699 = vpop.f32.mrb[0].mxu0
        %v1700 = vadd.f32 %v1516, %v1699
        %v1701 = vpop.f32.mrb[0].mxu0
        %1702 = vmatprep.mubr.bf16.mxu0 0
        %1703 = vmatmul.mubr.bf16.gmra.mrb[0].mxu0 %v1492
        %v1704 = vpop.f32.mrb[0].mxu0
        %v1705 = vadd.f32 %v1516, %v1704
        %v1706 = vpop.f32.mrb[0].mxu0
        %v1707 = vpop.f32.mrb[0].mxu0
        %v1708 = vadd.f32 %v1516, %v1707
        %v1709 = vpop.f32.mrb[0].mxu0
        %1710 = vmatprep.mubr.bf16.mxu0 0
        %1711 = vmatmul.mubr.bf16.gmra.mrb[0].mxu0 %v1493
        %v1712 = vpop.f32.mrb[0].mxu0
        %v1713 = vadd.f32 %v1516, %v1712
        %v1714 = vpop.f32.mrb[0].mxu0
        %v1715 = vpop.f32.mrb[0].mxu0
        %v1716 = vadd.f32 %v1516, %v1715
        %v1717 = vpop.f32.mrb[0].mxu0
        %1718 = vmatprep.mubr.bf16.mxu0 0
        %1719 = vmatmul.mubr.bf16.gmra.mrb[0].mxu0 %v1494
        %v1720 = vpop.f32.mrb[0].mxu0
        %v1721 = vadd.f32 %v1516, %v1720
        %v1722 = vpop.f32.mrb[0].mxu0
        %v1723 = vpop.f32.mrb[0].mxu0
        %v1724 = vadd.f32 %v1516, %v1723
        %v1725 = vpop.f32.mrb[0].mxu0
        %1726 = vdwg.mxu0
        %v1727 = vmax.f32 %v1601, 0.0
        %v1728 = vmax.f32 %v1604, 0.0
        %v1729 = vmax.f32 %v1609, 0.0
        %v1730 = vmax.f32 %v1612, 0.0
        %v1731 = vmax.f32 %v1617, 0.0
        %v1732 = vmax.f32 %v1620, 0.0
        %v1733 = vmax.f32 %v1625, 0.0
        %v1734 = vmax.f32 %v1628, 0.0
        %v1735 = vmax.f32 %v1633, 0.0
        %v1736 = vmax.f32 %v1636, 0.0
        %v1737 = vmax.f32 %v1641, 0.0
        %v1738 = vmax.f32 %v1644, 0.0
        %v1739 = vmax.f32 %v1649, 0.0
        %v1740 = vmax.f32 %v1652, 0.0
        %v1741 = vmax.f32 %v1657, 0.0
        %v1742 = vmax.f32 %v1660, 0.0
        %v1743 = vmax.f32 %v1665, 0.0
        %v1744 = vmax.f32 %v1668, 0.0
        %v1745 = vmax.f32 %v1673, 0.0
        %v1746 = vmax.f32 %v1676, 0.0
        %v1747 = vmax.f32 %v1681, 0.0
        %v1748 = vmax.f32 %v1684, 0.0
        %v1749 = vmax.f32 %v1689, 0.0
        %v1750 = vmax.f32 %v1692, 0.0
        %v1751 = vmax.f32 %v1697, 0.0
        %v1752 = vmax.f32 %v1700, 0.0
        %v1753 = vmax.f32 %v1705, 0.0
        %v1754 = vmax.f32 %v1708, 0.0
        %v1755 = vmax.f32 %v1713, 0.0
        %v1756 = vmax.f32 %v1716, 0.0
        %v1757 = vmax.f32 %v1721, 0.0
        %v1758 = vmax.f32 %v1724, 0.0
        %1759 = vst [vmem:[%s575 + $0x8] sm:$0xff] %v1727
        %1760 = vst [vmem:[%s575 + $0x10] sm:$0xff] %v1728
        %1761 = vst [vmem:[%s575 + $0x28] sm:$0xff] %v1729
        %1762 = vst [vmem:[%s575 + $0x30] sm:$0xff] %v1730
        %1763 = vst [vmem:[%s575 + $0x48] sm:$0xff] %v1731
        %1764 = vst [vmem:[%s575 + $0x50] sm:$0xff] %v1732
        %1765 = vst [vmem:[%s575 + $0x68] sm:$0xff] %v1733
        %1766 = vst [vmem:[%s575 + $0x70] sm:$0xff] %v1734
        %1767 = vst [vmem:[%s575 + $0x88] sm:$0xff] %v1735
        %1768 = vst [vmem:[%s575 + $0x90] sm:$0xff] %v1736
        %1769 = vst [vmem:[%s575 + $0xa8] sm:$0xff] %v1737
        %1770 = vst [vmem:[%s575 + $0xb0] sm:$0xff] %v1738
        %1771 = vst [vmem:[%s575 + $0xc8] sm:$0xff] %v1739
        %1772 = vst [vmem:[%s575 + $0xd0] sm:$0xff] %v1740
        %1773 = vst [vmem:[%s575 + $0xe8] sm:$0xff] %v1741
        %1774 = vst [vmem:[%s575 + $0xf0] sm:$0xff] %v1742
        %1775 = vst [vmem:[%s575 + $0x108] sm:$0xff] %v1743
        %1776 = vst [vmem:[%s575 + $0x110] sm:$0xff] %v1744
        %1777 = vst [vmem:[%s575 + $0x128] sm:$0xff] %v1745
        %1778 = vst [vmem:[%s575 + $0x130] sm:$0xff] %v1746
        %1779 = vst [vmem:[%s575 + $0x148] sm:$0xff] %v1747
        %1780 = vst [vmem:[%s575 + $0x150] sm:$0xff] %v1748
        %1781 = vst [vmem:[%s575 + $0x168] sm:$0xff] %v1749
        %1782 = vst [vmem:[%s575 + $0x170] sm:$0xff] %v1750
        %1783 = vst [vmem:[%s575 + $0x188] sm:$0xff] %v1751
        %1784 = vst [vmem:[%s575 + $0x190] sm:$0xff] %v1752
        %1785 = vst [vmem:[%s575 + $0x1a8] sm:$0xff] %v1753
        %1786 = vst [vmem:[%s575 + $0x1b0] sm:$0xff] %v1754
        %1787 = vst [vmem:[%s575 + $0x1c8] sm:$0xff] %v1755
        %1788 = vst [vmem:[%s575 + $0x1d0] sm:$0xff] %v1756
        %1789 = vst [vmem:[%s575 + $0x1e8] sm:$0xff] %v1757
        %1790 = vst [vmem:[%s575 + $0x1f0] sm:$0xff] %v1758
        %v1791 = vld [vmem:[#allocation8] sm:$0xff]
        %v1792 = vld [vmem:[#allocation8 + $0x8] sm:$0x1]
        %v1793 = vld [vmem:[#allocation2 + $0x7] sm:$0xff]
        %v1794 = vld [vmem:[#allocation2 + $0xf] sm:$0xff]
        %v1795 = vld [vmem:[#allocation2 + $0x27] sm:$0xff]
        %v1796 = vld [vmem:[#allocation2 + $0x2f] sm:$0xff]
        %v1797 = vld [vmem:[#allocation2 + $0x47] sm:$0xff]
        %v1798 = vld [vmem:[#allocation2 + $0x4f] sm:$0xff]
        %v1799 = vld [vmem:[#allocation2 + $0x67] sm:$0xff]
        %v1800 = vld [vmem:[#allocation2 + $0x6f] sm:$0xff]
        %v1801 = vld [vmem:[#allocation2 + $0x87] sm:$0xff]
        %v1802 = vld [vmem:[#allocation2 + $0x8f] sm:$0xff]
        %v1803 = vld [vmem:[#allocation2 + $0xa7] sm:$0xff]
        %v1804 = vld [vmem:[#allocation2 + $0xaf] sm:$0xff]
        %v1805 = vld [vmem:[#allocation2 + $0xc7] sm:$0xff]
        %v1806 = vld [vmem:[#allocation2 + $0xcf] sm:$0xff]
        %v1807 = vld [vmem:[#allocation2 + $0xe7] sm:$0xff]
        %v1808 = vld [vmem:[#allocation2 + $0xef] sm:$0xff]
        %v1809 = vld [vmem:[#allocation2 + $0x107] sm:$0xff]
        %v1810 = vld [vmem:[#allocation2 + $0x10f] sm:$0xff]
        %v1811 = vld [vmem:[#allocation2 + $0x127] sm:$0xff]
        %v1812 = vld [vmem:[#allocation2 + $0x12f] sm:$0xff]
        %v1813 = vld [vmem:[#allocation2 + $0x147] sm:$0xff]
        %v1814 = vld [vmem:[#allocation2 + $0x14f] sm:$0xff]
        %v1815 = vld [vmem:[#allocation2 + $0x167] sm:$0xff]
        %v1816 = vld [vmem:[#allocation2 + $0x16f] sm:$0xff]
        %v1817 = vld [vmem:[#allocation2 + $0x187] sm:$0xff]
        %v1818 = vld [vmem:[#allocation2 + $0x18f] sm:$0xff]
        %v1819 = vld [vmem:[#allocation2 + $0x1a7] sm:$0xff]
        %v1820 = vld [vmem:[#allocation2 + $0x1af] sm:$0xff]
        %v1821 = vld [vmem:[#allocation2 + $0x1c7] sm:$0xff]
        %v1822 = vld [vmem:[#allocation2 + $0x1cf] sm:$0xff]
        %v1823 = vld [vmem:[#allocation2 + $0x1e7] sm:$0xff]
        %v1824 = vld [vmem:[#allocation2 + $0x1ef] sm:$0xff]
        %v1825 = vlaneseq
        %v1826 = vshrl.u32 %v1825, 7
        %v1827 = vsub.s32 0, %v1826
        %v1828 = vrot.slane %v1791, %v1827
        %v1829 = vmul.f32 %v1793, %v1828
        %v1830 = vmul.f32 %v1794, %v1828
        %v1831 = vmul.f32 %v1795, %v1828
        %v1832 = vmul.f32 %v1796, %v1828
        %v1833 = vmul.f32 %v1797, %v1828
        %v1834 = vmul.f32 %v1798, %v1828
        %v1835 = vmul.f32 %v1799, %v1828
        %v1836 = vmul.f32 %v1800, %v1828
        %v1837 = vmul.f32 %v1801, %v1828
        %v1838 = vmul.f32 %v1802, %v1828
        %v1839 = vmul.f32 %v1803, %v1828
        %v1840 = vmul.f32 %v1804, %v1828
        %v1841 = vmul.f32 %v1805, %v1828
        %v1842 = vmul.f32 %v1806, %v1828
        %v1843 = vmul.f32 %v1807, %v1828
        %v1844 = vmul.f32 %v1808, %v1828
        %v1845 = vmul.f32 %v1809, %v1828
        %v1846 = vmul.f32 %v1810, %v1828
        %v1847 = vmul.f32 %v1811, %v1828
        %v1848 = vmul.f32 %v1812, %v1828
        %v1849 = vmul.f32 %v1813, %v1828
        %v1850 = vmul.f32 %v1814, %v1828
        %v1851 = vmul.f32 %v1815, %v1828
        %v1852 = vmul.f32 %v1816, %v1828
        %v1853 = vmul.f32 %v1817, %v1828
        %v1854 = vmul.f32 %v1818, %v1828
        %v1855 = vmul.f32 %v1819, %v1828
        %v1856 = vmul.f32 %v1820, %v1828
        %v1857 = vmul.f32 %v1821, %v1828
        %v1858 = vmul.f32 %v1822, %v1828
        %v1859 = vmul.f32 %v1823, %v1828
        %v1860 = vmul.f32 %v1824, %v1828
        %v1861 = vld [vmem:[#allocation2 + $0x8] sm:$0xff]
        %v1862 = vld [vmem:[#allocation2 + $0x10] sm:$0xff]
        %v1863 = vld [vmem:[#allocation2 + $0x28] sm:$0xff]
        %v1864 = vld [vmem:[#allocation2 + $0x30] sm:$0xff]
        %v1865 = vld [vmem:[#allocation2 + $0x48] sm:$0xff]
        %v1866 = vld [vmem:[#allocation2 + $0x50] sm:$0xff]
        %v1867 = vld [vmem:[#allocation2 + $0x68] sm:$0xff]
        %v1868 = vld [vmem:[#allocation2 + $0x70] sm:$0xff]
        %v1869 = vld [vmem:[#allocation2 + $0x88] sm:$0xff]
        %v1870 = vld [vmem:[#allocation2 + $0x90] sm:$0xff]
        %v1871 = vld [vmem:[#allocation2 + $0xa8] sm:$0xff]
        %v1872 = vld [vmem:[#allocation2 + $0xb0] sm:$0xff]
        %v1873 = vld [vmem:[#allocation2 + $0xc8] sm:$0xff]
        %v1874 = vld [vmem:[#allocation2 + $0xd0] sm:$0xff]
        %v1875 = vld [vmem:[#allocation2 + $0xe8] sm:$0xff]
        %v1876 = vld [vmem:[#allocation2 + $0xf0] sm:$0xff]
        %v1877 = vld [vmem:[#allocation2 + $0x108] sm:$0xff]
        %v1878 = vld [vmem:[#allocation2 + $0x110] sm:$0xff]
        %v1879 = vld [vmem:[#allocation2 + $0x128] sm:$0xff]
        %v1880 = vld [vmem:[#allocation2 + $0x130] sm:$0xff]
        %v1881 = vld [vmem:[#allocation2 + $0x148] sm:$0xff]
        %v1882 = vld [vmem:[#allocation2 + $0x150] sm:$0xff]
        %v1883 = vld [vmem:[#allocation2 + $0x168] sm:$0xff]
        %v1884 = vld [vmem:[#allocation2 + $0x170] sm:$0xff]
        %v1885 = vld [vmem:[#allocation2 + $0x188] sm:$0xff]
        %v1886 = vld [vmem:[#allocation2 + $0x190] sm:$0xff]
        %v1887 = vld [vmem:[#allocation2 + $0x1a8] sm:$0xff]
        %v1888 = vld [vmem:[#allocation2 + $0x1b0] sm:$0xff]
        %v1889 = vld [vmem:[#allocation2 + $0x1c8] sm:$0xff]
        %v1890 = vld [vmem:[#allocation2 + $0x1d0] sm:$0xff]
        %v1891 = vld [vmem:[#allocation2 + $0x1e8] sm:$0xff]
        %v1892 = vld [vmem:[#allocation2 + $0x1f0] sm:$0xff]
        %v1893 = vlaneseq
        %v1894 = vshrl.u32 %v1893, 7
        %v1895 = vsub.s32 1, %v1894
        %v1896 = vrot.slane %v1791, %v1895
        %v1897 = vmul.f32 %v1861, %v1896
        %v1898 = vmul.f32 %v1862, %v1896
        %v1899 = vmul.f32 %v1863, %v1896
        %v1900 = vmul.f32 %v1864, %v1896
        %v1901 = vmul.f32 %v1865, %v1896
        %v1902 = vmul.f32 %v1866, %v1896
        %v1903 = vmul.f32 %v1867, %v1896
        %v1904 = vmul.f32 %v1868, %v1896
        %v1905 = vmul.f32 %v1869, %v1896
        %v1906 = vmul.f32 %v1870, %v1896
        %v1907 = vmul.f32 %v1871, %v1896
        %v1908 = vmul.f32 %v1872, %v1896
        %v1909 = vmul.f32 %v1873, %v1896
        %v1910 = vmul.f32 %v1874, %v1896
        %v1911 = vmul.f32 %v1875, %v1896
        %v1912 = vmul.f32 %v1876, %v1896
        %v1913 = vmul.f32 %v1877, %v1896
        %v1914 = vmul.f32 %v1878, %v1896
        %v1915 = vmul.f32 %v1879, %v1896
        %v1916 = vmul.f32 %v1880, %v1896
        %v1917 = vmul.f32 %v1881, %v1896
        %v1918 = vmul.f32 %v1882, %v1896
        %v1919 = vmul.f32 %v1883, %v1896
        %v1920 = vmul.f32 %v1884, %v1896
        %v1921 = vmul.f32 %v1885, %v1896
        %v1922 = vmul.f32 %v1886, %v1896
        %v1923 = vmul.f32 %v1887, %v1896
        %v1924 = vmul.f32 %v1888, %v1896
        %v1925 = vmul.f32 %v1889, %v1896
        %v1926 = vmul.f32 %v1890, %v1896
        %v1927 = vmul.f32 %v1891, %v1896
        %v1928 = vmul.f32 %v1892, %v1896
        %v1929 = vadd.f32 %v1829, %v1897
        %v1930 = vadd.f32 %v1830, %v1898
        %v1931 = vadd.f32 %v1831, %v1899
        %v1932 = vadd.f32 %v1832, %v1900
        %v1933 = vadd.f32 %v1833, %v1901
        %v1934 = vadd.f32 %v1834, %v1902
        %v1935 = vadd.f32 %v1835, %v1903
        %v1936 = vadd.f32 %v1836, %v1904
        %v1937 = vadd.f32 %v1837, %v1905
        %v1938 = vadd.f32 %v1838, %v1906
        %v1939 = vadd.f32 %v1839, %v1907
        %v1940 = vadd.f32 %v1840, %v1908
        %v1941 = vadd.f32 %v1841, %v1909
        %v1942 = vadd.f32 %v1842, %v1910
        %v1943 = vadd.f32 %v1843, %v1911
        %v1944 = vadd.f32 %v1844, %v1912
        %v1945 = vadd.f32 %v1845, %v1913
        %v1946 = vadd.f32 %v1846, %v1914
        %v1947 = vadd.f32 %v1847, %v1915
        %v1948 = vadd.f32 %v1848, %v1916
        %v1949 = vadd.f32 %v1849, %v1917
        %v1950 = vadd.f32 %v1850, %v1918
        %v1951 = vadd.f32 %v1851, %v1919
        %v1952 = vadd.f32 %v1852, %v1920
        %v1953 = vadd.f32 %v1853, %v1921
        %v1954 = vadd.f32 %v1854, %v1922
        %v1955 = vadd.f32 %v1855, %v1923
        %v1956 = vadd.f32 %v1856, %v1924
        %v1957 = vadd.f32 %v1857, %v1925
        %v1958 = vadd.f32 %v1858, %v1926
        %v1959 = vadd.f32 %v1859, %v1927
        %v1960 = vadd.f32 %v1860, %v1928
        %v1961 = vld [vmem:[#allocation2 + $0x9] sm:$0xff]
        %v1962 = vld [vmem:[#allocation2 + $0x11] sm:$0xff]
        %v1963 = vld [vmem:[#allocation2 + $0x29] sm:$0xff]
        %v1964 = vld [vmem:[#allocation2 + $0x31] sm:$0xff]
        %v1965 = vld [vmem:[#allocation2 + $0x49] sm:$0xff]
        %v1966 = vld [vmem:[#allocation2 + $0x51] sm:$0xff]
        %v1967 = vld [vmem:[#allocation2 + $0x69] sm:$0xff]
        %v1968 = vld [vmem:[#allocation2 + $0x71] sm:$0xff]
        %v1969 = vld [vmem:[#allocation2 + $0x89] sm:$0xff]
        %v1970 = vld [vmem:[#allocation2 + $0x91] sm:$0xff]
        %v1971 = vld [vmem:[#allocation2 + $0xa9] sm:$0xff]
        %v1972 = vld [vmem:[#allocation2 + $0xb1] sm:$0xff]
        %v1973 = vld [vmem:[#allocation2 + $0xc9] sm:$0xff]
        %v1974 = vld [vmem:[#allocation2 + $0xd1] sm:$0xff]
        %v1975 = vld [vmem:[#allocation2 + $0xe9] sm:$0xff]
        %v1976 = vld [vmem:[#allocation2 + $0xf1] sm:$0xff]
        %v1977 = vld [vmem:[#allocation2 + $0x109] sm:$0xff]
        %v1978 = vld [vmem:[#allocation2 + $0x111] sm:$0xff]
        %v1979 = vld [vmem:[#allocation2 + $0x129] sm:$0xff]
        %v1980 = vld [vmem:[#allocation2 + $0x131] sm:$0xff]
        %v1981 = vld [vmem:[#allocation2 + $0x149] sm:$0xff]
        %v1982 = vld [vmem:[#allocation2 + $0x151] sm:$0xff]
        %v1983 = vld [vmem:[#allocation2 + $0x169] sm:$0xff]
        %v1984 = vld [vmem:[#allocation2 + $0x171] sm:$0xff]
        %v1985 = vld [vmem:[#allocation2 + $0x189] sm:$0xff]
        %v1986 = vld [vmem:[#allocation2 + $0x191] sm:$0xff]
        %v1987 = vld [vmem:[#allocation2 + $0x1a9] sm:$0xff]
        %v1988 = vld [vmem:[#allocation2 + $0x1b1] sm:$0xff]
        %v1989 = vld [vmem:[#allocation2 + $0x1c9] sm:$0xff]
        %v1990 = vld [vmem:[#allocation2 + $0x1d1] sm:$0xff]
        %v1991 = vld [vmem:[#allocation2 + $0x1e9] sm:$0xff]
        %v1992 = vld [vmem:[#allocation2 + $0x1f1] sm:$0xff]
        %v1993 = vlaneseq
        %v1994 = vshrl.u32 %v1993, 7
        %v1995 = vsub.s32 2, %v1994
        %v1996 = vrot.slane %v1791, %v1995
        %v1997 = vmul.f32 %v1961, %v1996
        %v1998 = vmul.f32 %v1962, %v1996
        %v1999 = vmul.f32 %v1963, %v1996
        %v2000 = vmul.f32 %v1964, %v1996
        %v2001 = vmul.f32 %v1965, %v1996
        %v2002 = vmul.f32 %v1966, %v1996
        %v2003 = vmul.f32 %v1967, %v1996
        %v2004 = vmul.f32 %v1968, %v1996
        %v2005 = vmul.f32 %v1969, %v1996
        %v2006 = vmul.f32 %v1970, %v1996
        %v2007 = vmul.f32 %v1971, %v1996
        %v2008 = vmul.f32 %v1972, %v1996
        %v2009 = vmul.f32 %v1973, %v1996
        %v2010 = vmul.f32 %v1974, %v1996
        %v2011 = vmul.f32 %v1975, %v1996
        %v2012 = vmul.f32 %v1976, %v1996
        %v2013 = vmul.f32 %v1977, %v1996
        %v2014 = vmul.f32 %v1978, %v1996
        %v2015 = vmul.f32 %v1979, %v1996
        %v2016 = vmul.f32 %v1980, %v1996
        %v2017 = vmul.f32 %v1981, %v1996
        %v2018 = vmul.f32 %v1982, %v1996
        %v2019 = vmul.f32 %v1983, %v1996
        %v2020 = vmul.f32 %v1984, %v1996
        %v2021 = vmul.f32 %v1985, %v1996
        %v2022 = vmul.f32 %v1986, %v1996
        %v2023 = vmul.f32 %v1987, %v1996
        %v2024 = vmul.f32 %v1988, %v1996
        %v2025 = vmul.f32 %v1989, %v1996
        %v2026 = vmul.f32 %v1990, %v1996
        %v2027 = vmul.f32 %v1991, %v1996
        %v2028 = vmul.f32 %v1992, %v1996
        %v2029 = vadd.f32 %v1929, %v1997
        %v2030 = vadd.f32 %v1930, %v1998
        %v2031 = vadd.f32 %v1931, %v1999
        %v2032 = vadd.f32 %v1932, %v2000
        %v2033 = vadd.f32 %v1933, %v2001
        %v2034 = vadd.f32 %v1934, %v2002
        %v2035 = vadd.f32 %v1935, %v2003
        %v2036 = vadd.f32 %v1936, %v2004
        %v2037 = vadd.f32 %v1937, %v2005
        %v2038 = vadd.f32 %v1938, %v2006
        %v2039 = vadd.f32 %v1939, %v2007
        %v2040 = vadd.f32 %v1940, %v2008
        %v2041 = vadd.f32 %v1941, %v2009
        %v2042 = vadd.f32 %v1942, %v2010
        %v2043 = vadd.f32 %v1943, %v2011
        %v2044 = vadd.f32 %v1944, %v2012
        %v2045 = vadd.f32 %v1945, %v2013
        %v2046 = vadd.f32 %v1946, %v2014
        %v2047 = vadd.f32 %v1947, %v2015
        %v2048 = vadd.f32 %v1948, %v2016
        %v2049 = vadd.f32 %v1949, %v2017
        %v2050 = vadd.f32 %v1950, %v2018
        %v2051 = vadd.f32 %v1951, %v2019
        %v2052 = vadd.f32 %v1952, %v2020
        %v2053 = vadd.f32 %v1953, %v2021
        %v2054 = vadd.f32 %v1954, %v2022
        %v2055 = vadd.f32 %v1955, %v2023
        %v2056 = vadd.f32 %v1956, %v2024
        %v2057 = vadd.f32 %v1957, %v2025
        %v2058 = vadd.f32 %v1958, %v2026
        %v2059 = vadd.f32 %v1959, %v2027
        %v2060 = vadd.f32 %v1960, %v2028
        %v2061 = vld [vmem:[%s575 + $0x7] sm:$0xff]
        %v2062 = vld [vmem:[%s575 + $0xf] sm:$0xff]
        %v2063 = vld [vmem:[%s575 + $0x27] sm:$0xff]
        %v2064 = vld [vmem:[%s575 + $0x2f] sm:$0xff]
        %v2065 = vld [vmem:[%s575 + $0x47] sm:$0xff]
        %v2066 = vld [vmem:[%s575 + $0x4f] sm:$0xff]
        %v2067 = vld [vmem:[%s575 + $0x67] sm:$0xff]
        %v2068 = vld [vmem:[%s575 + $0x6f] sm:$0xff]
        %v2069 = vld [vmem:[%s575 + $0x87] sm:$0xff]
        %v2070 = vld [vmem:[%s575 + $0x8f] sm:$0xff]
        %v2071 = vld [vmem:[%s575 + $0xa7] sm:$0xff]
        %v2072 = vld [vmem:[%s575 + $0xaf] sm:$0xff]
        %v2073 = vld [vmem:[%s575 + $0xc7] sm:$0xff]
        %v2074 = vld [vmem:[%s575 + $0xcf] sm:$0xff]
        %v2075 = vld [vmem:[%s575 + $0xe7] sm:$0xff]
        %v2076 = vld [vmem:[%s575 + $0xef] sm:$0xff]
        %v2077 = vld [vmem:[%s575 + $0x107] sm:$0xff]
        %v2078 = vld [vmem:[%s575 + $0x10f] sm:$0xff]
        %v2079 = vld [vmem:[%s575 + $0x127] sm:$0xff]
        %v2080 = vld [vmem:[%s575 + $0x12f] sm:$0xff]
        %v2081 = vld [vmem:[%s575 + $0x147] sm:$0xff]
        %v2082 = vld [vmem:[%s575 + $0x14f] sm:$0xff]
        %v2083 = vld [vmem:[%s575 + $0x167] sm:$0xff]
        %v2084 = vld [vmem:[%s575 + $0x16f] sm:$0xff]
        %v2085 = vld [vmem:[%s575 + $0x187] sm:$0xff]
        %v2086 = vld [vmem:[%s575 + $0x18f] sm:$0xff]
        %v2087 = vld [vmem:[%s575 + $0x1a7] sm:$0xff]
        %v2088 = vld [vmem:[%s575 + $0x1af] sm:$0xff]
        %v2089 = vld [vmem:[%s575 + $0x1c7] sm:$0xff]
        %v2090 = vld [vmem:[%s575 + $0x1cf] sm:$0xff]
        %v2091 = vld [vmem:[%s575 + $0x1e7] sm:$0xff]
        %v2092 = vld [vmem:[%s575 + $0x1ef] sm:$0xff]
        %v2093 = vlaneseq
        %v2094 = vshrl.u32 %v2093, 7
        %v2095 = vsub.s32 3, %v2094
        %v2096 = vrot.slane %v1791, %v2095
        %v2097 = vmul.f32 %v2061, %v2096
        %v2098 = vmul.f32 %v2062, %v2096
        %v2099 = vmul.f32 %v2063, %v2096
        %v2100 = vmul.f32 %v2064, %v2096
        %v2101 = vmul.f32 %v2065, %v2096
        %v2102 = vmul.f32 %v2066, %v2096
        %v2103 = vmul.f32 %v2067, %v2096
        %v2104 = vmul.f32 %v2068, %v2096
        %v2105 = vmul.f32 %v2069, %v2096
        %v2106 = vmul.f32 %v2070, %v2096
        %v2107 = vmul.f32 %v2071, %v2096
        %v2108 = vmul.f32 %v2072, %v2096
        %v2109 = vmul.f32 %v2073, %v2096
        %v2110 = vmul.f32 %v2074, %v2096
        %v2111 = vmul.f32 %v2075, %v2096
        %v2112 = vmul.f32 %v2076, %v2096
        %v2113 = vmul.f32 %v2077, %v2096
        %v2114 = vmul.f32 %v2078, %v2096
        %v2115 = vmul.f32 %v2079, %v2096
        %v2116 = vmul.f32 %v2080, %v2096
        %v2117 = vmul.f32 %v2081, %v2096
        %v2118 = vmul.f32 %v2082, %v2096
        %v2119 = vmul.f32 %v2083, %v2096
        %v2120 = vmul.f32 %v2084, %v2096
        %v2121 = vmul.f32 %v2085, %v2096
        %v2122 = vmul.f32 %v2086, %v2096
        %v2123 = vmul.f32 %v2087, %v2096
        %v2124 = vmul.f32 %v2088, %v2096
        %v2125 = vmul.f32 %v2089, %v2096
        %v2126 = vmul.f32 %v2090, %v2096
        %v2127 = vmul.f32 %v2091, %v2096
        %v2128 = vmul.f32 %v2092, %v2096
        %v2129 = vadd.f32 %v2029, %v2097
        %v2130 = vadd.f32 %v2030, %v2098
        %v2131 = vadd.f32 %v2031, %v2099
        %v2132 = vadd.f32 %v2032, %v2100
        %v2133 = vadd.f32 %v2033, %v2101
        %v2134 = vadd.f32 %v2034, %v2102
        %v2135 = vadd.f32 %v2035, %v2103
        %v2136 = vadd.f32 %v2036, %v2104
        %v2137 = vadd.f32 %v2037, %v2105
        %v2138 = vadd.f32 %v2038, %v2106
        %v2139 = vadd.f32 %v2039, %v2107
        %v2140 = vadd.f32 %v2040, %v2108
        %v2141 = vadd.f32 %v2041, %v2109
        %v2142 = vadd.f32 %v2042, %v2110
        %v2143 = vadd.f32 %v2043, %v2111
        %v2144 = vadd.f32 %v2044, %v2112
        %v2145 = vadd.f32 %v2045, %v2113
        %v2146 = vadd.f32 %v2046, %v2114
        %v2147 = vadd.f32 %v2047, %v2115
        %v2148 = vadd.f32 %v2048, %v2116
        %v2149 = vadd.f32 %v2049, %v2117
        %v2150 = vadd.f32 %v2050, %v2118
        %v2151 = vadd.f32 %v2051, %v2119
        %v2152 = vadd.f32 %v2052, %v2120
        %v2153 = vadd.f32 %v2053, %v2121
        %v2154 = vadd.f32 %v2054, %v2122
        %v2155 = vadd.f32 %v2055, %v2123
        %v2156 = vadd.f32 %v2056, %v2124
        %v2157 = vadd.f32 %v2057, %v2125
        %v2158 = vadd.f32 %v2058, %v2126
        %v2159 = vadd.f32 %v2059, %v2127
        %v2160 = vadd.f32 %v2060, %v2128
        %v2161 = vld [vmem:[%s575 + $0x8] sm:$0xff]
        %v2162 = vld [vmem:[%s575 + $0x10] sm:$0xff]
        %v2163 = vld [vmem:[%s575 + $0x28] sm:$0xff]
        %v2164 = vld [vmem:[%s575 + $0x30] sm:$0xff]
        %v2165 = vld [vmem:[%s575 + $0x48] sm:$0xff]
        %v2166 = vld [vmem:[%s575 + $0x50] sm:$0xff]
        %v2167 = vld [vmem:[%s575 + $0x68] sm:$0xff]
        %v2168 = vld [vmem:[%s575 + $0x70] sm:$0xff]
        %v2169 = vld [vmem:[%s575 + $0x88] sm:$0xff]
        %v2170 = vld [vmem:[%s575 + $0x90] sm:$0xff]
        %v2171 = vld [vmem:[%s575 + $0xa8] sm:$0xff]
        %v2172 = vld [vmem:[%s575 + $0xb0] sm:$0xff]
        %v2173 = vld [vmem:[%s575 + $0xc8] sm:$0xff]
        %v2174 = vld [vmem:[%s575 + $0xd0] sm:$0xff]
        %v2175 = vld [vmem:[%s575 + $0xe8] sm:$0xff]
        %v2176 = vld [vmem:[%s575 + $0xf0] sm:$0xff]
        %v2177 = vld [vmem:[%s575 + $0x108] sm:$0xff]
        %v2178 = vld [vmem:[%s575 + $0x110] sm:$0xff]
        %v2179 = vld [vmem:[%s575 + $0x128] sm:$0xff]
        %v2180 = vld [vmem:[%s575 + $0x130] sm:$0xff]
        %v2181 = vld [vmem:[%s575 + $0x148] sm:$0xff]
        %v2182 = vld [vmem:[%s575 + $0x150] sm:$0xff]
        %v2183 = vld [vmem:[%s575 + $0x168] sm:$0xff]
        %v2184 = vld [vmem:[%s575 + $0x170] sm:$0xff]
        %v2185 = vld [vmem:[%s575 + $0x188] sm:$0xff]
        %v2186 = vld [vmem:[%s575 + $0x190] sm:$0xff]
        %v2187 = vld [vmem:[%s575 + $0x1a8] sm:$0xff]
        %v2188 = vld [vmem:[%s575 + $0x1b0] sm:$0xff]
        %v2189 = vld [vmem:[%s575 + $0x1c8] sm:$0xff]
        %v2190 = vld [vmem:[%s575 + $0x1d0] sm:$0xff]
        %v2191 = vld [vmem:[%s575 + $0x1e8] sm:$0xff]
        %v2192 = vld [vmem:[%s575 + $0x1f0] sm:$0xff]
        %v2193 = vlaneseq
        %v2194 = vshrl.u32 %v2193, 7
        %v2195 = vsub.s32 4, %v2194
        %v2196 = vrot.slane %v1791, %v2195
        %v2197 = vmul.f32 %v2161, %v2196
        %v2198 = vmul.f32 %v2162, %v2196
        %v2199 = vmul.f32 %v2163, %v2196
        %v2200 = vmul.f32 %v2164, %v2196
        %v2201 = vmul.f32 %v2165, %v2196
        %v2202 = vmul.f32 %v2166, %v2196
        %v2203 = vmul.f32 %v2167, %v2196
        %v2204 = vmul.f32 %v2168, %v2196
        %v2205 = vmul.f32 %v2169, %v2196
        %v2206 = vmul.f32 %v2170, %v2196
        %v2207 = vmul.f32 %v2171, %v2196
        %v2208 = vmul.f32 %v2172, %v2196
        %v2209 = vmul.f32 %v2173, %v2196
        %v2210 = vmul.f32 %v2174, %v2196
        %v2211 = vmul.f32 %v2175, %v2196
        %v2212 = vmul.f32 %v2176, %v2196
        %v2213 = vmul.f32 %v2177, %v2196
        %v2214 = vmul.f32 %v2178, %v2196
        %v2215 = vmul.f32 %v2179, %v2196
        %v2216 = vmul.f32 %v2180, %v2196
        %v2217 = vmul.f32 %v2181, %v2196
        %v2218 = vmul.f32 %v2182, %v2196
        %v2219 = vmul.f32 %v2183, %v2196
        %v2220 = vmul.f32 %v2184, %v2196
        %v2221 = vmul.f32 %v2185, %v2196
        %v2222 = vmul.f32 %v2186, %v2196
        %v2223 = vmul.f32 %v2187, %v2196
        %v2224 = vmul.f32 %v2188, %v2196
        %v2225 = vmul.f32 %v2189, %v2196
        %v2226 = vmul.f32 %v2190, %v2196
        %v2227 = vmul.f32 %v2191, %v2196
        %v2228 = vmul.f32 %v2192, %v2196
        %v2229 = vadd.f32 %v2129, %v2197
        %v2230 = vadd.f32 %v2130, %v2198
        %v2231 = vadd.f32 %v2131, %v2199
        %v2232 = vadd.f32 %v2132, %v2200
        %v2233 = vadd.f32 %v2133, %v2201
        %v2234 = vadd.f32 %v2134, %v2202
        %v2235 = vadd.f32 %v2135, %v2203
        %v2236 = vadd.f32 %v2136, %v2204
        %v2237 = vadd.f32 %v2137, %v2205
        %v2238 = vadd.f32 %v2138, %v2206
        %v2239 = vadd.f32 %v2139, %v2207
        %v2240 = vadd.f32 %v2140, %v2208
        %v2241 = vadd.f32 %v2141, %v2209
        %v2242 = vadd.f32 %v2142, %v2210
        %v2243 = vadd.f32 %v2143, %v2211
        %v2244 = vadd.f32 %v2144, %v2212
        %v2245 = vadd.f32 %v2145, %v2213
        %v2246 = vadd.f32 %v2146, %v2214
        %v2247 = vadd.f32 %v2147, %v2215
        %v2248 = vadd.f32 %v2148, %v2216
        %v2249 = vadd.f32 %v2149, %v2217
        %v2250 = vadd.f32 %v2150, %v2218
        %v2251 = vadd.f32 %v2151, %v2219
        %v2252 = vadd.f32 %v2152, %v2220
        %v2253 = vadd.f32 %v2153, %v2221
        %v2254 = vadd.f32 %v2154, %v2222
        %v2255 = vadd.f32 %v2155, %v2223
        %v2256 = vadd.f32 %v2156, %v2224
        %v2257 = vadd.f32 %v2157, %v2225
        %v2258 = vadd.f32 %v2158, %v2226
        %v2259 = vadd.f32 %v2159, %v2227
        %v2260 = vadd.f32 %v2160, %v2228
        %v2261 = vld [vmem:[%s575 + $0x9] sm:$0xff]
        %v2262 = vld [vmem:[%s575 + $0x11] sm:$0xff]
        %v2263 = vld [vmem:[%s575 + $0x29] sm:$0xff]
        %v2264 = vld [vmem:[%s575 + $0x31] sm:$0xff]
        %v2265 = vld [vmem:[%s575 + $0x49] sm:$0xff]
        %v2266 = vld [vmem:[%s575 + $0x51] sm:$0xff]
        %v2267 = vld [vmem:[%s575 + $0x69] sm:$0xff]
        %v2268 = vld [vmem:[%s575 + $0x71] sm:$0xff]
        %v2269 = vld [vmem:[%s575 + $0x89] sm:$0xff]
        %v2270 = vld [vmem:[%s575 + $0x91] sm:$0xff]
        %v2271 = vld [vmem:[%s575 + $0xa9] sm:$0xff]
        %v2272 = vld [vmem:[%s575 + $0xb1] sm:$0xff]
        %v2273 = vld [vmem:[%s575 + $0xc9] sm:$0xff]
        %v2274 = vld [vmem:[%s575 + $0xd1] sm:$0xff]
        %v2275 = vld [vmem:[%s575 + $0xe9] sm:$0xff]
        %v2276 = vld [vmem:[%s575 + $0xf1] sm:$0xff]
        %v2277 = vld [vmem:[%s575 + $0x109] sm:$0xff]
        %v2278 = vld [vmem:[%s575 + $0x111] sm:$0xff]
        %v2279 = vld [vmem:[%s575 + $0x129] sm:$0xff]
        %v2280 = vld [vmem:[%s575 + $0x131] sm:$0xff]
        %v2281 = vld [vmem:[%s575 + $0x149] sm:$0xff]
        %v2282 = vld [vmem:[%s575 + $0x151] sm:$0xff]
        %v2283 = vld [vmem:[%s575 + $0x169] sm:$0xff]
        %v2284 = vld [vmem:[%s575 + $0x171] sm:$0xff]
        %v2285 = vld [vmem:[%s575 + $0x189] sm:$0xff]
        %v2286 = vld [vmem:[%s575 + $0x191] sm:$0xff]
        %v2287 = vld [vmem:[%s575 + $0x1a9] sm:$0xff]
        %v2288 = vld [vmem:[%s575 + $0x1b1] sm:$0xff]
        %v2289 = vld [vmem:[%s575 + $0x1c9] sm:$0xff]
        %v2290 = vld [vmem:[%s575 + $0x1d1] sm:$0xff]
        %v2291 = vld [vmem:[%s575 + $0x1e9] sm:$0xff]
        %v2292 = vld [vmem:[%s575 + $0x1f1] sm:$0xff]
        %v2293 = vlaneseq
        %v2294 = vshrl.u32 %v2293, 7
        %v2295 = vsub.s32 5, %v2294
        %v2296 = vrot.slane %v1791, %v2295
        %v2297 = vmul.f32 %v2261, %v2296
        %v2298 = vmul.f32 %v2262, %v2296
        %v2299 = vmul.f32 %v2263, %v2296
        %v2300 = vmul.f32 %v2264, %v2296
        %v2301 = vmul.f32 %v2265, %v2296
        %v2302 = vmul.f32 %v2266, %v2296
        %v2303 = vmul.f32 %v2267, %v2296
        %v2304 = vmul.f32 %v2268, %v2296
        %v2305 = vmul.f32 %v2269, %v2296
        %v2306 = vmul.f32 %v2270, %v2296
        %v2307 = vmul.f32 %v2271, %v2296
        %v2308 = vmul.f32 %v2272, %v2296
        %v2309 = vmul.f32 %v2273, %v2296
        %v2310 = vmul.f32 %v2274, %v2296
        %v2311 = vmul.f32 %v2275, %v2296
        %v2312 = vmul.f32 %v2276, %v2296
        %v2313 = vmul.f32 %v2277, %v2296
        %v2314 = vmul.f32 %v2278, %v2296
        %v2315 = vmul.f32 %v2279, %v2296
        %v2316 = vmul.f32 %v2280, %v2296
        %v2317 = vmul.f32 %v2281, %v2296
        %v2318 = vmul.f32 %v2282, %v2296
        %v2319 = vmul.f32 %v2283, %v2296
        %v2320 = vmul.f32 %v2284, %v2296
        %v2321 = vmul.f32 %v2285, %v2296
        %v2322 = vmul.f32 %v2286, %v2296
        %v2323 = vmul.f32 %v2287, %v2296
        %v2324 = vmul.f32 %v2288, %v2296
        %v2325 = vmul.f32 %v2289, %v2296
        %v2326 = vmul.f32 %v2290, %v2296
        %v2327 = vmul.f32 %v2291, %v2296
        %v2328 = vmul.f32 %v2292, %v2296
        %v2329 = vadd.f32 %v2229, %v2297
        %v2330 = vadd.f32 %v2230, %v2298
        %v2331 = vadd.f32 %v2231, %v2299
        %v2332 = vadd.f32 %v2232, %v2300
        %v2333 = vadd.f32 %v2233, %v2301
        %v2334 = vadd.f32 %v2234, %v2302
        %v2335 = vadd.f32 %v2235, %v2303
        %v2336 = vadd.f32 %v2236, %v2304
        %v2337 = vadd.f32 %v2237, %v2305
        %v2338 = vadd.f32 %v2238, %v2306
        %v2339 = vadd.f32 %v2239, %v2307
        %v2340 = vadd.f32 %v2240, %v2308
        %v2341 = vadd.f32 %v2241, %v2309
        %v2342 = vadd.f32 %v2242, %v2310
        %v2343 = vadd.f32 %v2243, %v2311
        %v2344 = vadd.f32 %v2244, %v2312
        %v2345 = vadd.f32 %v2245, %v2313
        %v2346 = vadd.f32 %v2246, %v2314
        %v2347 = vadd.f32 %v2247, %v2315
        %v2348 = vadd.f32 %v2248, %v2316
        %v2349 = vadd.f32 %v2249, %v2317
        %v2350 = vadd.f32 %v2250, %v2318
        %v2351 = vadd.f32 %v2251, %v2319
        %v2352 = vadd.f32 %v2252, %v2320
        %v2353 = vadd.f32 %v2253, %v2321
        %v2354 = vadd.f32 %v2254, %v2322
        %v2355 = vadd.f32 %v2255, %v2323
        %v2356 = vadd.f32 %v2256, %v2324
        %v2357 = vadd.f32 %v2257, %v2325
        %v2358 = vadd.f32 %v2258, %v2326
        %v2359 = vadd.f32 %v2259, %v2327
        %v2360 = vadd.f32 %v2260, %v2328
        %v2361 = vld [vmem:[%s1178 + $0x7] sm:$0xff]
        %v2362 = vld [vmem:[%s1178 + $0xf] sm:$0xff]
        %v2363 = vld [vmem:[%s1178 + $0x27] sm:$0xff]
        %v2364 = vld [vmem:[%s1178 + $0x2f] sm:$0xff]
        %v2365 = vld [vmem:[%s1178 + $0x47] sm:$0xff]
        %v2366 = vld [vmem:[%s1178 + $0x4f] sm:$0xff]
        %v2367 = vld [vmem:[%s1178 + $0x67] sm:$0xff]
        %v2368 = vld [vmem:[%s1178 + $0x6f] sm:$0xff]
        %v2369 = vld [vmem:[%s1178 + $0x87] sm:$0xff]
        %v2370 = vld [vmem:[%s1178 + $0x8f] sm:$0xff]
        %v2371 = vld [vmem:[%s1178 + $0xa7] sm:$0xff]
        %v2372 = vld [vmem:[%s1178 + $0xaf] sm:$0xff]
        %v2373 = vld [vmem:[%s1178 + $0xc7] sm:$0xff]
        %v2374 = vld [vmem:[%s1178 + $0xcf] sm:$0xff]
        %v2375 = vld [vmem:[%s1178 + $0xe7] sm:$0xff]
        %v2376 = vld [vmem:[%s1178 + $0xef] sm:$0xff]
        %v2377 = vld [vmem:[%s1178 + $0x107] sm:$0xff]
        %v2378 = vld [vmem:[%s1178 + $0x10f] sm:$0xff]
        %v2379 = vld [vmem:[%s1178 + $0x127] sm:$0xff]
        %v2380 = vld [vmem:[%s1178 + $0x12f] sm:$0xff]
        %v2381 = vld [vmem:[%s1178 + $0x147] sm:$0xff]
        %v2382 = vld [vmem:[%s1178 + $0x14f] sm:$0xff]
        %v2383 = vld [vmem:[%s1178 + $0x167] sm:$0xff]
        %v2384 = vld [vmem:[%s1178 + $0x16f] sm:$0xff]
        %v2385 = vld [vmem:[%s1178 + $0x187] sm:$0xff]
        %v2386 = vld [vmem:[%s1178 + $0x18f] sm:$0xff]
        %v2387 = vld [vmem:[%s1178 + $0x1a7] sm:$0xff]
        %v2388 = vld [vmem:[%s1178 + $0x1af] sm:$0xff]
        %v2389 = vld [vmem:[%s1178 + $0x1c7] sm:$0xff]
        %v2390 = vld [vmem:[%s1178 + $0x1cf] sm:$0xff]
        %v2391 = vld [vmem:[%s1178 + $0x1e7] sm:$0xff]
        %v2392 = vld [vmem:[%s1178 + $0x1ef] sm:$0xff]
        %v2393 = vlaneseq
        %v2394 = vshrl.u32 %v2393, 7
        %v2395 = vsub.s32 6, %v2394
        %v2396 = vrot.slane %v1791, %v2395
        %v2397 = vmul.f32 %v2361, %v2396
        %v2398 = vmul.f32 %v2362, %v2396
        %v2399 = vmul.f32 %v2363, %v2396
        %v2400 = vmul.f32 %v2364, %v2396
        %v2401 = vmul.f32 %v2365, %v2396
        %v2402 = vmul.f32 %v2366, %v2396
        %v2403 = vmul.f32 %v2367, %v2396
        %v2404 = vmul.f32 %v2368, %v2396
        %v2405 = vmul.f32 %v2369, %v2396
        %v2406 = vmul.f32 %v2370, %v2396
        %v2407 = vmul.f32 %v2371, %v2396
        %v2408 = vmul.f32 %v2372, %v2396
        %v2409 = vmul.f32 %v2373, %v2396
        %v2410 = vmul.f32 %v2374, %v2396
        %v2411 = vmul.f32 %v2375, %v2396
        %v2412 = vmul.f32 %v2376, %v2396
        %v2413 = vmul.f32 %v2377, %v2396
        %v2414 = vmul.f32 %v2378, %v2396
        %v2415 = vmul.f32 %v2379, %v2396
        %v2416 = vmul.f32 %v2380, %v2396
        %v2417 = vmul.f32 %v2381, %v2396
        %v2418 = vmul.f32 %v2382, %v2396
        %v2419 = vmul.f32 %v2383, %v2396
        %v2420 = vmul.f32 %v2384, %v2396
        %v2421 = vmul.f32 %v2385, %v2396
        %v2422 = vmul.f32 %v2386, %v2396
        %v2423 = vmul.f32 %v2387, %v2396
        %v2424 = vmul.f32 %v2388, %v2396
        %v2425 = vmul.f32 %v2389, %v2396
        %v2426 = vmul.f32 %v2390, %v2396
        %v2427 = vmul.f32 %v2391, %v2396
        %v2428 = vmul.f32 %v2392, %v2396
        %v2429 = vadd.f32 %v2329, %v2397
        %v2430 = vadd.f32 %v2330, %v2398
        %v2431 = vadd.f32 %v2331, %v2399
        %v2432 = vadd.f32 %v2332, %v2400
        %v2433 = vadd.f32 %v2333, %v2401
        %v2434 = vadd.f32 %v2334, %v2402
        %v2435 = vadd.f32 %v2335, %v2403
        %v2436 = vadd.f32 %v2336, %v2404
        %v2437 = vadd.f32 %v2337, %v2405
        %v2438 = vadd.f32 %v2338, %v2406
        %v2439 = vadd.f32 %v2339, %v2407
        %v2440 = vadd.f32 %v2340, %v2408
        %v2441 = vadd.f32 %v2341, %v2409
        %v2442 = vadd.f32 %v2342, %v2410
        %v2443 = vadd.f32 %v2343, %v2411
        %v2444 = vadd.f32 %v2344, %v2412
        %v2445 = vadd.f32 %v2345, %v2413
        %v2446 = vadd.f32 %v2346, %v2414
        %v2447 = vadd.f32 %v2347, %v2415
        %v2448 = vadd.f32 %v2348, %v2416
        %v2449 = vadd.f32 %v2349, %v2417
        %v2450 = vadd.f32 %v2350, %v2418
        %v2451 = vadd.f32 %v2351, %v2419
        %v2452 = vadd.f32 %v2352, %v2420
        %v2453 = vadd.f32 %v2353, %v2421
        %v2454 = vadd.f32 %v2354, %v2422
        %v2455 = vadd.f32 %v2355, %v2423
        %v2456 = vadd.f32 %v2356, %v2424
        %v2457 = vadd.f32 %v2357, %v2425
        %v2458 = vadd.f32 %v2358, %v2426
        %v2459 = vadd.f32 %v2359, %v2427
        %v2460 = vadd.f32 %v2360, %v2428
        %v2461 = vld [vmem:[%s1178 + $0x8] sm:$0xff]
        %v2462 = vld [vmem:[%s1178 + $0x10] sm:$0xff]
        %v2463 = vld [vmem:[%s1178 + $0x28] sm:$0xff]
        %v2464 = vld [vmem:[%s1178 + $0x30] sm:$0xff]
        %v2465 = vld [vmem:[%s1178 + $0x48] sm:$0xff]
        %v2466 = vld [vmem:[%s1178 + $0x50] sm:$0xff]
        %v2467 = vld [vmem:[%s1178 + $0x68] sm:$0xff]
        %v2468 = vld [vmem:[%s1178 + $0x70] sm:$0xff]
        %v2469 = vld [vmem:[%s1178 + $0x88] sm:$0xff]
        %v2470 = vld [vmem:[%s1178 + $0x90] sm:$0xff]
        %v2471 = vld [vmem:[%s1178 + $0xa8] sm:$0xff]
        %v2472 = vld [vmem:[%s1178 + $0xb0] sm:$0xff]
        %v2473 = vld [vmem:[%s1178 + $0xc8] sm:$0xff]
        %v2474 = vld [vmem:[%s1178 + $0xd0] sm:$0xff]
        %v2475 = vld [vmem:[%s1178 + $0xe8] sm:$0xff]
        %v2476 = vld [vmem:[%s1178 + $0xf0] sm:$0xff]
        %v2477 = vld [vmem:[%s1178 + $0x108] sm:$0xff]
        %v2478 = vld [vmem:[%s1178 + $0x110] sm:$0xff]
        %v2479 = vld [vmem:[%s1178 + $0x128] sm:$0xff]
        %v2480 = vld [vmem:[%s1178 + $0x130] sm:$0xff]
        %v2481 = vld [vmem:[%s1178 + $0x148] sm:$0xff]
        %v2482 = vld [vmem:[%s1178 + $0x150] sm:$0xff]
        %v2483 = vld [vmem:[%s1178 + $0x168] sm:$0xff]
        %v2484 = vld [vmem:[%s1178 + $0x170] sm:$0xff]
        %v2485 = vld [vmem:[%s1178 + $0x188] sm:$0xff]
        %v2486 = vld [vmem:[%s1178 + $0x190] sm:$0xff]
        %v2487 = vld [vmem:[%s1178 + $0x1a8] sm:$0xff]
        %v2488 = vld [vmem:[%s1178 + $0x1b0] sm:$0xff]
        %v2489 = vld [vmem:[%s1178 + $0x1c8] sm:$0xff]
        %v2490 = vld [vmem:[%s1178 + $0x1d0] sm:$0xff]
        %v2491 = vld [vmem:[%s1178 + $0x1e8] sm:$0xff]
        %v2492 = vld [vmem:[%s1178 + $0x1f0] sm:$0xff]
        %v2493 = vlaneseq
        %v2494 = vshrl.u32 %v2493, 7
        %v2495 = vsub.s32 7, %v2494
        %v2496 = vrot.slane %v1791, %v2495
        %v2497 = vmul.f32 %v2461, %v2496
        %v2498 = vmul.f32 %v2462, %v2496
        %v2499 = vmul.f32 %v2463, %v2496
        %v2500 = vmul.f32 %v2464, %v2496
        %v2501 = vmul.f32 %v2465, %v2496
        %v2502 = vmul.f32 %v2466, %v2496
        %v2503 = vmul.f32 %v2467, %v2496
        %v2504 = vmul.f32 %v2468, %v2496
        %v2505 = vmul.f32 %v2469, %v2496
        %v2506 = vmul.f32 %v2470, %v2496
        %v2507 = vmul.f32 %v2471, %v2496
        %v2508 = vmul.f32 %v2472, %v2496
        %v2509 = vmul.f32 %v2473, %v2496
        %v2510 = vmul.f32 %v2474, %v2496
        %v2511 = vmul.f32 %v2475, %v2496
        %v2512 = vmul.f32 %v2476, %v2496
        %v2513 = vmul.f32 %v2477, %v2496
        %v2514 = vmul.f32 %v2478, %v2496
        %v2515 = vmul.f32 %v2479, %v2496
        %v2516 = vmul.f32 %v2480, %v2496
        %v2517 = vmul.f32 %v2481, %v2496
        %v2518 = vmul.f32 %v2482, %v2496
        %v2519 = vmul.f32 %v2483, %v2496
        %v2520 = vmul.f32 %v2484, %v2496
        %v2521 = vmul.f32 %v2485, %v2496
        %v2522 = vmul.f32 %v2486, %v2496
        %v2523 = vmul.f32 %v2487, %v2496
        %v2524 = vmul.f32 %v2488, %v2496
        %v2525 = vmul.f32 %v2489, %v2496
        %v2526 = vmul.f32 %v2490, %v2496
        %v2527 = vmul.f32 %v2491, %v2496
        %v2528 = vmul.f32 %v2492, %v2496
        %v2529 = vadd.f32 %v2429, %v2497
        %v2530 = vadd.f32 %v2430, %v2498
        %v2531 = vadd.f32 %v2431, %v2499
        %v2532 = vadd.f32 %v2432, %v2500
        %v2533 = vadd.f32 %v2433, %v2501
        %v2534 = vadd.f32 %v2434, %v2502
        %v2535 = vadd.f32 %v2435, %v2503
        %v2536 = vadd.f32 %v2436, %v2504
        %v2537 = vadd.f32 %v2437, %v2505
        %v2538 = vadd.f32 %v2438, %v2506
        %v2539 = vadd.f32 %v2439, %v2507
        %v2540 = vadd.f32 %v2440, %v2508
        %v2541 = vadd.f32 %v2441, %v2509
        %v2542 = vadd.f32 %v2442, %v2510
        %v2543 = vadd.f32 %v2443, %v2511
        %v2544 = vadd.f32 %v2444, %v2512
        %v2545 = vadd.f32 %v2445, %v2513
        %v2546 = vadd.f32 %v2446, %v2514
        %v2547 = vadd.f32 %v2447, %v2515
        %v2548 = vadd.f32 %v2448, %v2516
        %v2549 = vadd.f32 %v2449, %v2517
        %v2550 = vadd.f32 %v2450, %v2518
        %v2551 = vadd.f32 %v2451, %v2519
        %v2552 = vadd.f32 %v2452, %v2520
        %v2553 = vadd.f32 %v2453, %v2521
        %v2554 = vadd.f32 %v2454, %v2522
        %v2555 = vadd.f32 %v2455, %v2523
        %v2556 = vadd.f32 %v2456, %v2524
        %v2557 = vadd.f32 %v2457, %v2525
        %v2558 = vadd.f32 %v2458, %v2526
        %v2559 = vadd.f32 %v2459, %v2527
        %v2560 = vadd.f32 %v2460, %v2528
        %v2561 = vld [vmem:[%s1178 + $0x9] sm:$0xff]
        %v2562 = vld [vmem:[%s1178 + $0x11] sm:$0xff]
        %v2563 = vld [vmem:[%s1178 + $0x29] sm:$0xff]
        %v2564 = vld [vmem:[%s1178 + $0x31] sm:$0xff]
        %v2565 = vld [vmem:[%s1178 + $0x49] sm:$0xff]
        %v2566 = vld [vmem:[%s1178 + $0x51] sm:$0xff]
        %v2567 = vld [vmem:[%s1178 + $0x69] sm:$0xff]
        %v2568 = vld [vmem:[%s1178 + $0x71] sm:$0xff]
        %v2569 = vld [vmem:[%s1178 + $0x89] sm:$0xff]
        %v2570 = vld [vmem:[%s1178 + $0x91] sm:$0xff]
        %v2571 = vld [vmem:[%s1178 + $0xa9] sm:$0xff]
        %v2572 = vld [vmem:[%s1178 + $0xb1] sm:$0xff]
        %v2573 = vld [vmem:[%s1178 + $0xc9] sm:$0xff]
        %v2574 = vld [vmem:[%s1178 + $0xd1] sm:$0xff]
        %v2575 = vld [vmem:[%s1178 + $0xe9] sm:$0xff]
        %v2576 = vld [vmem:[%s1178 + $0xf1] sm:$0xff]
        %v2577 = vld [vmem:[%s1178 + $0x109] sm:$0xff]
        %v2578 = vld [vmem:[%s1178 + $0x111] sm:$0xff]
        %v2579 = vld [vmem:[%s1178 + $0x129] sm:$0xff]
        %v2580 = vld [vmem:[%s1178 + $0x131] sm:$0xff]
        %v2581 = vld [vmem:[%s1178 + $0x149] sm:$0xff]
        %v2582 = vld [vmem:[%s1178 + $0x151] sm:$0xff]
        %v2583 = vld [vmem:[%s1178 + $0x169] sm:$0xff]
        %v2584 = vld [vmem:[%s1178 + $0x171] sm:$0xff]
        %v2585 = vld [vmem:[%s1178 + $0x189] sm:$0xff]
        %v2586 = vld [vmem:[%s1178 + $0x191] sm:$0xff]
        %v2587 = vld [vmem:[%s1178 + $0x1a9] sm:$0xff]
        %v2588 = vld [vmem:[%s1178 + $0x1b1] sm:$0xff]
        %v2589 = vld [vmem:[%s1178 + $0x1c9] sm:$0xff]
        %v2590 = vld [vmem:[%s1178 + $0x1d1] sm:$0xff]
        %v2591 = vld [vmem:[%s1178 + $0x1e9] sm:$0xff]
        %v2592 = vld [vmem:[%s1178 + $0x1f1] sm:$0xff]
        %v2593 = vlaneseq
        %v2594 = vshrl.u32 %v2593, 7
        %v2595 = vsub.s32 0, %v2594
        %v2596 = vrot.slane %v1792, %v2595
        %v2597 = vmul.f32 %v2561, %v2596
        %v2598 = vmul.f32 %v2562, %v2596
        %v2599 = vmul.f32 %v2563, %v2596
        %v2600 = vmul.f32 %v2564, %v2596
        %v2601 = vmul.f32 %v2565, %v2596
        %v2602 = vmul.f32 %v2566, %v2596
        %v2603 = vmul.f32 %v2567, %v2596
        %v2604 = vmul.f32 %v2568, %v2596
        %v2605 = vmul.f32 %v2569, %v2596
        %v2606 = vmul.f32 %v2570, %v2596
        %v2607 = vmul.f32 %v2571, %v2596
        %v2608 = vmul.f32 %v2572, %v2596
        %v2609 = vmul.f32 %v2573, %v2596
        %v2610 = vmul.f32 %v2574, %v2596
        %v2611 = vmul.f32 %v2575, %v2596
        %v2612 = vmul.f32 %v2576, %v2596
        %v2613 = vmul.f32 %v2577, %v2596
        %v2614 = vmul.f32 %v2578, %v2596
        %v2615 = vmul.f32 %v2579, %v2596
        %v2616 = vmul.f32 %v2580, %v2596
        %v2617 = vmul.f32 %v2581, %v2596
        %v2618 = vmul.f32 %v2582, %v2596
        %v2619 = vmul.f32 %v2583, %v2596
        %v2620 = vmul.f32 %v2584, %v2596
        %v2621 = vmul.f32 %v2585, %v2596
        %v2622 = vmul.f32 %v2586, %v2596
        %v2623 = vmul.f32 %v2587, %v2596
        %v2624 = vmul.f32 %v2588, %v2596
        %v2625 = vmul.f32 %v2589, %v2596
        %v2626 = vmul.f32 %v2590, %v2596
        %v2627 = vmul.f32 %v2591, %v2596
        %v2628 = vmul.f32 %v2592, %v2596
        %v2629 = vadd.f32 %v2529, %v2597
        %v2630 = vadd.f32 %v2530, %v2598
        %v2631 = vadd.f32 %v2531, %v2599
        %v2632 = vadd.f32 %v2532, %v2600
        %v2633 = vadd.f32 %v2533, %v2601
        %v2634 = vadd.f32 %v2534, %v2602
        %v2635 = vadd.f32 %v2535, %v2603
        %v2636 = vadd.f32 %v2536, %v2604
        %v2637 = vadd.f32 %v2537, %v2605
        %v2638 = vadd.f32 %v2538, %v2606
        %v2639 = vadd.f32 %v2539, %v2607
        %v2640 = vadd.f32 %v2540, %v2608
        %v2641 = vadd.f32 %v2541, %v2609
        %v2642 = vadd.f32 %v2542, %v2610
        %v2643 = vadd.f32 %v2543, %v2611
        %v2644 = vadd.f32 %v2544, %v2612
        %v2645 = vadd.f32 %v2545, %v2613
        %v2646 = vadd.f32 %v2546, %v2614
        %v2647 = vadd.f32 %v2547, %v2615
        %v2648 = vadd.f32 %v2548, %v2616
        %v2649 = vadd.f32 %v2549, %v2617
        %v2650 = vadd.f32 %v2550, %v2618
        %v2651 = vadd.f32 %v2551, %v2619
        %v2652 = vadd.f32 %v2552, %v2620
        %v2653 = vadd.f32 %v2553, %v2621
        %v2654 = vadd.f32 %v2554, %v2622
        %v2655 = vadd.f32 %v2555, %v2623
        %v2656 = vadd.f32 %v2556, %v2624
        %v2657 = vadd.f32 %v2557, %v2625
        %v2658 = vadd.f32 %v2558, %v2626
        %v2659 = vadd.f32 %v2559, %v2627
        %v2660 = vadd.f32 %v2560, %v2628
        %v2661 = vpack.c.bf16 %v2630, %v2629
        %v2662 = vpack.c.bf16 %v2632, %v2631
        %v2663 = vpack.c.bf16 %v2634, %v2633
        %v2664 = vpack.c.bf16 %v2636, %v2635
        %v2665 = vpack.c.bf16 %v2638, %v2637
        %v2666 = vpack.c.bf16 %v2640, %v2639
        %v2667 = vpack.c.bf16 %v2642, %v2641
        %v2668 = vpack.c.bf16 %v2644, %v2643
        %v2669 = vpack.c.bf16 %v2646, %v2645
        %v2670 = vpack.c.bf16 %v2648, %v2647
        %v2671 = vpack.c.bf16 %v2650, %v2649
        %v2672 = vpack.c.bf16 %v2652, %v2651
        %v2673 = vpack.c.bf16 %v2654, %v2653
        %v2674 = vpack.c.bf16 %v2656, %v2655
        %v2675 = vpack.c.bf16 %v2658, %v2657
        %v2676 = vpack.c.bf16 %v2660, %v2659
        %v2677 = vld [vmem:[#allocation12] sm:$0xf]
        %v2678 = vld [vmem:[#allocation12 + $0x4] sm:$0xf]
        %v2679 = vld [vmem:[#allocation12 + $0x8] sm:$0xf]
        %v2680 = vld [vmem:[#allocation12 + $0xc] sm:$0xf]
        %v2681 = vld [vmem:[#allocation12 + $0x10] sm:$0xf]
        %v2682 = vld [vmem:[#allocation12 + $0x14] sm:$0xf]
        %v2683 = vld [vmem:[#allocation12 + $0x18] sm:$0xf]
        %v2684 = vld [vmem:[#allocation12 + $0x1c] sm:$0xf]
        %v2685 = vld [vmem:[#allocation12 + $0x20] sm:$0xf]
        %v2686 = vld [vmem:[#allocation12 + $0x24] sm:$0xf]
        %v2687 = vld [vmem:[#allocation12 + $0x28] sm:$0xf]
        %v2688 = vld [vmem:[#allocation12 + $0x2c] sm:$0xf]
        %v2689 = vld [vmem:[#allocation12 + $0x30] sm:$0xf]
        %v2690 = vld [vmem:[#allocation12 + $0x34] sm:$0xf]
        %v2691 = vld [vmem:[#allocation12 + $0x38] sm:$0xf]
        %v2692 = vld [vmem:[#allocation12 + $0x3c] sm:$0xf]
        %v2693 = vld [vmem:[%s7] sm:$0x1]
        %v2695 = vlaneseq
        %v2696 = vshrl.u32 %v2695, 7
        %v2697 = vsub.s32 0, %v2696
        %v2698 = vrot.slane %v2693, %v2697
        %v2716 = vunpack.c.l.b16 %v2677
        %v2717 = vunpack.c.l.b16 %v2678
        %v2718 = vunpack.c.l.b16 %v2679
        %v2719 = vunpack.c.l.b16 %v2680
        %v2720 = vunpack.c.l.b16 %v2681
        %v2721 = vunpack.c.l.b16 %v2682
        %v2722 = vunpack.c.l.b16 %v2683
        %v2723 = vunpack.c.l.b16 %v2684
        %v2724 = vunpack.c.l.b16 %v2685
        %v2725 = vunpack.c.l.b16 %v2686
        %v2726 = vunpack.c.l.b16 %v2687
        %v2727 = vunpack.c.l.b16 %v2688
        %v2728 = vunpack.c.l.b16 %v2689
        %v2729 = vunpack.c.l.b16 %v2690
        %v2730 = vunpack.c.l.b16 %v2691
        %v2731 = vunpack.c.l.b16 %v2692
        %v2732 = vpack.c.b16 %v2717, %v2716
        %v2733 = vpack.c.b16 %v2719, %v2718
        %v2734 = vpack.c.b16 %v2721, %v2720
        %v2735 = vpack.c.b16 %v2723, %v2722
        %v2736 = vpack.c.b16 %v2725, %v2724
        %v2737 = vpack.c.b16 %v2727, %v2726
        %v2738 = vpack.c.b16 %v2729, %v2728
        %v2739 = vpack.c.b16 %v2731, %v2730
        %2748 = vmatprep.subr.bf16.mxu0 0
        %2749 = vmatpush1.bf16.msra.mxu0 %v2732
        %2750 = vmatprep.subr.bf16.mxu0 0
        %2751 = vmatpush1.bf16.msra.mxu0 %v2733
        %2752 = vmatprep.subr.bf16.mxu0 0
        %2753 = vmatpush1.bf16.msra.mxu0 %v2734
        %2754 = vmatprep.subr.bf16.mxu0 0
        %2755 = vmatpush1.bf16.msra.mxu0 %v2735
        %2756 = vmatprep.subr.bf16.mxu0 0
        %2757 = vmatpush1.bf16.msra.mxu0 %v2736
        %2758 = vmatprep.subr.bf16.mxu0 0
        %2759 = vmatpush1.bf16.msra.mxu0 %v2737
        %2760 = vmatprep.subr.bf16.mxu0 0
        %2761 = vmatpush1.bf16.msra.mxu0 %v2738
        %2762 = vmatprep.subr.bf16.mxu0 0
        %2763 = vmatpush1.bf16.msra.mxu0 %v2739
        %2764 = vmatprep.subr.bf16.mxu0 0
        %2765 = vmatpush1.bf16.msra.mxu0 0
        %2766 = vmatprep.subr.bf16.mxu0 0
        %2767 = vmatpush1.bf16.msra.mxu0 0
        %2768 = vmatprep.subr.bf16.mxu0 0
        %2769 = vmatpush1.bf16.msra.mxu0 0
        %2770 = vmatprep.subr.bf16.mxu0 0
        %2771 = vmatpush1.bf16.msra.mxu0 0
        %2772 = vmatprep.subr.bf16.mxu0 0
        %2773 = vmatpush1.bf16.msra.mxu0 0
        %2774 = vmatprep.subr.bf16.mxu0 0
        %2775 = vmatpush1.bf16.msra.mxu0 0
        %2776 = vmatprep.subr.bf16.mxu0 0
        %2777 = vmatpush1.bf16.msra.mxu0 0
        %2778 = vmatprep.subr.bf16.mxu0 0
        %2779 = vmatpush1.bf16.msra.mxu0 0
        %2780 = vmatprep.mubr.bf16.mxu0 0
        %2781 = vmatmul.mubr.bf16.gmra.mrb[0].mxu0 %v2661
        %v2782 = vpop.f32.mrb[0].mxu0
        %v2783 = vadd.f32 %v2698, %v2782
        %v2784 = vpop.f32.mrb[0].mxu0
        %v2785 = vpop.f32.mrb[0].mxu0
        %v2786 = vadd.f32 %v2698, %v2785
        %v2787 = vpop.f32.mrb[0].mxu0
        %2788 = vmatprep.mubr.bf16.mxu0 0
        %2789 = vmatmul.mubr.bf16.gmra.mrb[0].mxu0 %v2662
        %v2790 = vpop.f32.mrb[0].mxu0
        %v2791 = vadd.f32 %v2698, %v2790
        %v2792 = vpop.f32.mrb[0].mxu0
        %v2793 = vpop.f32.mrb[0].mxu0
        %v2794 = vadd.f32 %v2698, %v2793
        %v2795 = vpop.f32.mrb[0].mxu0
        %2796 = vmatprep.mubr.bf16.mxu0 0
        %2797 = vmatmul.mubr.bf16.gmra.mrb[0].mxu0 %v2663
        %v2798 = vpop.f32.mrb[0].mxu0
        %v2799 = vadd.f32 %v2698, %v2798
        %v2800 = vpop.f32.mrb[0].mxu0
        %v2801 = vpop.f32.mrb[0].mxu0
        %v2802 = vadd.f32 %v2698, %v2801
        %v2803 = vpop.f32.mrb[0].mxu0
        %2804 = vmatprep.mubr.bf16.mxu0 0
        %2805 = vmatmul.mubr.bf16.gmra.mrb[0].mxu0 %v2664
        %v2806 = vpop.f32.mrb[0].mxu0
        %v2807 = vadd.f32 %v2698, %v2806
        %v2808 = vpop.f32.mrb[0].mxu0
        %v2809 = vpop.f32.mrb[0].mxu0
        %v2810 = vadd.f32 %v2698, %v2809
        %v2811 = vpop.f32.mrb[0].mxu0
        %2812 = vmatprep.mubr.bf16.mxu0 0
        %2813 = vmatmul.mubr.bf16.gmra.mrb[0].mxu0 %v2665
        %v2814 = vpop.f32.mrb[0].mxu0
        %v2815 = vadd.f32 %v2698, %v2814
        %v2816 = vpop.f32.mrb[0].mxu0
        %v2817 = vpop.f32.mrb[0].mxu0
        %v2818 = vadd.f32 %v2698, %v2817
        %v2819 = vpop.f32.mrb[0].mxu0
        %2820 = vmatprep.mubr.bf16.mxu0 0
        %2821 = vmatmul.mubr.bf16.gmra.mrb[0].mxu0 %v2666
        %v2822 = vpop.f32.mrb[0].mxu0
        %v2823 = vadd.f32 %v2698, %v2822
        %v2824 = vpop.f32.mrb[0].mxu0
        %v2825 = vpop.f32.mrb[0].mxu0
        %v2826 = vadd.f32 %v2698, %v2825
        %v2827 = vpop.f32.mrb[0].mxu0
        %2828 = vmatprep.mubr.bf16.mxu0 0
        %2829 = vmatmul.mubr.bf16.gmra.mrb[0].mxu0 %v2667
        %v2830 = vpop.f32.mrb[0].mxu0
        %v2831 = vadd.f32 %v2698, %v2830
        %v2832 = vpop.f32.mrb[0].mxu0
        %v2833 = vpop.f32.mrb[0].mxu0
        %v2834 = vadd.f32 %v2698, %v2833
        %v2835 = vpop.f32.mrb[0].mxu0
        %2836 = vmatprep.mubr.bf16.mxu0 0
        %2837 = vmatmul.mubr.bf16.gmra.mrb[0].mxu0 %v2668
        %v2838 = vpop.f32.mrb[0].mxu0
        %v2839 = vadd.f32 %v2698, %v2838
        %v2840 = vpop.f32.mrb[0].mxu0
        %v2841 = vpop.f32.mrb[0].mxu0
        %v2842 = vadd.f32 %v2698, %v2841
        %v2843 = vpop.f32.mrb[0].mxu0
        %2844 = vmatprep.mubr.bf16.mxu0 0
        %2845 = vmatmul.mubr.bf16.gmra.mrb[0].mxu0 %v2669
        %v2846 = vpop.f32.mrb[0].mxu0
        %v2847 = vadd.f32 %v2698, %v2846
        %v2848 = vpop.f32.mrb[0].mxu0
        %v2849 = vpop.f32.mrb[0].mxu0
        %v2850 = vadd.f32 %v2698, %v2849
        %v2851 = vpop.f32.mrb[0].mxu0
        %2852 = vmatprep.mubr.bf16.mxu0 0
        %2853 = vmatmul.mubr.bf16.gmra.mrb[0].mxu0 %v2670
        %v2854 = vpop.f32.mrb[0].mxu0
        %v2855 = vadd.f32 %v2698, %v2854
        %v2856 = vpop.f32.mrb[0].mxu0
        %v2857 = vpop.f32.mrb[0].mxu0
        %v2858 = vadd.f32 %v2698, %v2857
        %v2859 = vpop.f32.mrb[0].mxu0
        %2860 = vmatprep.mubr.bf16.mxu0 0
        %2861 = vmatmul.mubr.bf16.gmra.mrb[0].mxu0 %v2671
        %v2862 = vpop.f32.mrb[0].mxu0
        %v2863 = vadd.f32 %v2698, %v2862
        %v2864 = vpop.f32.mrb[0].mxu0
        %v2865 = vpop.f32.mrb[0].mxu0
        %v2866 = vadd.f32 %v2698, %v2865
        %v2867 = vpop.f32.mrb[0].mxu0
        %2868 = vmatprep.mubr.bf16.mxu0 0
        %2869 = vmatmul.mubr.bf16.gmra.mrb[0].mxu0 %v2672
        %v2870 = vpop.f32.mrb[0].mxu0
        %v2871 = vadd.f32 %v2698, %v2870
        %v2872 = vpop.f32.mrb[0].mxu0
        %v2873 = vpop.f32.mrb[0].mxu0
        %v2874 = vadd.f32 %v2698, %v2873
        %v2875 = vpop.f32.mrb[0].mxu0
        %2876 = vmatprep.mubr.bf16.mxu0 0
        %2877 = vmatmul.mubr.bf16.gmra.mrb[0].mxu0 %v2673
        %v2878 = vpop.f32.mrb[0].mxu0
        %v2879 = vadd.f32 %v2698, %v2878
        %v2880 = vpop.f32.mrb[0].mxu0
        %v2881 = vpop.f32.mrb[0].mxu0
        %v2882 = vadd.f32 %v2698, %v2881
        %v2883 = vpop.f32.mrb[0].mxu0
        %2884 = vmatprep.mubr.bf16.mxu0 0
        %2885 = vmatmul.mubr.bf16.gmra.mrb[0].mxu0 %v2674
        %v2886 = vpop.f32.mrb[0].mxu0
        %v2887 = vadd.f32 %v2698, %v2886
        %v2888 = vpop.f32.mrb[0].mxu0
        %v2889 = vpop.f32.mrb[0].mxu0
        %v2890 = vadd.f32 %v2698, %v2889
        %v2891 = vpop.f32.mrb[0].mxu0
        %2892 = vmatprep.mubr.bf16.mxu0 0
        %2893 = vmatmul.mubr.bf16.gmra.mrb[0].mxu0 %v2675
        %v2894 = vpop.f32.mrb[0].mxu0
        %v2895 = vadd.f32 %v2698, %v2894
        %v2896 = vpop.f32.mrb[0].mxu0
        %v2897 = vpop.f32.mrb[0].mxu0
        %v2898 = vadd.f32 %v2698, %v2897
        %v2899 = vpop.f32.mrb[0].mxu0
        %2900 = vmatprep.mubr.bf16.mxu0 0
        %2901 = vmatmul.mubr.bf16.gmra.mrb[0].mxu0 %v2676
        %v2902 = vpop.f32.mrb[0].mxu0
        %v2903 = vadd.f32 %v2698, %v2902
        %v2904 = vpop.f32.mrb[0].mxu0
        %v2905 = vpop.f32.mrb[0].mxu0
        %v2906 = vadd.f32 %v2698, %v2905
        %v2907 = vpop.f32.mrb[0].mxu0
        %2908 = vdwg.mxu0
        %v2909 = vmax.f32 %v2783, 0.0
        %v2910 = vmax.f32 %v2786, 0.0
        %v2911 = vmax.f32 %v2791, 0.0
        %v2912 = vmax.f32 %v2794, 0.0
        %v2913 = vmax.f32 %v2799, 0.0
        %v2914 = vmax.f32 %v2802, 0.0
        %v2915 = vmax.f32 %v2807, 0.0
        %v2916 = vmax.f32 %v2810, 0.0
        %v2917 = vmax.f32 %v2815, 0.0
        %v2918 = vmax.f32 %v2818, 0.0
        %v2919 = vmax.f32 %v2823, 0.0
        %v2920 = vmax.f32 %v2826, 0.0
        %v2921 = vmax.f32 %v2831, 0.0
        %v2922 = vmax.f32 %v2834, 0.0
        %v2923 = vmax.f32 %v2839, 0.0
        %v2924 = vmax.f32 %v2842, 0.0
        %v2925 = vmax.f32 %v2847, 0.0
        %v2926 = vmax.f32 %v2850, 0.0
        %v2927 = vmax.f32 %v2855, 0.0
        %v2928 = vmax.f32 %v2858, 0.0
        %v2929 = vmax.f32 %v2863, 0.0
        %v2930 = vmax.f32 %v2866, 0.0
        %v2931 = vmax.f32 %v2871, 0.0
        %v2932 = vmax.f32 %v2874, 0.0
        %v2933 = vmax.f32 %v2879, 0.0
        %v2934 = vmax.f32 %v2882, 0.0
        %v2935 = vmax.f32 %v2887, 0.0
        %v2936 = vmax.f32 %v2890, 0.0
        %v2937 = vmax.f32 %v2895, 0.0
        %v2938 = vmax.f32 %v2898, 0.0
        %v2939 = vmax.f32 %v2903, 0.0
        %v2940 = vmax.f32 %v2906, 0.0
        %2941 = vst [vmem:[%s575 + $0x8] sm:$0xff] %v2909
        %2942 = vst [vmem:[%s575 + $0x10] sm:$0xff] %v2910
        %2943 = vst [vmem:[%s575 + $0x28] sm:$0xff] %v2911
        %2944 = vst [vmem:[%s575 + $0x30] sm:$0xff] %v2912
        %2945 = vst [vmem:[%s575 + $0x48] sm:$0xff] %v2913
        %2946 = vst [vmem:[%s575 + $0x50] sm:$0xff] %v2914
        %2947 = vst [vmem:[%s575 + $0x68] sm:$0xff] %v2915
        %2948 = vst [vmem:[%s575 + $0x70] sm:$0xff] %v2916
        %2949 = vst [vmem:[%s575 + $0x88] sm:$0xff] %v2917
        %2950 = vst [vmem:[%s575 + $0x90] sm:$0xff] %v2918
        %2951 = vst [vmem:[%s575 + $0xa8] sm:$0xff] %v2919
        %2952 = vst [vmem:[%s575 + $0xb0] sm:$0xff] %v2920
        %2953 = vst [vmem:[%s575 + $0xc8] sm:$0xff] %v2921
        %2954 = vst [vmem:[%s575 + $0xd0] sm:$0xff] %v2922
        %2955 = vst [vmem:[%s575 + $0xe8] sm:$0xff] %v2923
        %2956 = vst [vmem:[%s575 + $0xf0] sm:$0xff] %v2924
        %2957 = vst [vmem:[%s575 + $0x108] sm:$0xff] %v2925
        %2958 = vst [vmem:[%s575 + $0x110] sm:$0xff] %v2926
        %2959 = vst [vmem:[%s575 + $0x128] sm:$0xff] %v2927
        %2960 = vst [vmem:[%s575 + $0x130] sm:$0xff] %v2928
        %2961 = vst [vmem:[%s575 + $0x148] sm:$0xff] %v2929
        %2962 = vst [vmem:[%s575 + $0x150] sm:$0xff] %v2930
        %2963 = vst [vmem:[%s575 + $0x168] sm:$0xff] %v2931
        %2964 = vst [vmem:[%s575 + $0x170] sm:$0xff] %v2932
        %2965 = vst [vmem:[%s575 + $0x188] sm:$0xff] %v2933
        %2966 = vst [vmem:[%s575 + $0x190] sm:$0xff] %v2934
        %2967 = vst [vmem:[%s575 + $0x1a8] sm:$0xff] %v2935
        %2968 = vst [vmem:[%s575 + $0x1b0] sm:$0xff] %v2936
        %2969 = vst [vmem:[%s575 + $0x1c8] sm:$0xff] %v2937
        %2970 = vst [vmem:[%s575 + $0x1d0] sm:$0xff] %v2938
        %2971 = vst [vmem:[%s575 + $0x1e8] sm:$0xff] %v2939
        %2972 = vst [vmem:[%s575 + $0x1f0] sm:$0xff] %v2940
        %v2973 = vld [vmem:[#allocation9] sm:$0xff]
        %v2974 = vld [vmem:[#allocation9 + $0x8] sm:$0x1]
        %v2975 = vld [vmem:[#allocation2 + $0x7] sm:$0xff]
        %v2976 = vld [vmem:[#allocation2 + $0xf] sm:$0xff]
        %v2977 = vld [vmem:[#allocation2 + $0x47] sm:$0xff]
        %v2978 = vld [vmem:[#allocation2 + $0x4f] sm:$0xff]
        %v2979 = vld [vmem:[#allocation2 + $0x87] sm:$0xff]
        %v2980 = vld [vmem:[#allocation2 + $0x8f] sm:$0xff]
        %v2981 = vld [vmem:[#allocation2 + $0xc7] sm:$0xff]
        %v2982 = vld [vmem:[#allocation2 + $0xcf] sm:$0xff]
        %v2983 = vld [vmem:[#allocation2 + $0x107] sm:$0xff]
        %v2984 = vld [vmem:[#allocation2 + $0x10f] sm:$0xff]
        %v2985 = vld [vmem:[#allocation2 + $0x147] sm:$0xff]
        %v2986 = vld [vmem:[#allocation2 + $0x14f] sm:$0xff]
        %v2987 = vld [vmem:[#allocation2 + $0x187] sm:$0xff]
        %v2988 = vld [vmem:[#allocation2 + $0x18f] sm:$0xff]
        %v2989 = vld [vmem:[#allocation2 + $0x1c7] sm:$0xff]
        %v2990 = vld [vmem:[#allocation2 + $0x1cf] sm:$0xff]
        %v2991 = vlaneseq
        %v2992 = vshrl.u32 %v2991, 7
        %v2993 = vsub.s32 0, %v2992
        %v2994 = vrot.slane %v2973, %v2993
        %v2995 = vmul.f32 %v2975, %v2994
        %v2996 = vmul.f32 %v2976, %v2994
        %v2997 = vmul.f32 %v2977, %v2994
        %v2998 = vmul.f32 %v2978, %v2994
        %v2999 = vmul.f32 %v2979, %v2994
        %v3000 = vmul.f32 %v2980, %v2994
        %v3001 = vmul.f32 %v2981, %v2994
        %v3002 = vmul.f32 %v2982, %v2994
        %v3003 = vmul.f32 %v2983, %v2994
        %v3004 = vmul.f32 %v2984, %v2994
        %v3005 = vmul.f32 %v2985, %v2994
        %v3006 = vmul.f32 %v2986, %v2994
        %v3007 = vmul.f32 %v2987, %v2994
        %v3008 = vmul.f32 %v2988, %v2994
        %v3009 = vmul.f32 %v2989, %v2994
        %v3010 = vmul.f32 %v2990, %v2994
        %v3011 = vld [vmem:[#allocation2 + $0x8] sm:$0xff]
        %v3012 = vld [vmem:[#allocation2 + $0x10] sm:$0xff]
        %v3013 = vld [vmem:[#allocation2 + $0x48] sm:$0xff]
        %v3014 = vld [vmem:[#allocation2 + $0x50] sm:$0xff]
        %v3015 = vld [vmem:[#allocation2 + $0x88] sm:$0xff]
        %v3016 = vld [vmem:[#allocation2 + $0x90] sm:$0xff]
        %v3017 = vld [vmem:[#allocation2 + $0xc8] sm:$0xff]
        %v3018 = vld [vmem:[#allocation2 + $0xd0] sm:$0xff]
        %v3019 = vld [vmem:[#allocation2 + $0x108] sm:$0xff]
        %v3020 = vld [vmem:[#allocation2 + $0x110] sm:$0xff]
        %v3021 = vld [vmem:[#allocation2 + $0x148] sm:$0xff]
        %v3022 = vld [vmem:[#allocation2 + $0x150] sm:$0xff]
        %v3023 = vld [vmem:[#allocation2 + $0x188] sm:$0xff]
        %v3024 = vld [vmem:[#allocation2 + $0x190] sm:$0xff]
        %v3025 = vld [vmem:[#allocation2 + $0x1c8] sm:$0xff]
        %v3026 = vld [vmem:[#allocation2 + $0x1d0] sm:$0xff]
        %v3027 = vlaneseq
        %v3028 = vshrl.u32 %v3027, 7
        %v3029 = vsub.s32 1, %v3028
        %v3030 = vrot.slane %v2973, %v3029
        %v3031 = vmul.f32 %v3011, %v3030
        %v3032 = vmul.f32 %v3012, %v3030
        %v3033 = vmul.f32 %v3013, %v3030
        %v3034 = vmul.f32 %v3014, %v3030
        %v3035 = vmul.f32 %v3015, %v3030
        %v3036 = vmul.f32 %v3016, %v3030
        %v3037 = vmul.f32 %v3017, %v3030
        %v3038 = vmul.f32 %v3018, %v3030
        %v3039 = vmul.f32 %v3019, %v3030
        %v3040 = vmul.f32 %v3020, %v3030
        %v3041 = vmul.f32 %v3021, %v3030
        %v3042 = vmul.f32 %v3022, %v3030
        %v3043 = vmul.f32 %v3023, %v3030
        %v3044 = vmul.f32 %v3024, %v3030
        %v3045 = vmul.f32 %v3025, %v3030
        %v3046 = vmul.f32 %v3026, %v3030
        %v3047 = vadd.f32 %v2995, %v3031
        %v3048 = vadd.f32 %v2996, %v3032
        %v3049 = vadd.f32 %v2997, %v3033
        %v3050 = vadd.f32 %v2998, %v3034
        %v3051 = vadd.f32 %v2999, %v3035
        %v3052 = vadd.f32 %v3000, %v3036
        %v3053 = vadd.f32 %v3001, %v3037
        %v3054 = vadd.f32 %v3002, %v3038
        %v3055 = vadd.f32 %v3003, %v3039
        %v3056 = vadd.f32 %v3004, %v3040
        %v3057 = vadd.f32 %v3005, %v3041
        %v3058 = vadd.f32 %v3006, %v3042
        %v3059 = vadd.f32 %v3007, %v3043
        %v3060 = vadd.f32 %v3008, %v3044
        %v3061 = vadd.f32 %v3009, %v3045
        %v3062 = vadd.f32 %v3010, %v3046
        %v3063 = vld [vmem:[#allocation2 + $0x9] sm:$0xff]
        %v3064 = vld [vmem:[#allocation2 + $0x11] sm:$0xff]
        %v3065 = vld [vmem:[#allocation2 + $0x49] sm:$0xff]
        %v3066 = vld [vmem:[#allocation2 + $0x51] sm:$0xff]
        %v3067 = vld [vmem:[#allocation2 + $0x89] sm:$0xff]
        %v3068 = vld [vmem:[#allocation2 + $0x91] sm:$0xff]
        %v3069 = vld [vmem:[#allocation2 + $0xc9] sm:$0xff]
        %v3070 = vld [vmem:[#allocation2 + $0xd1] sm:$0xff]
        %v3071 = vld [vmem:[#allocation2 + $0x109] sm:$0xff]
        %v3072 = vld [vmem:[#allocation2 + $0x111] sm:$0xff]
        %v3073 = vld [vmem:[#allocation2 + $0x149] sm:$0xff]
        %v3074 = vld [vmem:[#allocation2 + $0x151] sm:$0xff]
        %v3075 = vld [vmem:[#allocation2 + $0x189] sm:$0xff]
        %v3076 = vld [vmem:[#allocation2 + $0x191] sm:$0xff]
        %v3077 = vld [vmem:[#allocation2 + $0x1c9] sm:$0xff]
        %v3078 = vld [vmem:[#allocation2 + $0x1d1] sm:$0xff]
        %v3079 = vlaneseq
        %v3080 = vshrl.u32 %v3079, 7
        %v3081 = vsub.s32 2, %v3080
        %v3082 = vrot.slane %v2973, %v3081
        %v3083 = vmul.f32 %v3063, %v3082
        %v3084 = vmul.f32 %v3064, %v3082
        %v3085 = vmul.f32 %v3065, %v3082
        %v3086 = vmul.f32 %v3066, %v3082
        %v3087 = vmul.f32 %v3067, %v3082
        %v3088 = vmul.f32 %v3068, %v3082
        %v3089 = vmul.f32 %v3069, %v3082
        %v3090 = vmul.f32 %v3070, %v3082
        %v3091 = vmul.f32 %v3071, %v3082
        %v3092 = vmul.f32 %v3072, %v3082
        %v3093 = vmul.f32 %v3073, %v3082
        %v3094 = vmul.f32 %v3074, %v3082
        %v3095 = vmul.f32 %v3075, %v3082
        %v3096 = vmul.f32 %v3076, %v3082
        %v3097 = vmul.f32 %v3077, %v3082
        %v3098 = vmul.f32 %v3078, %v3082
        %v3099 = vadd.f32 %v3047, %v3083
        %v3100 = vadd.f32 %v3048, %v3084
        %v3101 = vadd.f32 %v3049, %v3085
        %v3102 = vadd.f32 %v3050, %v3086
        %v3103 = vadd.f32 %v3051, %v3087
        %v3104 = vadd.f32 %v3052, %v3088
        %v3105 = vadd.f32 %v3053, %v3089
        %v3106 = vadd.f32 %v3054, %v3090
        %v3107 = vadd.f32 %v3055, %v3091
        %v3108 = vadd.f32 %v3056, %v3092
        %v3109 = vadd.f32 %v3057, %v3093
        %v3110 = vadd.f32 %v3058, %v3094
        %v3111 = vadd.f32 %v3059, %v3095
        %v3112 = vadd.f32 %v3060, %v3096
        %v3113 = vadd.f32 %v3061, %v3097
        %v3114 = vadd.f32 %v3062, %v3098
        %v3115 = vld [vmem:[%s575 + $0x7] sm:$0xff]
        %v3116 = vld [vmem:[%s575 + $0xf] sm:$0xff]
        %v3117 = vld [vmem:[%s575 + $0x47] sm:$0xff]
        %v3118 = vld [vmem:[%s575 + $0x4f] sm:$0xff]
        %v3119 = vld [vmem:[%s575 + $0x87] sm:$0xff]
        %v3120 = vld [vmem:[%s575 + $0x8f] sm:$0xff]
        %v3121 = vld [vmem:[%s575 + $0xc7] sm:$0xff]
        %v3122 = vld [vmem:[%s575 + $0xcf] sm:$0xff]
        %v3123 = vld [vmem:[%s575 + $0x107] sm:$0xff]
        %v3124 = vld [vmem:[%s575 + $0x10f] sm:$0xff]
        %v3125 = vld [vmem:[%s575 + $0x147] sm:$0xff]
        %v3126 = vld [vmem:[%s575 + $0x14f] sm:$0xff]
        %v3127 = vld [vmem:[%s575 + $0x187] sm:$0xff]
        %v3128 = vld [vmem:[%s575 + $0x18f] sm:$0xff]
        %v3129 = vld [vmem:[%s575 + $0x1c7] sm:$0xff]
        %v3130 = vld [vmem:[%s575 + $0x1cf] sm:$0xff]
        %v3131 = vlaneseq
        %v3132 = vshrl.u32 %v3131, 7
        %v3133 = vsub.s32 3, %v3132
        %v3134 = vrot.slane %v2973, %v3133
        %v3135 = vmul.f32 %v3115, %v3134
        %v3136 = vmul.f32 %v3116, %v3134
        %v3137 = vmul.f32 %v3117, %v3134
        %v3138 = vmul.f32 %v3118, %v3134
        %v3139 = vmul.f32 %v3119, %v3134
        %v3140 = vmul.f32 %v3120, %v3134
        %v3141 = vmul.f32 %v3121, %v3134
        %v3142 = vmul.f32 %v3122, %v3134
        %v3143 = vmul.f32 %v3123, %v3134
        %v3144 = vmul.f32 %v3124, %v3134
        %v3145 = vmul.f32 %v3125, %v3134
        %v3146 = vmul.f32 %v3126, %v3134
        %v3147 = vmul.f32 %v3127, %v3134
        %v3148 = vmul.f32 %v3128, %v3134
        %v3149 = vmul.f32 %v3129, %v3134
        %v3150 = vmul.f32 %v3130, %v3134
        %v3151 = vadd.f32 %v3099, %v3135
        %v3152 = vadd.f32 %v3100, %v3136
        %v3153 = vadd.f32 %v3101, %v3137
        %v3154 = vadd.f32 %v3102, %v3138
        %v3155 = vadd.f32 %v3103, %v3139
        %v3156 = vadd.f32 %v3104, %v3140
        %v3157 = vadd.f32 %v3105, %v3141
        %v3158 = vadd.f32 %v3106, %v3142
        %v3159 = vadd.f32 %v3107, %v3143
        %v3160 = vadd.f32 %v3108, %v3144
        %v3161 = vadd.f32 %v3109, %v3145
        %v3162 = vadd.f32 %v3110, %v3146
        %v3163 = vadd.f32 %v3111, %v3147
        %v3164 = vadd.f32 %v3112, %v3148
        %v3165 = vadd.f32 %v3113, %v3149
        %v3166 = vadd.f32 %v3114, %v3150
        %v3167 = vld [vmem:[%s575 + $0x8] sm:$0xff]
        %v3168 = vld [vmem:[%s575 + $0x10] sm:$0xff]
        %v3169 = vld [vmem:[%s575 + $0x48] sm:$0xff]
        %v3170 = vld [vmem:[%s575 + $0x50] sm:$0xff]
        %v3171 = vld [vmem:[%s575 + $0x88] sm:$0xff]
        %v3172 = vld [vmem:[%s575 + $0x90] sm:$0xff]
        %v3173 = vld [vmem:[%s575 + $0xc8] sm:$0xff]
        %v3174 = vld [vmem:[%s575 + $0xd0] sm:$0xff]
        %v3175 = vld [vmem:[%s575 + $0x108] sm:$0xff]
        %v3176 = vld [vmem:[%s575 + $0x110] sm:$0xff]
        %v3177 = vld [vmem:[%s575 + $0x148] sm:$0xff]
        %v3178 = vld [vmem:[%s575 + $0x150] sm:$0xff]
        %v3179 = vld [vmem:[%s575 + $0x188] sm:$0xff]
        %v3180 = vld [vmem:[%s575 + $0x190] sm:$0xff]
        %v3181 = vld [vmem:[%s575 + $0x1c8] sm:$0xff]
        %v3182 = vld [vmem:[%s575 + $0x1d0] sm:$0xff]
        %v3183 = vlaneseq
        %v3184 = vshrl.u32 %v3183, 7
        %v3185 = vsub.s32 4, %v3184
        %v3186 = vrot.slane %v2973, %v3185
        %v3187 = vmul.f32 %v3167, %v3186
        %v3188 = vmul.f32 %v3168, %v3186
        %v3189 = vmul.f32 %v3169, %v3186
        %v3190 = vmul.f32 %v3170, %v3186
        %v3191 = vmul.f32 %v3171, %v3186
        %v3192 = vmul.f32 %v3172, %v3186
        %v3193 = vmul.f32 %v3173, %v3186
        %v3194 = vmul.f32 %v3174, %v3186
        %v3195 = vmul.f32 %v3175, %v3186
        %v3196 = vmul.f32 %v3176, %v3186
        %v3197 = vmul.f32 %v3177, %v3186
        %v3198 = vmul.f32 %v3178, %v3186
        %v3199 = vmul.f32 %v3179, %v3186
        %v3200 = vmul.f32 %v3180, %v3186
        %v3201 = vmul.f32 %v3181, %v3186
        %v3202 = vmul.f32 %v3182, %v3186
        %v3203 = vadd.f32 %v3151, %v3187
        %v3204 = vadd.f32 %v3152, %v3188
        %v3205 = vadd.f32 %v3153, %v3189
        %v3206 = vadd.f32 %v3154, %v3190
        %v3207 = vadd.f32 %v3155, %v3191
        %v3208 = vadd.f32 %v3156, %v3192
        %v3209 = vadd.f32 %v3157, %v3193
        %v3210 = vadd.f32 %v3158, %v3194
        %v3211 = vadd.f32 %v3159, %v3195
        %v3212 = vadd.f32 %v3160, %v3196
        %v3213 = vadd.f32 %v3161, %v3197
        %v3214 = vadd.f32 %v3162, %v3198
        %v3215 = vadd.f32 %v3163, %v3199
        %v3216 = vadd.f32 %v3164, %v3200
        %v3217 = vadd.f32 %v3165, %v3201
        %v3218 = vadd.f32 %v3166, %v3202
        %v3219 = vld [vmem:[%s575 + $0x9] sm:$0xff]
        %v3220 = vld [vmem:[%s575 + $0x11] sm:$0xff]
        %v3221 = vld [vmem:[%s575 + $0x49] sm:$0xff]
        %v3222 = vld [vmem:[%s575 + $0x51] sm:$0xff]
        %v3223 = vld [vmem:[%s575 + $0x89] sm:$0xff]
        %v3224 = vld [vmem:[%s575 + $0x91] sm:$0xff]
        %v3225 = vld [vmem:[%s575 + $0xc9] sm:$0xff]
        %v3226 = vld [vmem:[%s575 + $0xd1] sm:$0xff]
        %v3227 = vld [vmem:[%s575 + $0x109] sm:$0xff]
        %v3228 = vld [vmem:[%s575 + $0x111] sm:$0xff]
        %v3229 = vld [vmem:[%s575 + $0x149] sm:$0xff]
        %v3230 = vld [vmem:[%s575 + $0x151] sm:$0xff]
        %v3231 = vld [vmem:[%s575 + $0x189] sm:$0xff]
        %v3232 = vld [vmem:[%s575 + $0x191] sm:$0xff]
        %v3233 = vld [vmem:[%s575 + $0x1c9] sm:$0xff]
        %v3234 = vld [vmem:[%s575 + $0x1d1] sm:$0xff]
        %v3235 = vlaneseq
        %v3236 = vshrl.u32 %v3235, 7
        %v3237 = vsub.s32 5, %v3236
        %v3238 = vrot.slane %v2973, %v3237
        %v3239 = vmul.f32 %v3219, %v3238
        %v3240 = vmul.f32 %v3220, %v3238
        %v3241 = vmul.f32 %v3221, %v3238
        %v3242 = vmul.f32 %v3222, %v3238
        %v3243 = vmul.f32 %v3223, %v3238
        %v3244 = vmul.f32 %v3224, %v3238
        %v3245 = vmul.f32 %v3225, %v3238
        %v3246 = vmul.f32 %v3226, %v3238
        %v3247 = vmul.f32 %v3227, %v3238
        %v3248 = vmul.f32 %v3228, %v3238
        %v3249 = vmul.f32 %v3229, %v3238
        %v3250 = vmul.f32 %v3230, %v3238
        %v3251 = vmul.f32 %v3231, %v3238
        %v3252 = vmul.f32 %v3232, %v3238
        %v3253 = vmul.f32 %v3233, %v3238
        %v3254 = vmul.f32 %v3234, %v3238
        %v3255 = vadd.f32 %v3203, %v3239
        %v3256 = vadd.f32 %v3204, %v3240
        %v3257 = vadd.f32 %v3205, %v3241
        %v3258 = vadd.f32 %v3206, %v3242
        %v3259 = vadd.f32 %v3207, %v3243
        %v3260 = vadd.f32 %v3208, %v3244
        %v3261 = vadd.f32 %v3209, %v3245
        %v3262 = vadd.f32 %v3210, %v3246
        %v3263 = vadd.f32 %v3211, %v3247
        %v3264 = vadd.f32 %v3212, %v3248
        %v3265 = vadd.f32 %v3213, %v3249
        %v3266 = vadd.f32 %v3214, %v3250
        %v3267 = vadd.f32 %v3215, %v3251
        %v3268 = vadd.f32 %v3216, %v3252
        %v3269 = vadd.f32 %v3217, %v3253
        %v3270 = vadd.f32 %v3218, %v3254
        %v3271 = vld [vmem:[%s1178 + $0x7] sm:$0xff]
        %v3272 = vld [vmem:[%s1178 + $0xf] sm:$0xff]
        %v3273 = vld [vmem:[%s1178 + $0x47] sm:$0xff]
        %v3274 = vld [vmem:[%s1178 + $0x4f] sm:$0xff]
        %v3275 = vld [vmem:[%s1178 + $0x87] sm:$0xff]
        %v3276 = vld [vmem:[%s1178 + $0x8f] sm:$0xff]
        %v3277 = vld [vmem:[%s1178 + $0xc7] sm:$0xff]
        %v3278 = vld [vmem:[%s1178 + $0xcf] sm:$0xff]
        %v3279 = vld [vmem:[%s1178 + $0x107] sm:$0xff]
        %v3280 = vld [vmem:[%s1178 + $0x10f] sm:$0xff]
        %v3281 = vld [vmem:[%s1178 + $0x147] sm:$0xff]
        %v3282 = vld [vmem:[%s1178 + $0x14f] sm:$0xff]
        %v3283 = vld [vmem:[%s1178 + $0x187] sm:$0xff]
        %v3284 = vld [vmem:[%s1178 + $0x18f] sm:$0xff]
        %v3285 = vld [vmem:[%s1178 + $0x1c7] sm:$0xff]
        %v3286 = vld [vmem:[%s1178 + $0x1cf] sm:$0xff]
        %v3287 = vlaneseq
        %v3288 = vshrl.u32 %v3287, 7
        %v3289 = vsub.s32 6, %v3288
        %v3290 = vrot.slane %v2973, %v3289
        %v3291 = vmul.f32 %v3271, %v3290
        %v3292 = vmul.f32 %v3272, %v3290
        %v3293 = vmul.f32 %v3273, %v3290
        %v3294 = vmul.f32 %v3274, %v3290
        %v3295 = vmul.f32 %v3275, %v3290
        %v3296 = vmul.f32 %v3276, %v3290
        %v3297 = vmul.f32 %v3277, %v3290
        %v3298 = vmul.f32 %v3278, %v3290
        %v3299 = vmul.f32 %v3279, %v3290
        %v3300 = vmul.f32 %v3280, %v3290
        %v3301 = vmul.f32 %v3281, %v3290
        %v3302 = vmul.f32 %v3282, %v3290
        %v3303 = vmul.f32 %v3283, %v3290
        %v3304 = vmul.f32 %v3284, %v3290
        %v3305 = vmul.f32 %v3285, %v3290
        %v3306 = vmul.f32 %v3286, %v3290
        %v3307 = vadd.f32 %v3255, %v3291
        %v3308 = vadd.f32 %v3256, %v3292
        %v3309 = vadd.f32 %v3257, %v3293
        %v3310 = vadd.f32 %v3258, %v3294
        %v3311 = vadd.f32 %v3259, %v3295
        %v3312 = vadd.f32 %v3260, %v3296
        %v3313 = vadd.f32 %v3261, %v3297
        %v3314 = vadd.f32 %v3262, %v3298
        %v3315 = vadd.f32 %v3263, %v3299
        %v3316 = vadd.f32 %v3264, %v3300
        %v3317 = vadd.f32 %v3265, %v3301
        %v3318 = vadd.f32 %v3266, %v3302
        %v3319 = vadd.f32 %v3267, %v3303
        %v3320 = vadd.f32 %v3268, %v3304
        %v3321 = vadd.f32 %v3269, %v3305
        %v3322 = vadd.f32 %v3270, %v3306
        %v3323 = vld [vmem:[%s1178 + $0x8] sm:$0xff]
        %v3324 = vld [vmem:[%s1178 + $0x10] sm:$0xff]
        %v3325 = vld [vmem:[%s1178 + $0x48] sm:$0xff]
        %v3326 = vld [vmem:[%s1178 + $0x50] sm:$0xff]
        %v3327 = vld [vmem:[%s1178 + $0x88] sm:$0xff]
        %v3328 = vld [vmem:[%s1178 + $0x90] sm:$0xff]
        %v3329 = vld [vmem:[%s1178 + $0xc8] sm:$0xff]
        %v3330 = vld [vmem:[%s1178 + $0xd0] sm:$0xff]
        %v3331 = vld [vmem:[%s1178 + $0x108] sm:$0xff]
        %v3332 = vld [vmem:[%s1178 + $0x110] sm:$0xff]
        %v3333 = vld [vmem:[%s1178 + $0x148] sm:$0xff]
        %v3334 = vld [vmem:[%s1178 + $0x150] sm:$0xff]
        %v3335 = vld [vmem:[%s1178 + $0x188] sm:$0xff]
        %v3336 = vld [vmem:[%s1178 + $0x190] sm:$0xff]
        %v3337 = vld [vmem:[%s1178 + $0x1c8] sm:$0xff]
        %v3338 = vld [vmem:[%s1178 + $0x1d0] sm:$0xff]
        %v3339 = vlaneseq
        %v3340 = vshrl.u32 %v3339, 7
        %v3341 = vsub.s32 7, %v3340
        %v3342 = vrot.slane %v2973, %v3341
        %v3343 = vmul.f32 %v3323, %v3342
        %v3344 = vmul.f32 %v3324, %v3342
        %v3345 = vmul.f32 %v3325, %v3342
        %v3346 = vmul.f32 %v3326, %v3342
        %v3347 = vmul.f32 %v3327, %v3342
        %v3348 = vmul.f32 %v3328, %v3342
        %v3349 = vmul.f32 %v3329, %v3342
        %v3350 = vmul.f32 %v3330, %v3342
        %v3351 = vmul.f32 %v3331, %v3342
        %v3352 = vmul.f32 %v3332, %v3342
        %v3353 = vmul.f32 %v3333, %v3342
        %v3354 = vmul.f32 %v3334, %v3342
        %v3355 = vmul.f32 %v3335, %v3342
        %v3356 = vmul.f32 %v3336, %v3342
        %v3357 = vmul.f32 %v3337, %v3342
        %v3358 = vmul.f32 %v3338, %v3342
        %v3359 = vadd.f32 %v3307, %v3343
        %v3360 = vadd.f32 %v3308, %v3344
        %v3361 = vadd.f32 %v3309, %v3345
        %v3362 = vadd.f32 %v3310, %v3346
        %v3363 = vadd.f32 %v3311, %v3347
        %v3364 = vadd.f32 %v3312, %v3348
        %v3365 = vadd.f32 %v3313, %v3349
        %v3366 = vadd.f32 %v3314, %v3350
        %v3367 = vadd.f32 %v3315, %v3351
        %v3368 = vadd.f32 %v3316, %v3352
        %v3369 = vadd.f32 %v3317, %v3353
        %v3370 = vadd.f32 %v3318, %v3354
        %v3371 = vadd.f32 %v3319, %v3355
        %v3372 = vadd.f32 %v3320, %v3356
        %v3373 = vadd.f32 %v3321, %v3357
        %v3374 = vadd.f32 %v3322, %v3358
        %v3375 = vld [vmem:[%s1178 + $0x9] sm:$0xff]
        %v3376 = vld [vmem:[%s1178 + $0x11] sm:$0xff]
        %v3377 = vld [vmem:[%s1178 + $0x49] sm:$0xff]
        %v3378 = vld [vmem:[%s1178 + $0x51] sm:$0xff]
        %v3379 = vld [vmem:[%s1178 + $0x89] sm:$0xff]
        %v3380 = vld [vmem:[%s1178 + $0x91] sm:$0xff]
        %v3381 = vld [vmem:[%s1178 + $0xc9] sm:$0xff]
        %v3382 = vld [vmem:[%s1178 + $0xd1] sm:$0xff]
        %v3383 = vld [vmem:[%s1178 + $0x109] sm:$0xff]
        %v3384 = vld [vmem:[%s1178 + $0x111] sm:$0xff]
        %v3385 = vld [vmem:[%s1178 + $0x149] sm:$0xff]
        %v3386 = vld [vmem:[%s1178 + $0x151] sm:$0xff]
        %v3387 = vld [vmem:[%s1178 + $0x189] sm:$0xff]
        %v3388 = vld [vmem:[%s1178 + $0x191] sm:$0xff]
        %v3389 = vld [vmem:[%s1178 + $0x1c9] sm:$0xff]
        %v3390 = vld [vmem:[%s1178 + $0x1d1] sm:$0xff]
        %v3391 = vlaneseq
        %v3392 = vshrl.u32 %v3391, 7
        %v3393 = vsub.s32 0, %v3392
        %v3394 = vrot.slane %v2974, %v3393
        %v3395 = vmul.f32 %v3375, %v3394
        %v3396 = vmul.f32 %v3376, %v3394
        %v3397 = vmul.f32 %v3377, %v3394
        %v3398 = vmul.f32 %v3378, %v3394
        %v3399 = vmul.f32 %v3379, %v3394
        %v3400 = vmul.f32 %v3380, %v3394
        %v3401 = vmul.f32 %v3381, %v3394
        %v3402 = vmul.f32 %v3382, %v3394
        %v3403 = vmul.f32 %v3383, %v3394
        %v3404 = vmul.f32 %v3384, %v3394
        %v3405 = vmul.f32 %v3385, %v3394
        %v3406 = vmul.f32 %v3386, %v3394
        %v3407 = vmul.f32 %v3387, %v3394
        %v3408 = vmul.f32 %v3388, %v3394
        %v3409 = vmul.f32 %v3389, %v3394
        %v3410 = vmul.f32 %v3390, %v3394
        %v3411 = vadd.f32 %v3359, %v3395
        %v3412 = vadd.f32 %v3360, %v3396
        %v3413 = vadd.f32 %v3361, %v3397
        %v3414 = vadd.f32 %v3362, %v3398
        %v3415 = vadd.f32 %v3363, %v3399
        %v3416 = vadd.f32 %v3364, %v3400
        %v3417 = vadd.f32 %v3365, %v3401
        %v3418 = vadd.f32 %v3366, %v3402
        %v3419 = vadd.f32 %v3367, %v3403
        %v3420 = vadd.f32 %v3368, %v3404
        %v3421 = vadd.f32 %v3369, %v3405
        %v3422 = vadd.f32 %v3370, %v3406
        %v3423 = vadd.f32 %v3371, %v3407
        %v3424 = vadd.f32 %v3372, %v3408
        %v3425 = vadd.f32 %v3373, %v3409
        %v3426 = vadd.f32 %v3374, %v3410
        %v3427 = vpack.c.bf16 %v3412, %v3411
        %v3428 = vpack.c.bf16 %v3414, %v3413
        %v3429 = vpack.c.bf16 %v3416, %v3415
        %v3430 = vpack.c.bf16 %v3418, %v3417
        %v3431 = vpack.c.bf16 %v3420, %v3419
        %v3432 = vpack.c.bf16 %v3422, %v3421
        %v3433 = vpack.c.bf16 %v3424, %v3423
        %v3434 = vpack.c.bf16 %v3426, %v3425
        %v3435 = vpack.c.bf16 %v512, %v511
        %v3436 = vpack.c.bf16 %v516, %v515
        %v3437 = vpack.c.bf16 %v520, %v519
        %v3438 = vpack.c.bf16 %v524, %v523
        %v3439 = vpack.c.bf16 %v528, %v527
        %v3440 = vpack.c.bf16 %v532, %v531
        %v3441 = vpack.c.bf16 %v536, %v535
        %v3442 = vpack.c.bf16 %v540, %v539
        %v3443 = vld [vmem:[#allocation14] sm:$0xf]
        %v3444 = vld [vmem:[#allocation14 + $0x4] sm:$0xf]
        %v3445 = vld [vmem:[#allocation14 + $0x8] sm:$0xf]
        %v3446 = vld [vmem:[#allocation14 + $0xc] sm:$0xf]
        %v3447 = vld [vmem:[#allocation14 + $0x10] sm:$0xf]
        %v3448 = vld [vmem:[#allocation14 + $0x14] sm:$0xf]
        %v3449 = vld [vmem:[#allocation14 + $0x18] sm:$0xf]
        %v3450 = vld [vmem:[#allocation14 + $0x1c] sm:$0xf]
        %v3451 = vld [vmem:[#allocation14 + $0x20] sm:$0xf]
        %v3452 = vld [vmem:[#allocation14 + $0x24] sm:$0xf]
        %v3453 = vld [vmem:[#allocation14 + $0x28] sm:$0xf]
        %v3454 = vld [vmem:[#allocation14 + $0x2c] sm:$0xf]
        %v3455 = vld [vmem:[#allocation14 + $0x30] sm:$0xf]
        %v3456 = vld [vmem:[#allocation14 + $0x34] sm:$0xf]
        %v3457 = vld [vmem:[#allocation14 + $0x38] sm:$0xf]
        %v3458 = vld [vmem:[#allocation14 + $0x3c] sm:$0xf]
        %v3459 = vld [vmem:[#allocation14 + $0x40] sm:$0xf]
        %v3460 = vld [vmem:[#allocation14 + $0x44] sm:$0xf]
        %v3461 = vld [vmem:[#allocation14 + $0x48] sm:$0xf]
        %v3462 = vld [vmem:[#allocation14 + $0x4c] sm:$0xf]
        %v3463 = vld [vmem:[#allocation14 + $0x50] sm:$0xf]
        %v3464 = vld [vmem:[#allocation14 + $0x54] sm:$0xf]
        %v3465 = vld [vmem:[#allocation14 + $0x58] sm:$0xf]
        %v3466 = vld [vmem:[#allocation14 + $0x5c] sm:$0xf]
        %v3467 = vld [vmem:[#allocation14 + $0x60] sm:$0xf]
        %v3468 = vld [vmem:[#allocation14 + $0x64] sm:$0xf]
        %v3469 = vld [vmem:[#allocation14 + $0x68] sm:$0xf]
        %v3470 = vld [vmem:[#allocation14 + $0x6c] sm:$0xf]
        %v3471 = vld [vmem:[#allocation14 + $0x70] sm:$0xf]
        %v3472 = vld [vmem:[#allocation14 + $0x74] sm:$0xf]
        %v3473 = vld [vmem:[#allocation14 + $0x78] sm:$0xf]
        %v3474 = vld [vmem:[#allocation14 + $0x7c] sm:$0xf]
        %v3475 = vld [vmem:[%s9] sm:$0x1]
        %v3477 = vlaneseq
        %v3478 = vshrl.u32 %v3477, 7
        %v3479 = vsub.s32 0, %v3478
        %v3480 = vrot.slane %v3475, %v3479
        %v3514 = vunpack.c.l.b16 %v3443
        %v3515 = vunpack.c.l.b16 %v3444
        %v3516 = vunpack.c.l.b16 %v3445
        %v3517 = vunpack.c.l.b16 %v3446
        %v3518 = vunpack.c.l.b16 %v3447
        %v3519 = vunpack.c.l.b16 %v3448
        %v3520 = vunpack.c.l.b16 %v3449
        %v3521 = vunpack.c.l.b16 %v3450
        %v3522 = vunpack.c.l.b16 %v3451
        %v3523 = vunpack.c.l.b16 %v3452
        %v3524 = vunpack.c.l.b16 %v3453
        %v3525 = vunpack.c.l.b16 %v3454
        %v3526 = vunpack.c.l.b16 %v3455
        %v3527 = vunpack.c.l.b16 %v3456
        %v3528 = vunpack.c.l.b16 %v3457
        %v3529 = vunpack.c.l.b16 %v3458
        %v3530 = vunpack.c.l.b16 %v3459
        %v3531 = vunpack.c.l.b16 %v3460
        %v3532 = vunpack.c.l.b16 %v3461
        %v3533 = vunpack.c.l.b16 %v3462
        %v3534 = vunpack.c.l.b16 %v3463
        %v3535 = vunpack.c.l.b16 %v3464
        %v3536 = vunpack.c.l.b16 %v3465
        %v3537 = vunpack.c.l.b16 %v3466
        %v3538 = vunpack.c.l.b16 %v3467
        %v3539 = vunpack.c.l.b16 %v3468
        %v3540 = vunpack.c.l.b16 %v3469
        %v3541 = vunpack.c.l.b16 %v3470
        %v3542 = vunpack.c.l.b16 %v3471
        %v3543 = vunpack.c.l.b16 %v3472
        %v3544 = vunpack.c.l.b16 %v3473
        %v3545 = vunpack.c.l.b16 %v3474
        %v3546 = vpack.c.b16 %v3515, %v3514
        %v3547 = vpack.c.b16 %v3517, %v3516
        %v3548 = vpack.c.b16 %v3519, %v3518
        %v3549 = vpack.c.b16 %v3521, %v3520
        %v3550 = vpack.c.b16 %v3523, %v3522
        %v3551 = vpack.c.b16 %v3525, %v3524
        %v3552 = vpack.c.b16 %v3527, %v3526
        %v3553 = vpack.c.b16 %v3529, %v3528
        %v3554 = vpack.c.b16 %v3531, %v3530
        %v3555 = vpack.c.b16 %v3533, %v3532
        %v3556 = vpack.c.b16 %v3535, %v3534
        %v3557 = vpack.c.b16 %v3537, %v3536
        %v3558 = vpack.c.b16 %v3539, %v3538
        %v3559 = vpack.c.b16 %v3541, %v3540
        %v3560 = vpack.c.b16 %v3543, %v3542
        %v3561 = vpack.c.b16 %v3545, %v3544
        %3578 = vmatprep.subr.bf16.mxu0 0
        %3579 = vmatpush1.bf16.msra.mxu0 %v3546
        %3580 = vmatprep.subr.bf16.mxu0 0
        %3581 = vmatpush1.bf16.msra.mxu0 %v3547
        %3582 = vmatprep.subr.bf16.mxu0 0
        %3583 = vmatpush1.bf16.msra.mxu0 %v3548
        %3584 = vmatprep.subr.bf16.mxu0 0
        %3585 = vmatpush1.bf16.msra.mxu0 %v3549
        %3586 = vmatprep.subr.bf16.mxu0 0
        %3587 = vmatpush1.bf16.msra.mxu0 %v3550
        %3588 = vmatprep.subr.bf16.mxu0 0
        %3589 = vmatpush1.bf16.msra.mxu0 %v3551
        %3590 = vmatprep.subr.bf16.mxu0 0
        %3591 = vmatpush1.bf16.msra.mxu0 %v3552
        %3592 = vmatprep.subr.bf16.mxu0 0
        %3593 = vmatpush1.bf16.msra.mxu0 %v3553
        %3594 = vmatprep.subr.bf16.mxu0 0
        %3595 = vmatpush1.bf16.msra.mxu0 %v3554
        %3596 = vmatprep.subr.bf16.mxu0 0
        %3597 = vmatpush1.bf16.msra.mxu0 %v3555
        %3598 = vmatprep.subr.bf16.mxu0 0
        %3599 = vmatpush1.bf16.msra.mxu0 %v3556
        %3600 = vmatprep.subr.bf16.mxu0 0
        %3601 = vmatpush1.bf16.msra.mxu0 %v3557
        %3602 = vmatprep.subr.bf16.mxu0 0
        %3603 = vmatpush1.bf16.msra.mxu0 %v3558
        %3604 = vmatprep.subr.bf16.mxu0 0
        %3605 = vmatpush1.bf16.msra.mxu0 %v3559
        %3606 = vmatprep.subr.bf16.mxu0 0
        %3607 = vmatpush1.bf16.msra.mxu0 %v3560
        %3608 = vmatprep.subr.bf16.mxu0 0
        %3609 = vmatpush1.bf16.msra.mxu0 %v3561
        %3610 = vmatprep.mubr.bf16.mxu0 %v3435
        %3611 = vmatmul.mubr.bf16.gmra.mrb[0].mxu0 %v3427
        %v3612 = vpop.f32.mrb[0].mxu0
        %v3613 = vadd.f32 %v3480, %v3612
        %v3614 = vpop.f32.mrb[0].mxu0
        %v3615 = vpop.f32.mrb[0].mxu0
        %v3616 = vadd.f32 %v3480, %v3615
        %v3617 = vpop.f32.mrb[0].mxu0
        %3618 = vmatprep.mubr.bf16.mxu0 %v3436
        %3619 = vmatmul.mubr.bf16.gmra.mrb[0].mxu0 %v3428
        %v3620 = vpop.f32.mrb[0].mxu0
        %v3621 = vadd.f32 %v3480, %v3620
        %v3622 = vpop.f32.mrb[0].mxu0
        %v3623 = vpop.f32.mrb[0].mxu0
        %v3624 = vadd.f32 %v3480, %v3623
        %v3625 = vpop.f32.mrb[0].mxu0
        %3626 = vmatprep.mubr.bf16.mxu0 %v3437
        %3627 = vmatmul.mubr.bf16.gmra.mrb[0].mxu0 %v3429
        %v3628 = vpop.f32.mrb[0].mxu0
        %v3629 = vadd.f32 %v3480, %v3628
        %v3630 = vpop.f32.mrb[0].mxu0
        %v3631 = vpop.f32.mrb[0].mxu0
        %v3632 = vadd.f32 %v3480, %v3631
        %v3633 = vpop.f32.mrb[0].mxu0
        %3634 = vmatprep.mubr.bf16.mxu0 %v3438
        %3635 = vmatmul.mubr.bf16.gmra.mrb[0].mxu0 %v3430
        %v3636 = vpop.f32.mrb[0].mxu0
        %v3637 = vadd.f32 %v3480, %v3636
        %v3638 = vpop.f32.mrb[0].mxu0
        %v3639 = vpop.f32.mrb[0].mxu0
        %v3640 = vadd.f32 %v3480, %v3639
        %v3641 = vpop.f32.mrb[0].mxu0
        %3642 = vmatprep.mubr.bf16.mxu0 %v3439
        %3643 = vmatmul.mubr.bf16.gmra.mrb[0].mxu0 %v3431
        %v3644 = vpop.f32.mrb[0].mxu0
        %v3645 = vadd.f32 %v3480, %v3644
        %v3646 = vpop.f32.mrb[0].mxu0
        %v3647 = vpop.f32.mrb[0].mxu0
        %v3648 = vadd.f32 %v3480, %v3647
        %v3649 = vpop.f32.mrb[0].mxu0
        %3650 = vmatprep.mubr.bf16.mxu0 %v3440
        %3651 = vmatmul.mubr.bf16.gmra.mrb[0].mxu0 %v3432
        %v3652 = vpop.f32.mrb[0].mxu0
        %v3653 = vadd.f32 %v3480, %v3652
        %v3654 = vpop.f32.mrb[0].mxu0
        %v3655 = vpop.f32.mrb[0].mxu0
        %v3656 = vadd.f32 %v3480, %v3655
        %v3657 = vpop.f32.mrb[0].mxu0
        %3658 = vmatprep.mubr.bf16.mxu0 %v3441
        %3659 = vmatmul.mubr.bf16.gmra.mrb[0].mxu0 %v3433
        %v3660 = vpop.f32.mrb[0].mxu0
        %v3661 = vadd.f32 %v3480, %v3660
        %v3662 = vpop.f32.mrb[0].mxu0
        %v3663 = vpop.f32.mrb[0].mxu0
        %v3664 = vadd.f32 %v3480, %v3663
        %v3665 = vpop.f32.mrb[0].mxu0
        %3666 = vmatprep.mubr.bf16.mxu0 %v3442
        %3667 = vmatmul.mubr.bf16.gmra.mrb[0].mxu0 %v3434
        %v3668 = vpop.f32.mrb[0].mxu0
        %v3669 = vadd.f32 %v3480, %v3668
        %v3670 = vpop.f32.mrb[0].mxu0
        %v3671 = vpop.f32.mrb[0].mxu0
        %v3672 = vadd.f32 %v3480, %v3671
        %v3673 = vpop.f32.mrb[0].mxu0
        %3674 = vdwg.mxu0
        %3675 = vst [vmem:[%s464] sm:$0xff] %v3613
        %3676 = vst [vmem:[%s464 + $0x8] sm:$0xff] %v3616
        %3677 = vst [vmem:[%s464 + $0x10] sm:$0xff] %v3621
        %3678 = vst [vmem:[%s464 + $0x18] sm:$0xff] %v3624
        %3679 = vst [vmem:[%s464 + $0x20] sm:$0xff] %v3629
        %3680 = vst [vmem:[%s464 + $0x28] sm:$0xff] %v3632
        %3681 = vst [vmem:[%s464 + $0x30] sm:$0xff] %v3637
        %3682 = vst [vmem:[%s464 + $0x38] sm:$0xff] %v3640
        %3683 = vst [vmem:[%s464 + $0x40] sm:$0xff] %v3645
        %3684 = vst [vmem:[%s464 + $0x48] sm:$0xff] %v3648
        %3685 = vst [vmem:[%s464 + $0x50] sm:$0xff] %v3653
        %3686 = vst [vmem:[%s464 + $0x58] sm:$0xff] %v3656
        %3687 = vst [vmem:[%s464 + $0x60] sm:$0xff] %v3661
        %3688 = vst [vmem:[%s464 + $0x68] sm:$0xff] %v3664
        %3689 = vst [vmem:[%s464 + $0x70] sm:$0xff] %v3669
        %3690 = vst [vmem:[%s464 + $0x78] sm:$0xff] %v3672
        %s3691 = sand.u32 %s253, 1
        %s3692 = scalar_lea.sflag [#allocation5], %s3691
        %s3693 = sand.u32 %s253, 1
        %s3694 = smul.addr %s3693, 128
        %s3695 = scalar_lea.vmem [#allocation15], %s3694
        // Predicated region
        $region89: #{tpu_custom_call.1} parent=59 // pred_check
          %p3696 = pneg %p263
        $region90: #{tpu_custom_call.1} parent=59 // pred_check_branch
          %3698 = sbr.rel (%p3696) target = $region92
        $region91: #{tpu_custom_call.1} parent=59 // pred_region
          %s3700 = ssub.s32 2048, 2048
          %3701 = vsyncadd %s3692, %s3700
          %s3702 = smul.addr %s30, 16
          %s3703 = smul.addr %s3702, 128
          %s3704 = scalar_lea.hbm %s10, %s3703
          %s3705 = sshll.u32 %s3695, 4
          %s3706 = int_to_ptr.vmem [resolvable:$true] %s3705
          %3711 = dma.vmem_to_hbm [thread:$0]  %s3706, 2048, %s3704, %s3692, 128, 128, 8
        $region92: #{tpu_custom_call.1} parent=59 // pred_fallthru
          _
      $region60: #{tpu_custom_call.1} parent=5 // pred_fallthru
        _
      %p3712 = scmp.le.s32.totalorder 2, %s25
      // Predicated region
      $region93: #{tpu_custom_call.1} parent=5 // pred_check
        %p3713 = pneg %p3712
      $region94: #{tpu_custom_call.1} parent=5 // pred_check_branch
        %3715 = sbr.rel (%p3713) target = $region96
      $region95: #{tpu_custom_call.1} parent=5 // pred_region
        %s3716 = ssub.s32 %s25, 2
        // Predicated region
        $region97: #{tpu_custom_call.1} parent=95 // pred_check
          %p3717 = pneg %p269
        $region98: #{tpu_custom_call.1} parent=95 // pred_check_branch
          %3719 = sbr.rel (%p3717) target = $region100
        $region99: #{tpu_custom_call.1} parent=95 // pred_region
          %s3720 = sand.u32 %s254, 1
          %s3721 = scalar_lea.sflag [#allocation5], %s3720
          %s3722 = sand.u32 %s254, 1
          %s3723 = smul.addr %s3722, 128
          %s3724 = scalar_lea.vmem [#allocation15], %s3723
          %3725 = dma.done %s3721, 2048
        $region100: #{tpu_custom_call.1} parent=95 // pred_fallthru
          _
      $region96: #{tpu_custom_call.1} parent=5 // pred_fallthru
        _
    $region6: #{tpu_custom_call.1} parent=1 // loop_footer
      %s29 = sadd.s32 1, %s25
    $region7: #{tpu_custom_call.1} parent=1 // loop_footer_branch
      %24 = sbr.rel target = $region3
    $region8: #{tpu_custom_call.1} parent=1 // loop_exit
      _
    %3726 = vsyncpa [#allocation4], 1
    %s3727 = scalar_lea.sflag [#allocation4], 1
    %3728 = vsyncpa %s3727, 1
    %3729 = vsyncpa [#allocation7], 1
    %3730 = vsyncpa [#allocation10], 1
    %3731 = vsyncpa [#allocation13], 1
    %3732 = vsyncpa [#allocation5], 1
    %s3733 = scalar_lea.sflag [#allocation5], 1
    %3734 = vsyncpa %s3733, 1

</llo_original>
